<compile_context>
chip_gen: v5e
topology: v5e:2x2
jax: 0.10.0
libtpu: 0.0.40
codegen_flags: <defaults>
</compile_context>

<pallas_src>
import functools

import jax
import jax.numpy as jnp
from jax import lax
from jax.experimental import pallas as pl
from jax.experimental.pallas import tpu as pltpu

M_TAP = 32          # conv2 patch rows per tap (B*3*3 = 27, padded to a sublane multiple)
N_TAPS = 9          # conv2 kernel taps (3x3)
K1 = 32 * 4 * 4     # conv1 GEMM reduction dim: ci*kh*kw = 512 (4 x 128, no padding)
LANES = 128


# ---------------------------------------------------------------------------
# Fused kernel: conv1 -> conv2 -> bias -> tanh-GELU -> view(-1,27) -> Linear
# ---------------------------------------------------------------------------
def _fused_model_kernel(p1_ref, w1_ref, w2_ref, b2e_ref, wft_ref, bf_ref,
                        o_ref, act_ref, *, batch):
    """Shapes (for batch=3):
    p1_ref : (288, 512)  bf16  tap-major conv1 patches (= conv2 im2col rows)
    w1_ref : (512, 256)  bf16  conv1 weight, GEMM-ready
    w2_ref : (9, 256, 128) bf16 conv2 weight per tap, GEMM-ready
    b2e_ref: (32, 128)   f32   conv2 bias + folded conv1 bias (per output pixel)
    wft_ref: (27, 100)   f32   fc weight, transposed
    bf_ref : (1, 100)    f32   fc bias
    o_ref  : (128, 100)  f32   final Linear output
    act_ref: (288, 256)  bf16  VMEM scratch = conv2 im2col matrix
    """
    c2 = w2_ref.shape[2]
    m_out, _ = o_ref.shape

    # conv1 GEMM (bf16 operands, f32 accumulate) -> conv2 im2col scratch.
    act_ref[...] = jnp.dot(p1_ref[...], w1_ref[...],
                           preferred_element_type=jnp.float32).astype(act_ref.dtype)

    # conv2: 9 statically unrolled aligned tap GEMMs, register accumulator.
    acc = jnp.zeros((M_TAP, c2), jnp.float32)
    for t in range(N_TAPS):
        acc = acc + jnp.dot(act_ref[t * M_TAP:(t + 1) * M_TAP, :], w2_ref[t],
                            preferred_element_type=jnp.float32)

    # Bias (conv2 + folded conv1) and the tanh-GELU chain (v3..v11 of the spec).
    # Pad rows (>= batch*9) have zero patches and zero bias, so they stay 0.
    v2 = acc + b2e_ref[...]
    v3 = v2 * 0.5
    v6 = (v2 * v2) * v2 * 0.044715
    v8 = (v2 + v6) * 0.7978845608028654
    gel = v3 * (jnp.tanh(v8) + 1.0)              # (32, c2); rows (b,oh,ow), lanes c

    # ---- NCHW-contiguous .view(-1, 27) regroup, entirely on-chip ----
    # Pad rows to 128 so the transpose is a plain aligned (128,128) exchange.
    gel_pad = jnp.concatenate(
        [gel, jnp.zeros((LANES - M_TAP, c2), jnp.float32)], axis=0)   # (128, 128)
    g_t = gel_pad.T                                                   # [c, b*9 + s]
    # Stack per-batch lane blocks -> (batch*c2, 9), rows ordered m = b*c2 + c.
    gt_full = jnp.concatenate([g_t[:, 9 * b:9 * b + 9] for b in range(batch)],
                              axis=0)                                 # (384, 9)
    # Row k of the torch view takes channels m = 3k, 3k+1, 3k+2 (each with its
    # 9 spatial values) -> three one-hot MXU gathers (exact, tiny).
    k_idx = lax.broadcasted_iota(jnp.int32, (m_out, batch * c2), 0)
    m_idx = lax.broadcasted_iota(jnp.int32, (m_out, batch * c2), 1)
    parts = []
    for dc in range(3):
        sel = (m_idx == 3 * k_idx + dc).astype(jnp.float32)           # (128, 384)
        parts.append(jnp.dot(sel, gt_full, preferred_element_type=jnp.float32))
    v12 = jnp.concatenate(parts, axis=1)                              # (128, 27)

    # ---- final Linear, fused into the same kernel ----
    o_ref[...] = (jnp.dot(v12, wft_ref[...], preferred_element_type=jnp.float32)
                  + bf_ref[...]).astype(o_ref.dtype)


def fused_forward(p1, w1f, w2tap, b2eff, wft, bf_row, *, batch):
    c2 = w2tap.shape[2]
    # Kernel is shape-specialized: B*9 rows per tap must fit M_TAP and the
    # torch view(-1, 27) must divide evenly.
    assert batch * 9 <= M_TAP and (batch * c2 * 9) % 27 == 0
    m_out = batch * c2 * 9 // 27
    n_out = wft.shape[1]
    kernel = functools.partial(_fused_model_kernel, batch=batch)
    return pl.pallas_call(
        kernel,
        out_shape=jax.ShapeDtypeStruct((m_out, n_out), jnp.float32),
        grid=(1,),
        in_specs=[
            pl.BlockSpec(p1.shape, lambda i: (0, 0)),
            pl.BlockSpec(w1f.shape, lambda i: (0, 0)),
            pl.BlockSpec(w2tap.shape, lambda i: (0, 0, 0)),
            pl.BlockSpec(b2eff.shape, lambda i: (0, 0)),
            pl.BlockSpec(wft.shape, lambda i: (0, 0)),
            pl.BlockSpec(bf_row.shape, lambda i: (0, 0)),
        ],
        out_specs=pl.BlockSpec((m_out, n_out), lambda i: (0, 0)),
        scratch_shapes=[pltpu.VMEM((N_TAPS * M_TAP, w1f.shape[1]), jnp.bfloat16)],
        compiler_params=pltpu.CompilerParams(dimension_semantics=("arbitrary",)),
    )(p1, w1f, w2tap, b2eff, wft, bf_row)


# ---------------------------------------------------------------------------
# Wrapper-side layout plumbing (small XLA glue; bf16 end to end)
# ---------------------------------------------------------------------------
def _conv1_patches_nhwc(x, *, kh=4, kw=4, stride=3, pad=3):
    """x: (B,C,H,W) -> (B,Ho,Wo, kh*kw*C) patches, feature order (u, v, ci)."""
    B, C, H, W = x.shape
    xn = x.transpose(0, 2, 3, 1)                                  # NHWC
    xp = jnp.pad(xn, ((0, 0), (pad, pad), (pad, pad), (0, 0)))
    Ho = (H + 2 * pad - kh) // stride + 1
    Wo = (W + 2 * pad - kw) // stride + 1
    cols = []
    for u in range(kh):
        for v in range(kw):
            cols.append(xp[:, u:u + stride * Ho:stride, v:v + stride * Wo:stride, :])
    col = jnp.stack(cols, axis=3)                                 # (B,Ho,Wo,kh*kw,C)
    return col.reshape(B, Ho, Wo, kh * kw * C)


def _build_fused_input(x):
    """Tap-major conv1 patch matrix for the fused kernel: (288, 512) bf16."""
    B = x.shape[0]
    p1 = _conv1_patches_nhwc(x.astype(jnp.bfloat16))              # (B,7,7,512)
    # conv2 zero-padding ring (spatial +1); patches there stay exactly zero.
    p1 = jnp.pad(p1, ((0, 0), (1, 1), (1, 1), (0, 0)))            # (B,9,9,512)
    # (b, oh, u, ow, v, f) -> tap-major (u, v, b, oh, ow, f); stride==kernel==3.
    # NOTE: ~0.3 MB of XLA glue in bf16; moving this shuffle in-kernel was
    # reviewed as optional and is skipped for simplicity.
    p1 = p1.reshape(B, 3, 3, 3, 3, K1).transpose(2, 4, 0, 1, 3, 5)
    p1 = p1.reshape(N_TAPS, B * 9, K1)
    p1 = jnp.pad(p1, ((0, 0), (0, M_TAP - B * 9), (0, 0)))        # (9, 32, 512)
    return p1.reshape(N_TAPS * M_TAP, K1)                         # (288, 512)


def prepare_params(params, *, batch):
    """One-time conversion of PyTorch-layout params to GEMM-ready layouts."""
    w1, b1 = params["w1"], params["b1"]
    w2, b2 = params["w2"], params["b2"]
    wf, bf = params["wf"], params["bf"]
    co1 = w1.shape[0]
    # conv1 weight: (co, ci, u, v) -> rows ordered (u, v, ci); bf16; K = 512 exactly.
    w1f = w1.transpose(2, 3, 1, 0).reshape(K1, co1).astype(jnp.bfloat16)
    # conv2 weight per tap t = u*3+v: (t, ci, co); bf16.
    w2tap = (w2.transpose(2, 3, 1, 0)
             .reshape(N_TAPS, w2.shape[1], w2.shape[0]).astype(jnp.bfloat16))
    # Fold conv1 bias into a per-output-pixel conv2 bias; taps whose conv1
    # position falls in conv2's zero pad ring contribute nothing.
    pos = 3 * jnp.arange(3)[:, None] + jnp.arange(3)[None, :]     # (oh, u) padded coord
    valid = ((pos >= 1) & (pos <= 7)).astype(jnp.float32)         # conv1 output is 7x7
    wb = jnp.einsum("oiuv,i->ouv", w2, b1)                        # (co2, 3, 3)
    bias_pix = jnp.einsum("ouv,hu,wv->hwo", wb, valid, valid)     # (oh, ow, co2)
    b2eff = (b2[None, None, :] + bias_pix).reshape(9, w2.shape[0])
    b2eff = jnp.tile(b2eff, (batch, 1))                           # (27, co2)
    b2eff = jnp.pad(b2eff, ((0, M_TAP - batch * 9), (0, 0)))      # pad rows stay 0
    return {
        "w1f": w1f,
        "w2tap": w2tap,
        "b2eff": b2eff,                 # f32
        "wft": wf.T,                    # (27, 100) f32 (post-GELU path stays f32)
        "bf_row": bf[None, :],          # (1, 100) f32
    }


def model_forward(x, gp):
    p1 = _build_fused_input(x)                                    # (288, 512) bf16
    return fused_forward(p1, gp["w1f"], gp["w2tap"], gp["b2eff"],
                         gp["wft"], gp["bf_row"], batch=x.shape[0])


# ---------------------------------------------------------------------------
# Reference (pure JAX, f32) + driver
# ---------------------------------------------------------------------------
def reference_forward(x, params):
    dn = ("NCHW", "OIHW", "NCHW")
    v1 = lax.conv_general_dilated(x, params["w1"], window_strides=(3, 3),
                                  padding=((3, 3), (3, 3)), dimension_numbers=dn)
    v1 = v1 + params["b1"][None, :, None, None]
    v2 = lax.conv_general_dilated(v1, params["w2"], window_strides=(3, 3),
                                  padding=((1, 1), (1, 1)), dimension_numbers=dn)
    v2 = v2 + params["b2"][None, :, None, None]
    v3 = v2 * 0.5
    v6 = v2 * v2 * v2 * 0.044715
    v8 = (v2 + v6) * 0.7978845608028654
    v11 = v3 * (jnp.tanh(v8) + 1.0)
    v12 = v11.reshape(-1, 27)
    return v12 @ params["wf"].T + params["bf"]


def init_params(key):
    ks = jax.random.split(key, 6)

    def nrm(k, shape, scale):
        return (scale * jax.random.normal(k, shape)).astype(jnp.float32)

    return {
        "w1": nrm(ks[0], (256, 32, 4, 4), 0.05),
        "b1": nrm(ks[1], (256,), 0.05),
        "w2": nrm(ks[2], (128, 256, 3, 3), 0.02),
        "b2": nrm(ks[3], (128,), 0.02),
        "wf": nrm(ks[4], (100, 27), 0.10),
        "bf": nrm(ks[5], (100,), 0.10),
    }


if __name__ == "__main__":
    key = jax.random.PRNGKey(0)
    k_x, k_p = jax.random.split(key)
    # Input chosen so conv2's output is (3, 128, 3, 3): 3*128*3*3 = 3456 = 128*27,
    # which makes the module's `.view(-1, 27)` valid (the spec's own 10x32x11x11
    # input would not flatten evenly). The kernel is specialized to B*9 <= 32.
    x = jax.random.normal(k_x, (3, 32, 16, 16), dtype=jnp.float32)
    params = init_params(k_p)
    gemm_params = prepare_params(params, batch=x.shape[0])   # one-time, off the hot path

    fwd = jax.jit(model_forward)
    out = jax.block_until_ready(fwd(x, gemm_params))
    assert out.shape == (128, 100), out.shape

    ref = jax.block_until_ready(reference_forward(x, params))
    max_err = float(jnp.max(jnp.abs(out - ref)))
    assert jnp.allclose(out, ref, rtol=2e-2, atol=2e-2), max_err

    print("KERNEL_OK")
</pallas_src>

<mosaic_0001>
module attributes {stable_mosaic.version = 11 : i64} {
  func.func @_fused_model_kernel(%arg0: i32, %arg1: memref<288x512xbf16, #tpu.memory_space<vmem>>, %arg2: memref<512x256xbf16, #tpu.memory_space<vmem>>, %arg3: memref<9x256x128xbf16, #tpu.memory_space<vmem>>, %arg4: memref<32x128xf32, #tpu.memory_space<vmem>>, %arg5: memref<27x100xf32, #tpu.memory_space<vmem>>, %arg6: memref<1x100xf32, #tpu.memory_space<vmem>>, %arg7: memref<128x100xf32, #tpu.memory_space<vmem>>, %arg8: memref<288x256xbf16, #tpu.memory_space<vmem>>) attributes {dimension_semantics = [#tpu.dimension_semantics<arbitrary>], iteration_bounds = array<i64: 1>, scalar_prefetch = 0 : i64, scratch_operands = 1 : i64, tpu.core_type = #tpu.core_type<tc>, window_params = [{pipeline_mode = #tpu.pipeline_mode<synchronous>, transform_indices = @transform_0, window_bounds = array<i64: 288, 512>}, {pipeline_mode = #tpu.pipeline_mode<synchronous>, transform_indices = @transform_1, window_bounds = array<i64: 512, 256>}, {pipeline_mode = #tpu.pipeline_mode<synchronous>, transform_indices = @transform_2, window_bounds = array<i64: 9, 256, 128>}, {pipeline_mode = #tpu.pipeline_mode<synchronous>, transform_indices = @transform_3, window_bounds = array<i64: 32, 128>}, {pipeline_mode = #tpu.pipeline_mode<synchronous>, transform_indices = @transform_4, window_bounds = array<i64: 27, 100>}, {pipeline_mode = #tpu.pipeline_mode<synchronous>, transform_indices = @transform_5, window_bounds = array<i64: 1, 100>}, {pipeline_mode = #tpu.pipeline_mode<synchronous>, transform_indices = @transform_6, window_bounds = array<i64: 128, 100>}]} {
    %c0 = arith.constant 0 : index
    %c0_0 = arith.constant 0 : index
    %0 = vector.load %arg1[%c0, %c0_0] : memref<288x512xbf16, #tpu.memory_space<vmem>>, vector<288x512xbf16>
    %c0_1 = arith.constant 0 : index
    %c0_2 = arith.constant 0 : index
    %1 = vector.load %arg2[%c0_1, %c0_2] : memref<512x256xbf16, #tpu.memory_space<vmem>>, vector<512x256xbf16>
    %cst = arith.constant dense<0.000000e+00> : vector<288x256xf32>
    %2 = tpu.matmul %0, %1, %cst {dimension_numbers = #tpu.dot_dimension_numbers<[1], [0], [0], [1], [0, 0, 1, 1], [], []>} : vector<288x512xbf16>, vector<512x256xbf16>, vector<288x256xf32> -> vector<288x256xf32>
    %3 = arith.truncf %2 : vector<288x256xf32> to vector<288x256xbf16>
    %c0_3 = arith.constant 0 : index
    %c0_4 = arith.constant 0 : index
    %4 = vector.load %arg8[%c0_3, %c0_4] : memref<288x256xbf16, #tpu.memory_space<vmem>>, vector<288x256xbf16>
    tpu.vector_store %arg8[%c0_3, %c0_4], %3 {strides = array<i32>} : memref<288x256xbf16, #tpu.memory_space<vmem>>, vector<288x256xbf16>,
    %cst_5 = arith.constant 0.000000e+00 : f32
    %5 = vector.broadcast %cst_5 : f32 to vector<32x128xf32>
    %c0_6 = arith.constant 0 : index
    %c0_7 = arith.constant 0 : index
    %6 = vector.load %arg8[%c0_6, %c0_7] : memref<288x256xbf16, #tpu.memory_space<vmem>>, vector<32x256xbf16>
    %c0_8 = arith.constant 0 : index
    %c0_9 = arith.constant 0 : index
    %c0_10 = arith.constant 0 : index
    %7 = vector.load %arg3[%c0_8, %c0_9, %c0_10] : memref<9x256x128xbf16, #tpu.memory_space<vmem>>, vector<1x256x128xbf16>
    %8 = vector.shape_cast %7 : vector<1x256x128xbf16> to vector<256x128xbf16>
    %cst_11 = arith.constant dense<0.000000e+00> : vector<32x128xf32>
    %9 = tpu.matmul %6, %8, %cst_11 {dimension_numbers = #tpu.dot_dimension_numbers<[1], [0], [0], [1], [0, 0, 1, 1], [], []>} : vector<32x256xbf16>, vector<256x128xbf16>, vector<32x128xf32> -> vector<32x128xf32>
    %10 = arith.addf %5, %9 : vector<32x128xf32>
    %c32 = arith.constant 32 : index
    %c0_12 = arith.constant 0 : index
    %11 = vector.load %arg8[%c32, %c0_12] : memref<288x256xbf16, #tpu.memory_space<vmem>>, vector<32x256xbf16>
    %c1 = arith.constant 1 : index
    %c0_13 = arith.constant 0 : index
    %c0_14 = arith.constant 0 : index
    %12 = vector.load %arg3[%c1, %c0_13, %c0_14] : memref<9x256x128xbf16, #tpu.memory_space<vmem>>, vector<1x256x128xbf16>
    %13 = vector.shape_cast %12 : vector<1x256x128xbf16> to vector<256x128xbf16>
    %cst_15 = arith.constant dense<0.000000e+00> : vector<32x128xf32>
    %14 = tpu.matmul %11, %13, %cst_15 {dimension_numbers = #tpu.dot_dimension_numbers<[1], [0], [0], [1], [0, 0, 1, 1], [], []>} : vector<32x256xbf16>, vector<256x128xbf16>, vector<32x128xf32> -> vector<32x128xf32>
    %15 = arith.addf %10, %14 : vector<32x128xf32>
    %c64 = arith.constant 64 : index
    %c0_16 = arith.constant 0 : index
    %16 = vector.load %arg8[%c64, %c0_16] : memref<288x256xbf16, #tpu.memory_space<vmem>>, vector<32x256xbf16>
    %c2 = arith.constant 2 : index
    %c0_17 = arith.constant 0 : index
    %c0_18 = arith.constant 0 : index
    %17 = vector.load %arg3[%c2, %c0_17, %c0_18] : memref<9x256x128xbf16, #tpu.memory_space<vmem>>, vector<1x256x128xbf16>
    %18 = vector.shape_cast %17 : vector<1x256x128xbf16> to vector<256x128xbf16>
    %cst_19 = arith.constant dense<0.000000e+00> : vector<32x128xf32>
    %19 = tpu.matmul %16, %18, %cst_19 {dimension_numbers = #tpu.dot_dimension_numbers<[1], [0], [0], [1], [0, 0, 1, 1], [], []>} : vector<32x256xbf16>, vector<256x128xbf16>, vector<32x128xf32> -> vector<32x128xf32>
    %20 = arith.addf %15, %19 : vector<32x128xf32>
    %c96 = arith.constant 96 : index
    %c0_20 = arith.constant 0 : index
    %21 = vector.load %arg8[%c96, %c0_20] : memref<288x256xbf16, #tpu.memory_space<vmem>>, vector<32x256xbf16>
    %c3 = arith.constant 3 : index
    %c0_21 = arith.constant 0 : index
    %c0_22 = arith.constant 0 : index
    %22 = vector.load %arg3[%c3, %c0_21, %c0_22] : memref<9x256x128xbf16, #tpu.memory_space<vmem>>, vector<1x256x128xbf16>
    %23 = vector.shape_cast %22 : vector<1x256x128xbf16> to vector<256x128xbf16>
    %cst_23 = arith.constant dense<0.000000e+00> : vector<32x128xf32>
    %24 = tpu.matmul %21, %23, %cst_23 {dimension_numbers = #tpu.dot_dimension_numbers<[1], [0], [0], [1], [0, 0, 1, 1], [], []>} : vector<32x256xbf16>, vector<256x128xbf16>, vector<32x128xf32> -> vector<32x128xf32>
    %25 = arith.addf %20, %24 : vector<32x128xf32>
    %c128 = arith.constant 128 : index
    %c0_24 = arith.constant 0 : index
    %26 = vector.load %arg8[%c128, %c0_24] : memref<288x256xbf16, #tpu.memory_space<vmem>>, vector<32x256xbf16>
    %c4 = arith.constant 4 : index
    %c0_25 = arith.constant 0 : index
    %c0_26 = arith.constant 0 : index
    %27 = vector.load %arg3[%c4, %c0_25, %c0_26] : memref<9x256x128xbf16, #tpu.memory_space<vmem>>, vector<1x256x128xbf16>
    %28 = vector.shape_cast %27 : vector<1x256x128xbf16> to vector<256x128xbf16>
    %cst_27 = arith.constant dense<0.000000e+00> : vector<32x128xf32>
    %29 = tpu.matmul %26, %28, %cst_27 {dimension_numbers = #tpu.dot_dimension_numbers<[1], [0], [0], [1], [0, 0, 1, 1], [], []>} : vector<32x256xbf16>, vector<256x128xbf16>, vector<32x128xf32> -> vector<32x128xf32>
    %30 = arith.addf %25, %29 : vector<32x128xf32>
    %c160 = arith.constant 160 : index
    %c0_28 = arith.constant 0 : index
    %31 = vector.load %arg8[%c160, %c0_28] : memref<288x256xbf16, #tpu.memory_space<vmem>>, vector<32x256xbf16>
    %c5 = arith.constant 5 : index
    %c0_29 = arith.constant 0 : index
    %c0_30 = arith.constant 0 : index
    %32 = vector.load %arg3[%c5, %c0_29, %c0_30] : memref<9x256x128xbf16, #tpu.memory_space<vmem>>, vector<1x256x128xbf16>
    %33 = vector.shape_cast %32 : vector<1x256x128xbf16> to vector<256x128xbf16>
    %cst_31 = arith.constant dense<0.000000e+00> : vector<32x128xf32>
    %34 = tpu.matmul %31, %33, %cst_31 {dimension_numbers = #tpu.dot_dimension_numbers<[1], [0], [0], [1], [0, 0, 1, 1], [], []>} : vector<32x256xbf16>, vector<256x128xbf16>, vector<32x128xf32> -> vector<32x128xf32>
    %35 = arith.addf %30, %34 : vector<32x128xf32>
    %c192 = arith.constant 192 : index
    %c0_32 = arith.constant 0 : index
    %36 = vector.load %arg8[%c192, %c0_32] : memref<288x256xbf16, #tpu.memory_space<vmem>>, vector<32x256xbf16>
    %c6 = arith.constant 6 : index
    %c0_33 = arith.constant 0 : index
    %c0_34 = arith.constant 0 : index
    %37 = vector.load %arg3[%c6, %c0_33, %c0_34] : memref<9x256x128xbf16, #tpu.memory_space<vmem>>, vector<1x256x128xbf16>
    %38 = vector.shape_cast %37 : vector<1x256x128xbf16> to vector<256x128xbf16>
    %cst_35 = arith.constant dense<0.000000e+00> : vector<32x128xf32>
    %39 = tpu.matmul %36, %38, %cst_35 {dimension_numbers = #tpu.dot_dimension_numbers<[1], [0], [0], [1], [0, 0, 1, 1], [], []>} : vector<32x256xbf16>, vector<256x128xbf16>, vector<32x128xf32> -> vector<32x128xf32>
    %40 = arith.addf %35, %39 : vector<32x128xf32>
    %c224 = arith.constant 224 : index
    %c0_36 = arith.constant 0 : index
    %41 = vector.load %arg8[%c224, %c0_36] : memref<288x256xbf16, #tpu.memory_space<vmem>>, vector<32x256xbf16>
    %c7 = arith.constant 7 : index
    %c0_37 = arith.constant 0 : index
    %c0_38 = arith.constant 0 : index
    %42 = vector.load %arg3[%c7, %c0_37, %c0_38] : memref<9x256x128xbf16, #tpu.memory_space<vmem>>, vector<1x256x128xbf16>
    %43 = vector.shape_cast %42 : vector<1x256x128xbf16> to vector<256x128xbf16>
    %cst_39 = arith.constant dense<0.000000e+00> : vector<32x128xf32>
    %44 = tpu.matmul %41, %43, %cst_39 {dimension_numbers = #tpu.dot_dimension_numbers<[1], [0], [0], [1], [0, 0, 1, 1], [], []>} : vector<32x256xbf16>, vector<256x128xbf16>, vector<32x128xf32> -> vector<32x128xf32>
    %45 = arith.addf %40, %44 : vector<32x128xf32>
    %c256 = arith.constant 256 : index
    %c0_40 = arith.constant 0 : index
    %46 = vector.load %arg8[%c256, %c0_40] : memref<288x256xbf16, #tpu.memory_space<vmem>>, vector<32x256xbf16>
    %c8 = arith.constant 8 : index
    %c0_41 = arith.constant 0 : index
    %c0_42 = arith.constant 0 : index
    %47 = vector.load %arg3[%c8, %c0_41, %c0_42] : memref<9x256x128xbf16, #tpu.memory_space<vmem>>, vector<1x256x128xbf16>
    %48 = vector.shape_cast %47 : vector<1x256x128xbf16> to vector<256x128xbf16>
    %cst_43 = arith.constant dense<0.000000e+00> : vector<32x128xf32>
    %49 = tpu.matmul %46, %48, %cst_43 {dimension_numbers = #tpu.dot_dimension_numbers<[1], [0], [0], [1], [0, 0, 1, 1], [], []>} : vector<32x256xbf16>, vector<256x128xbf16>, vector<32x128xf32> -> vector<32x128xf32>
    %50 = arith.addf %45, %49 : vector<32x128xf32>
    %c0_44 = arith.constant 0 : index
    %c0_45 = arith.constant 0 : index
    %51 = vector.load %arg4[%c0_44, %c0_45] : memref<32x128xf32, #tpu.memory_space<vmem>>, vector<32x128xf32>
    %52 = arith.addf %50, %51 : vector<32x128xf32>
    %cst_46 = arith.constant 5.000000e-01 : f32
    %53 = vector.broadcast %cst_46 : f32 to vector<32x128xf32>
    %54 = arith.mulf %52, %53 : vector<32x128xf32>
    %55 = arith.mulf %52, %52 : vector<32x128xf32>
    %56 = arith.mulf %55, %52 : vector<32x128xf32>
    %cst_47 = arith.constant 4.471500e-02 : f32
    %57 = vector.broadcast %cst_47 : f32 to vector<32x128xf32>
    %58 = arith.mulf %56, %57 : vector<32x128xf32>
    %59 = arith.addf %52, %58 : vector<32x128xf32>
    %cst_48 = arith.constant 0.797884583 : f32
    %60 = vector.broadcast %cst_48 : f32 to vector<32x128xf32>
    %61 = arith.mulf %59, %60 : vector<32x128xf32>
    %62 = math.tanh %61 : vector<32x128xf32>
    %cst_49 = arith.constant 1.000000e+00 : f32
    %63 = vector.broadcast %cst_49 : f32 to vector<32x128xf32>
    %64 = arith.addf %62, %63 : vector<32x128xf32>
    %65 = arith.mulf %54, %64 : vector<32x128xf32>
    %cst_50 = arith.constant 0.000000e+00 : f32
    %66 = vector.broadcast %cst_50 : f32 to vector<96x128xf32>
    %67 = tpu.concatenate %65, %66 in 0 : vector<32x128xf32>, vector<96x128xf32> -> vector<128x128xf32>
    %68 = tpu.transpose %67, [1, 0] : vector<128x128xf32> -> vector<128x128xf32>
    %69 = vector.extract_strided_slice %68 {offsets = [0, 0], sizes = [128, 9], strides = [1, 1]} : vector<128x128xf32> to vector<128x9xf32>
    %70 = vector.extract_strided_slice %68 {offsets = [0, 9], sizes = [128, 9], strides = [1, 1]} : vector<128x128xf32> to vector<128x9xf32>
    %71 = vector.extract_strided_slice %68 {offsets = [0, 18], sizes = [128, 9], strides = [1, 1]} : vector<128x128xf32> to vector<128x9xf32>
    %72 = tpu.concatenate %69, %70, %71 in 0 : vector<128x9xf32>, vector<128x9xf32>, vector<128x9xf32> -> vector<384x9xf32>
    %73 = tpu.iota {dimensions = array<i32: 0>} : vector<128x384xi32>
    %74 = tpu.iota {dimensions = array<i32: 1>} : vector<128x384xi32>
    %c3_i32 = arith.constant 3 : i32
    %75 = vector.broadcast %c3_i32 : i32 to vector<128x384xi32>
    %76 = arith.muli %75, %73 : vector<128x384xi32>
    %c0_i32 = arith.constant 0 : i32
    %77 = vector.broadcast %c0_i32 : i32 to vector<128x384xi32>
    %78 = arith.addi %76, %77 : vector<128x384xi32>
    %79 = arith.cmpi eq, %74, %78 : vector<128x384xi32>
    %80 = arith.extui %79 : vector<128x384xi1> to vector<128x384xi32>
    %81 = arith.sitofp %80 : vector<128x384xi32> to vector<128x384xf32>
    %cst_51 = arith.constant dense<0.000000e+00> : vector<128x9xf32>
    %82 = tpu.matmul %81, %72, %cst_51 {dimension_numbers = #tpu.dot_dimension_numbers<[1], [0], [0], [1], [0, 0, 1, 1], [], []>} : vector<128x384xf32>, vector<384x9xf32>, vector<128x9xf32> -> vector<128x9xf32>
    %c3_i32_52 = arith.constant 3 : i32
    %83 = vector.broadcast %c3_i32_52 : i32 to vector<128x384xi32>
    %84 = arith.muli %83, %73 : vector<128x384xi32>
    %c1_i32 = arith.constant 1 : i32
    %85 = vector.broadcast %c1_i32 : i32 to vector<128x384xi32>
    %86 = arith.addi %84, %85 : vector<128x384xi32>
    %87 = arith.cmpi eq, %74, %86 : vector<128x384xi32>
    %88 = arith.extui %87 : vector<128x384xi1> to vector<128x384xi32>
    %89 = arith.sitofp %88 : vector<128x384xi32> to vector<128x384xf32>
    %cst_53 = arith.constant dense<0.000000e+00> : vector<128x9xf32>
    %90 = tpu.matmul %89, %72, %cst_53 {dimension_numbers = #tpu.dot_dimension_numbers<[1], [0], [0], [1], [0, 0, 1, 1], [], []>} : vector<128x384xf32>, vector<384x9xf32>, vector<128x9xf32> -> vector<128x9xf32>
    %c3_i32_54 = arith.constant 3 : i32
    %91 = vector.broadcast %c3_i32_54 : i32 to vector<128x384xi32>
    %92 = arith.muli %91, %73 : vector<128x384xi32>
    %c2_i32 = arith.constant 2 : i32
    %93 = vector.broadcast %c2_i32 : i32 to vector<128x384xi32>
    %94 = arith.addi %92, %93 : vector<128x384xi32>
    %95 = arith.cmpi eq, %74, %94 : vector<128x384xi32>
    %96 = arith.extui %95 : vector<128x384xi1> to vector<128x384xi32>
    %97 = arith.sitofp %96 : vector<128x384xi32> to vector<128x384xf32>
    %cst_55 = arith.constant dense<0.000000e+00> : vector<128x9xf32>
    %98 = tpu.matmul %97, %72, %cst_55 {dimension_numbers = #tpu.dot_dimension_numbers<[1], [0], [0], [1], [0, 0, 1, 1], [], []>} : vector<128x384xf32>, vector<384x9xf32>, vector<128x9xf32> -> vector<128x9xf32>
    %99 = tpu.concatenate %82, %90, %98 in 1 : vector<128x9xf32>, vector<128x9xf32>, vector<128x9xf32> -> vector<128x27xf32>
    %c0_56 = arith.constant 0 : index
    %c0_57 = arith.constant 0 : index
    %100 = vector.load %arg5[%c0_56, %c0_57] : memref<27x100xf32, #tpu.memory_space<vmem>>, vector<27x100xf32>
    %cst_58 = arith.constant dense<0.000000e+00> : vector<128x100xf32>
    %101 = tpu.matmul %99, %100, %cst_58 {dimension_numbers = #tpu.dot_dimension_numbers<[1], [0], [0], [1], [0, 0, 1, 1], [], []>} : vector<128x27xf32>, vector<27x100xf32>, vector<128x100xf32> -> vector<128x100xf32>
    %c0_59 = arith.constant 0 : index
    %c0_60 = arith.constant 0 : index
    %102 = vector.load %arg6[%c0_59, %c0_60] : memref<1x100xf32, #tpu.memory_space<vmem>>, vector<1x100xf32>
    %103 = vector.broadcast %102 : vector<1x100xf32> to vector<128x100xf32>
    %104 = arith.addf %101, %103 : vector<128x100xf32>
    %c0_61 = arith.constant 0 : index
    %c0_62 = arith.constant 0 : index
    %105 = vector.load %arg7[%c0_61, %c0_62] : memref<128x100xf32, #tpu.memory_space<vmem>>, vector<128x100xf32>
    tpu.vector_store %arg7[%c0_61, %c0_62], %104 {strides = array<i32>} : memref<128x100xf32, #tpu.memory_space<vmem>>, vector<128x100xf32>,
    return
  }
  func.func @transform_0(%arg0: i32) -> (i32, i32) {
    %c0_i32 = arith.constant 0 : i32
    %c0_i32_0 = arith.constant 0 : i32
    %c0_i32_1 = arith.constant 0 : i32
    return %c0_i32, %c0_i32_0 : i32, i32
  }
  func.func @transform_1(%arg0: i32) -> (i32, i32) {
    %c0_i32 = arith.constant 0 : i32
    %c0_i32_0 = arith.constant 0 : i32
    %c0_i32_1 = arith.constant 0 : i32
    return %c0_i32, %c0_i32_0 : i32, i32
  }
  func.func @transform_2(%arg0: i32) -> (i32, i32, i32) {
    %c0_i32 = arith.constant 0 : i32
    %c0_i32_0 = arith.constant 0 : i32
    %c0_i32_1 = arith.constant 0 : i32
    %c0_i32_2 = arith.constant 0 : i32
    return %c0_i32, %c0_i32_0, %c0_i32_1 : i32, i32, i32
  }
  func.func @transform_3(%arg0: i32) -> (i32, i32) {
    %c0_i32 = arith.constant 0 : i32
    %c0_i32_0 = arith.constant 0 : i32
    %c0_i32_1 = arith.constant 0 : i32
    return %c0_i32, %c0_i32_0 : i32, i32
  }
  func.func @transform_4(%arg0: i32) -> (i32, i32) {
    %c0_i32 = arith.constant 0 : i32
    %c0_i32_0 = arith.constant 0 : i32
    %c0_i32_1 = arith.constant 0 : i32
    return %c0_i32, %c0_i32_0 : i32, i32
  }
  func.func @transform_5(%arg0: i32) -> (i32, i32) {
    %c0_i32 = arith.constant 0 : i32
    %c0_i32_0 = arith.constant 0 : i32
    %c0_i32_1 = arith.constant 0 : i32
    return %c0_i32, %c0_i32_0 : i32, i32
  }
  func.func @transform_6(%arg0: i32) -> (i32, i32) {
    %c0_i32 = arith.constant 0 : i32
    %c0_i32_0 = arith.constant 0 : i32
    %c0_i32_1 = arith.constant 0 : i32
    return %c0_i32, %c0_i32_0 : i32, i32
  }
}

</mosaic_0001>

<llo_original>
// kernel: model_forward.1
$region0: #{model_forward.1}
  #allocation0 [shape = 'u32[]', space=smem, size = 0x4, offset = 0x4, fixed_abs, tag = 'smem constant byte address 0x4 - core index']
  #allocation1 [shape = 'u32[72,128]{1,0:T(1,128)}', space=vmem, size = 0x9000, scoped, tag = 'internal scratch']
  #allocation2 [shape = 'bf16[288,256]{1,0:T(8,128)(2,1)}', space=vmem, size = 0x24000, scoped, tag = 'scratch operand']
  %s0 = inlined_call_operand.vmem [shape: bf16[288,512], index: 0, kind: input, shape index: {}]
  %s1 = inlined_call_operand.vmem [shape: bf16[512,256], index: 1, kind: input, shape index: {}]
  %s2 = inlined_call_operand.vmem [shape: bf16[9,256,128], index: 2, kind: input, shape index: {}]
  %s3 = inlined_call_operand.vmem [shape: f32[32,128], index: 3, kind: input, shape index: {}]
  %s4 = inlined_call_operand.vmem [shape: f32[27,100], index: 4, kind: input, shape index: {}]
  %s5 = inlined_call_operand.vmem [shape: f32[1,100], index: 5, kind: input, shape index: {}]
  %s6 = inlined_call_operand.vmem [shape: f32[128,100], index: 6, kind: output, shape index: {}]
  %s7 = sld [smem:[#allocation0]]
  $region34: #{model_forward.1} parent=0
    _
  %s9 = ssub.s32 1, %s7
  %s10 = scalar_select 0, %s9, %s7
  // Predicated region
  $region2: #{model_forward.1} parent=0 // pred_check
    _
  $region3: #{model_forward.1} parent=0 // pred_check_branch
    %12 = sbr.rel (0) target = $region5
  $region4: #{model_forward.1} parent=0 // pred_region
    _
  $region5: #{model_forward.1} parent=0 // pred_fallthru
    _
  // Predicated region
  $region6: #{model_forward.1} parent=0 // pred_check
    _
  $region7: #{model_forward.1} parent=0 // pred_check_branch
    %14 = sbr.rel (0) target = $region9
  $region8: #{model_forward.1} parent=0 // pred_region
    _
  $region9: #{model_forward.1} parent=0 // pred_fallthru
    _
  // Predicated region
  $region10: #{model_forward.1} parent=0 // pred_check
    _
  $region11: #{model_forward.1} parent=0 // pred_check_branch
    %16 = sbr.rel (0) target = $region13
  $region12: #{model_forward.1} parent=0 // pred_region
    _
  $region13: #{model_forward.1} parent=0 // pred_fallthru
    _
  // Predicated region
  $region14: #{model_forward.1} parent=0 // pred_check
    _
  $region15: #{model_forward.1} parent=0 // pred_check_branch
    %18 = sbr.rel (0) target = $region17
  $region16: #{model_forward.1} parent=0 // pred_region
    _
  $region17: #{model_forward.1} parent=0 // pred_fallthru
    _
  // Predicated region
  $region18: #{model_forward.1} parent=0 // pred_check
    _
  $region19: #{model_forward.1} parent=0 // pred_check_branch
    %20 = sbr.rel (0) target = $region21
  $region20: #{model_forward.1} parent=0 // pred_region
    _
  $region21: #{model_forward.1} parent=0 // pred_fallthru
    _
  // Predicated region
  $region22: #{model_forward.1} parent=0 // pred_check
    _
  $region23: #{model_forward.1} parent=0 // pred_check_branch
    %22 = sbr.rel (0) target = $region25
  $region24: #{model_forward.1} parent=0 // pred_region
    _
  $region25: #{model_forward.1} parent=0 // pred_fallthru
    _
  %v23 = vld [vmem:[%s0] sm:$0xff]
  %v24 = vld [vmem:[%s0 + $0x8] sm:$0xff]
  %v25 = vld [vmem:[%s0 + $0x10] sm:$0xff]
  %v26 = vld [vmem:[%s0 + $0x18] sm:$0xff]
  %v27 = vld [vmem:[%s0 + $0x20] sm:$0xff]
  %v28 = vld [vmem:[%s0 + $0x28] sm:$0xff]
  %v29 = vld [vmem:[%s0 + $0x30] sm:$0xff]
  %v30 = vld [vmem:[%s0 + $0x38] sm:$0xff]
  %v31 = vld [vmem:[%s0 + $0x40] sm:$0xff]
  %v32 = vld [vmem:[%s0 + $0x48] sm:$0xff]
  %v33 = vld [vmem:[%s0 + $0x50] sm:$0xff]
  %v34 = vld [vmem:[%s0 + $0x58] sm:$0xff]
  %v35 = vld [vmem:[%s0 + $0x60] sm:$0xff]
  %v36 = vld [vmem:[%s0 + $0x68] sm:$0xff]
  %v37 = vld [vmem:[%s0 + $0x70] sm:$0xff]
  %v38 = vld [vmem:[%s0 + $0x78] sm:$0xff]
  %v39 = vld [vmem:[%s0 + $0x80] sm:$0xff]
  %v40 = vld [vmem:[%s0 + $0x88] sm:$0xff]
  %v41 = vld [vmem:[%s0 + $0x90] sm:$0xff]
  %v42 = vld [vmem:[%s0 + $0x98] sm:$0xff]
  %v43 = vld [vmem:[%s0 + $0xa0] sm:$0xff]
  %v44 = vld [vmem:[%s0 + $0xa8] sm:$0xff]
  %v45 = vld [vmem:[%s0 + $0xb0] sm:$0xff]
  %v46 = vld [vmem:[%s0 + $0xb8] sm:$0xff]
  %v47 = vld [vmem:[%s0 + $0xc0] sm:$0xff]
  %v48 = vld [vmem:[%s0 + $0xc8] sm:$0xff]
  %v49 = vld [vmem:[%s0 + $0xd0] sm:$0xff]
  %v50 = vld [vmem:[%s0 + $0xd8] sm:$0xff]
  %v51 = vld [vmem:[%s0 + $0xe0] sm:$0xff]
  %v52 = vld [vmem:[%s0 + $0xe8] sm:$0xff]
  %v53 = vld [vmem:[%s0 + $0xf0] sm:$0xff]
  %v54 = vld [vmem:[%s0 + $0xf8] sm:$0xff]
  %v55 = vld [vmem:[%s0 + $0x100] sm:$0xff]
  %v56 = vld [vmem:[%s0 + $0x108] sm:$0xff]
  %v57 = vld [vmem:[%s0 + $0x110] sm:$0xff]
  %v58 = vld [vmem:[%s0 + $0x118] sm:$0xff]
  %v59 = vld [vmem:[%s0 + $0x120] sm:$0xff]
  %v60 = vld [vmem:[%s0 + $0x128] sm:$0xff]
  %v61 = vld [vmem:[%s0 + $0x130] sm:$0xff]
  %v62 = vld [vmem:[%s0 + $0x138] sm:$0xff]
  %v63 = vld [vmem:[%s0 + $0x140] sm:$0xff]
  %v64 = vld [vmem:[%s0 + $0x148] sm:$0xff]
  %v65 = vld [vmem:[%s0 + $0x150] sm:$0xff]
  %v66 = vld [vmem:[%s0 + $0x158] sm:$0xff]
  %v67 = vld [vmem:[%s0 + $0x160] sm:$0xff]
  %v68 = vld [vmem:[%s0 + $0x168] sm:$0xff]
  %v69 = vld [vmem:[%s0 + $0x170] sm:$0xff]
  %v70 = vld [vmem:[%s0 + $0x178] sm:$0xff]
  %v71 = vld [vmem:[%s0 + $0x180] sm:$0xff]
  %v72 = vld [vmem:[%s0 + $0x188] sm:$0xff]
  %v73 = vld [vmem:[%s0 + $0x190] sm:$0xff]
  %v74 = vld [vmem:[%s0 + $0x198] sm:$0xff]
  %v75 = vld [vmem:[%s0 + $0x1a0] sm:$0xff]
  %v76 = vld [vmem:[%s0 + $0x1a8] sm:$0xff]
  %v77 = vld [vmem:[%s0 + $0x1b0] sm:$0xff]
  %v78 = vld [vmem:[%s0 + $0x1b8] sm:$0xff]
  %v79 = vld [vmem:[%s0 + $0x1c0] sm:$0xff]
  %v80 = vld [vmem:[%s0 + $0x1c8] sm:$0xff]
  %v81 = vld [vmem:[%s0 + $0x1d0] sm:$0xff]
  %v82 = vld [vmem:[%s0 + $0x1d8] sm:$0xff]
  %v83 = vld [vmem:[%s0 + $0x1e0] sm:$0xff]
  %v84 = vld [vmem:[%s0 + $0x1e8] sm:$0xff]
  %v85 = vld [vmem:[%s0 + $0x1f0] sm:$0xff]
  %v86 = vld [vmem:[%s0 + $0x1f8] sm:$0xff]
  %v87 = vld [vmem:[%s0 + $0x200] sm:$0xff]
  %v88 = vld [vmem:[%s0 + $0x208] sm:$0xff]
  %v89 = vld [vmem:[%s0 + $0x210] sm:$0xff]
  %v90 = vld [vmem:[%s0 + $0x218] sm:$0xff]
  %v91 = vld [vmem:[%s0 + $0x220] sm:$0xff]
  %v92 = vld [vmem:[%s0 + $0x228] sm:$0xff]
  %v93 = vld [vmem:[%s0 + $0x230] sm:$0xff]
  %v94 = vld [vmem:[%s0 + $0x238] sm:$0xff]
  %v95 = vld [vmem:[%s1] sm:$0xff]
  %v96 = vld [vmem:[%s1 + $0x8] sm:$0xff]
  %v97 = vld [vmem:[%s1 + $0x10] sm:$0xff]
  %v98 = vld [vmem:[%s1 + $0x18] sm:$0xff]
  %v99 = vld [vmem:[%s1 + $0x20] sm:$0xff]
  %v100 = vld [vmem:[%s1 + $0x28] sm:$0xff]
  %v101 = vld [vmem:[%s1 + $0x30] sm:$0xff]
  %v102 = vld [vmem:[%s1 + $0x38] sm:$0xff]
  %v103 = vld [vmem:[%s1 + $0x40] sm:$0xff]
  %v104 = vld [vmem:[%s1 + $0x48] sm:$0xff]
  %v105 = vld [vmem:[%s1 + $0x50] sm:$0xff]
  %v106 = vld [vmem:[%s1 + $0x58] sm:$0xff]
  %v107 = vld [vmem:[%s1 + $0x60] sm:$0xff]
  %v108 = vld [vmem:[%s1 + $0x68] sm:$0xff]
  %v109 = vld [vmem:[%s1 + $0x70] sm:$0xff]
  %v110 = vld [vmem:[%s1 + $0x78] sm:$0xff]
  %v111 = vld [vmem:[%s1 + $0x80] sm:$0xff]
  %v112 = vld [vmem:[%s1 + $0x88] sm:$0xff]
  %v113 = vld [vmem:[%s1 + $0x90] sm:$0xff]
  %v114 = vld [vmem:[%s1 + $0x98] sm:$0xff]
  %v115 = vld [vmem:[%s1 + $0xa0] sm:$0xff]
  %v116 = vld [vmem:[%s1 + $0xa8] sm:$0xff]
  %v117 = vld [vmem:[%s1 + $0xb0] sm:$0xff]
  %v118 = vld [vmem:[%s1 + $0xb8] sm:$0xff]
  %v119 = vld [vmem:[%s1 + $0xc0] sm:$0xff]
  %v120 = vld [vmem:[%s1 + $0xc8] sm:$0xff]
  %v121 = vld [vmem:[%s1 + $0xd0] sm:$0xff]
  %v122 = vld [vmem:[%s1 + $0xd8] sm:$0xff]
  %v123 = vld [vmem:[%s1 + $0xe0] sm:$0xff]
  %v124 = vld [vmem:[%s1 + $0xe8] sm:$0xff]
  %v125 = vld [vmem:[%s1 + $0xf0] sm:$0xff]
  %v126 = vld [vmem:[%s1 + $0xf8] sm:$0xff]
  %v127 = vld [vmem:[%s1 + $0x100] sm:$0xff]
  %v128 = vld [vmem:[%s1 + $0x108] sm:$0xff]
  %v129 = vld [vmem:[%s1 + $0x110] sm:$0xff]
  %v130 = vld [vmem:[%s1 + $0x118] sm:$0xff]
  %v131 = vld [vmem:[%s1 + $0x120] sm:$0xff]
  %v132 = vld [vmem:[%s1 + $0x128] sm:$0xff]
  %v133 = vld [vmem:[%s1 + $0x130] sm:$0xff]
  %v134 = vld [vmem:[%s1 + $0x138] sm:$0xff]
  %v135 = vld [vmem:[%s1 + $0x140] sm:$0xff]
  %v136 = vld [vmem:[%s1 + $0x148] sm:$0xff]
  %v137 = vld [vmem:[%s1 + $0x150] sm:$0xff]
  %v138 = vld [vmem:[%s1 + $0x158] sm:$0xff]
  %v139 = vld [vmem:[%s1 + $0x160] sm:$0xff]
  %v140 = vld [vmem:[%s1 + $0x168] sm:$0xff]
  %v141 = vld [vmem:[%s1 + $0x170] sm:$0xff]
  %v142 = vld [vmem:[%s1 + $0x178] sm:$0xff]
  %v143 = vld [vmem:[%s1 + $0x180] sm:$0xff]
  %v144 = vld [vmem:[%s1 + $0x188] sm:$0xff]
  %v145 = vld [vmem:[%s1 + $0x190] sm:$0xff]
  %v146 = vld [vmem:[%s1 + $0x198] sm:$0xff]
  %v147 = vld [vmem:[%s1 + $0x1a0] sm:$0xff]
  %v148 = vld [vmem:[%s1 + $0x1a8] sm:$0xff]
  %v149 = vld [vmem:[%s1 + $0x1b0] sm:$0xff]
  %v150 = vld [vmem:[%s1 + $0x1b8] sm:$0xff]
  %v151 = vld [vmem:[%s1 + $0x1c0] sm:$0xff]
  %v152 = vld [vmem:[%s1 + $0x1c8] sm:$0xff]
  %v153 = vld [vmem:[%s1 + $0x1d0] sm:$0xff]
  %v154 = vld [vmem:[%s1 + $0x1d8] sm:$0xff]
  %v155 = vld [vmem:[%s1 + $0x1e0] sm:$0xff]
  %v156 = vld [vmem:[%s1 + $0x1e8] sm:$0xff]
  %v157 = vld [vmem:[%s1 + $0x1f0] sm:$0xff]
  %v158 = vld [vmem:[%s1 + $0x1f8] sm:$0xff]
  %v231 = vunpack.c.l.b16 %v23
  %v232 = vunpack.c.h.b16 %v23
  %v233 = vunpack.c.l.b16 %v24
  %v234 = vunpack.c.h.b16 %v24
  %v235 = vunpack.c.l.b16 %v25
  %v236 = vunpack.c.h.b16 %v25
  %v237 = vunpack.c.l.b16 %v26
  %v238 = vunpack.c.h.b16 %v26
  %v239 = vunpack.c.l.b16 %v27
  %v240 = vunpack.c.h.b16 %v27
  %v241 = vunpack.c.l.b16 %v28
  %v242 = vunpack.c.h.b16 %v28
  %v243 = vunpack.c.l.b16 %v29
  %v244 = vunpack.c.h.b16 %v29
  %v245 = vunpack.c.l.b16 %v30
  %v246 = vunpack.c.h.b16 %v30
  %v247 = vunpack.c.l.b16 %v31
  %v248 = vunpack.c.h.b16 %v31
  %v249 = vunpack.c.l.b16 %v32
  %v250 = vunpack.c.h.b16 %v32
  %v251 = vunpack.c.l.b16 %v33
  %v252 = vunpack.c.h.b16 %v33
  %v253 = vunpack.c.l.b16 %v34
  %v254 = vunpack.c.h.b16 %v34
  %v255 = vunpack.c.l.b16 %v35
  %v256 = vunpack.c.h.b16 %v35
  %v257 = vunpack.c.l.b16 %v36
  %v258 = vunpack.c.h.b16 %v36
  %v259 = vunpack.c.l.b16 %v37
  %v260 = vunpack.c.h.b16 %v37
  %v261 = vunpack.c.l.b16 %v38
  %v262 = vunpack.c.h.b16 %v38
  %v263 = vunpack.c.l.b16 %v39
  %v264 = vunpack.c.h.b16 %v39
  %v265 = vunpack.c.l.b16 %v40
  %v266 = vunpack.c.h.b16 %v40
  %v267 = vunpack.c.l.b16 %v41
  %v268 = vunpack.c.h.b16 %v41
  %v269 = vunpack.c.l.b16 %v42
  %v270 = vunpack.c.h.b16 %v42
  %v271 = vunpack.c.l.b16 %v43
  %v272 = vunpack.c.h.b16 %v43
  %v273 = vunpack.c.l.b16 %v44
  %v274 = vunpack.c.h.b16 %v44
  %v275 = vunpack.c.l.b16 %v45
  %v276 = vunpack.c.h.b16 %v45
  %v277 = vunpack.c.l.b16 %v46
  %v278 = vunpack.c.h.b16 %v46
  %v279 = vunpack.c.l.b16 %v47
  %v280 = vunpack.c.h.b16 %v47
  %v281 = vunpack.c.l.b16 %v48
  %v282 = vunpack.c.h.b16 %v48
  %v283 = vunpack.c.l.b16 %v49
  %v284 = vunpack.c.h.b16 %v49
  %v285 = vunpack.c.l.b16 %v50
  %v286 = vunpack.c.h.b16 %v50
  %v287 = vunpack.c.l.b16 %v51
  %v288 = vunpack.c.h.b16 %v51
  %v289 = vunpack.c.l.b16 %v52
  %v290 = vunpack.c.h.b16 %v52
  %v291 = vunpack.c.l.b16 %v53
  %v292 = vunpack.c.h.b16 %v53
  %v293 = vunpack.c.l.b16 %v54
  %v294 = vunpack.c.h.b16 %v54
  %v295 = vunpack.c.l.b16 %v55
  %v296 = vunpack.c.h.b16 %v55
  %v297 = vunpack.c.l.b16 %v56
  %v298 = vunpack.c.h.b16 %v56
  %v299 = vunpack.c.l.b16 %v57
  %v300 = vunpack.c.h.b16 %v57
  %v301 = vunpack.c.l.b16 %v58
  %v302 = vunpack.c.h.b16 %v58
  %v303 = vunpack.c.l.b16 %v59
  %v304 = vunpack.c.h.b16 %v59
  %v305 = vunpack.c.l.b16 %v60
  %v306 = vunpack.c.h.b16 %v60
  %v307 = vunpack.c.l.b16 %v61
  %v308 = vunpack.c.h.b16 %v61
  %v309 = vunpack.c.l.b16 %v62
  %v310 = vunpack.c.h.b16 %v62
  %v311 = vunpack.c.l.b16 %v63
  %v312 = vunpack.c.h.b16 %v63
  %v313 = vunpack.c.l.b16 %v64
  %v314 = vunpack.c.h.b16 %v64
  %v315 = vunpack.c.l.b16 %v65
  %v316 = vunpack.c.h.b16 %v65
  %v317 = vunpack.c.l.b16 %v66
  %v318 = vunpack.c.h.b16 %v66
  %v319 = vunpack.c.l.b16 %v67
  %v320 = vunpack.c.h.b16 %v67
  %v321 = vunpack.c.l.b16 %v68
  %v322 = vunpack.c.h.b16 %v68
  %v323 = vunpack.c.l.b16 %v69
  %v324 = vunpack.c.h.b16 %v69
  %v325 = vunpack.c.l.b16 %v70
  %v326 = vunpack.c.h.b16 %v70
  %v327 = vunpack.c.l.b16 %v71
  %v328 = vunpack.c.h.b16 %v71
  %v329 = vunpack.c.l.b16 %v72
  %v330 = vunpack.c.h.b16 %v72
  %v331 = vunpack.c.l.b16 %v73
  %v332 = vunpack.c.h.b16 %v73
  %v333 = vunpack.c.l.b16 %v74
  %v334 = vunpack.c.h.b16 %v74
  %v335 = vunpack.c.l.b16 %v75
  %v336 = vunpack.c.h.b16 %v75
  %v337 = vunpack.c.l.b16 %v76
  %v338 = vunpack.c.h.b16 %v76
  %v339 = vunpack.c.l.b16 %v77
  %v340 = vunpack.c.h.b16 %v77
  %v341 = vunpack.c.l.b16 %v78
  %v342 = vunpack.c.h.b16 %v78
  %v343 = vunpack.c.l.b16 %v79
  %v344 = vunpack.c.h.b16 %v79
  %v345 = vunpack.c.l.b16 %v80
  %v346 = vunpack.c.h.b16 %v80
  %v347 = vunpack.c.l.b16 %v81
  %v348 = vunpack.c.h.b16 %v81
  %v349 = vunpack.c.l.b16 %v82
  %v350 = vunpack.c.h.b16 %v82
  %v351 = vunpack.c.l.b16 %v83
  %v352 = vunpack.c.h.b16 %v83
  %v353 = vunpack.c.l.b16 %v84
  %v354 = vunpack.c.h.b16 %v84
  %v355 = vunpack.c.l.b16 %v85
  %v356 = vunpack.c.h.b16 %v85
  %v357 = vunpack.c.l.b16 %v86
  %v358 = vunpack.c.h.b16 %v86
  %v359 = vunpack.c.l.b16 %v87
  %v360 = vunpack.c.h.b16 %v87
  %v361 = vunpack.c.l.b16 %v88
  %v362 = vunpack.c.h.b16 %v88
  %v363 = vunpack.c.l.b16 %v89
  %v364 = vunpack.c.h.b16 %v89
  %v365 = vunpack.c.l.b16 %v90
  %v366 = vunpack.c.h.b16 %v90
  %v367 = vunpack.c.l.b16 %v91
  %v368 = vunpack.c.h.b16 %v91
  %v369 = vunpack.c.l.b16 %v92
  %v370 = vunpack.c.h.b16 %v92
  %v371 = vunpack.c.l.b16 %v93
  %v372 = vunpack.c.h.b16 %v93
  %v373 = vunpack.c.l.b16 %v94
  %v374 = vunpack.c.h.b16 %v94
  %v375 = vpack.c.b16 %v235, %v231
  %v376 = vpack.c.b16 %v236, %v232
  %v377 = vpack.c.b16 %v237, %v233
  %v378 = vpack.c.b16 %v238, %v234
  %v379 = vpack.c.b16 %v243, %v239
  %v380 = vpack.c.b16 %v244, %v240
  %v381 = vpack.c.b16 %v245, %v241
  %v382 = vpack.c.b16 %v246, %v242
  %v383 = vpack.c.b16 %v251, %v247
  %v384 = vpack.c.b16 %v252, %v248
  %v385 = vpack.c.b16 %v253, %v249
  %v386 = vpack.c.b16 %v254, %v250
  %v387 = vpack.c.b16 %v259, %v255
  %v388 = vpack.c.b16 %v260, %v256
  %v389 = vpack.c.b16 %v261, %v257
  %v390 = vpack.c.b16 %v262, %v258
  %v391 = vpack.c.b16 %v267, %v263
  %v392 = vpack.c.b16 %v268, %v264
  %v393 = vpack.c.b16 %v269, %v265
  %v394 = vpack.c.b16 %v270, %v266
  %v395 = vpack.c.b16 %v275, %v271
  %v396 = vpack.c.b16 %v276, %v272
  %v397 = vpack.c.b16 %v277, %v273
  %v398 = vpack.c.b16 %v278, %v274
  %v399 = vpack.c.b16 %v283, %v279
  %v400 = vpack.c.b16 %v284, %v280
  %v401 = vpack.c.b16 %v285, %v281
  %v402 = vpack.c.b16 %v286, %v282
  %v403 = vpack.c.b16 %v291, %v287
  %v404 = vpack.c.b16 %v292, %v288
  %v405 = vpack.c.b16 %v293, %v289
  %v406 = vpack.c.b16 %v294, %v290
  %v407 = vpack.c.b16 %v299, %v295
  %v408 = vpack.c.b16 %v300, %v296
  %v409 = vpack.c.b16 %v301, %v297
  %v410 = vpack.c.b16 %v302, %v298
  %v411 = vpack.c.b16 %v307, %v303
  %v412 = vpack.c.b16 %v308, %v304
  %v413 = vpack.c.b16 %v309, %v305
  %v414 = vpack.c.b16 %v310, %v306
  %v415 = vpack.c.b16 %v315, %v311
  %v416 = vpack.c.b16 %v316, %v312
  %v417 = vpack.c.b16 %v317, %v313
  %v418 = vpack.c.b16 %v318, %v314
  %v419 = vpack.c.b16 %v323, %v319
  %v420 = vpack.c.b16 %v324, %v320
  %v421 = vpack.c.b16 %v325, %v321
  %v422 = vpack.c.b16 %v326, %v322
  %v423 = vpack.c.b16 %v331, %v327
  %v424 = vpack.c.b16 %v332, %v328
  %v425 = vpack.c.b16 %v333, %v329
  %v426 = vpack.c.b16 %v334, %v330
  %v427 = vpack.c.b16 %v339, %v335
  %v428 = vpack.c.b16 %v340, %v336
  %v429 = vpack.c.b16 %v341, %v337
  %v430 = vpack.c.b16 %v342, %v338
  %v431 = vpack.c.b16 %v347, %v343
  %v432 = vpack.c.b16 %v348, %v344
  %v433 = vpack.c.b16 %v349, %v345
  %v434 = vpack.c.b16 %v350, %v346
  %v435 = vpack.c.b16 %v355, %v351
  %v436 = vpack.c.b16 %v356, %v352
  %v437 = vpack.c.b16 %v357, %v353
  %v438 = vpack.c.b16 %v358, %v354
  %v439 = vpack.c.b16 %v363, %v359
  %v440 = vpack.c.b16 %v364, %v360
  %v441 = vpack.c.b16 %v365, %v361
  %v442 = vpack.c.b16 %v366, %v362
  %v443 = vpack.c.b16 %v371, %v367
  %v444 = vpack.c.b16 %v372, %v368
  %v445 = vpack.c.b16 %v373, %v369
  %v446 = vpack.c.b16 %v374, %v370
  %v583 = vunpack.c.l.b16 %v95
  %v584 = vunpack.c.h.b16 %v95
  %v585 = vunpack.c.l.b16 %v96
  %v586 = vunpack.c.h.b16 %v96
  %v587 = vunpack.c.l.b16 %v97
  %v588 = vunpack.c.h.b16 %v97
  %v589 = vunpack.c.l.b16 %v98
  %v590 = vunpack.c.h.b16 %v98
  %v591 = vunpack.c.l.b16 %v99
  %v592 = vunpack.c.h.b16 %v99
  %v593 = vunpack.c.l.b16 %v100
  %v594 = vunpack.c.h.b16 %v100
  %v595 = vunpack.c.l.b16 %v101
  %v596 = vunpack.c.h.b16 %v101
  %v597 = vunpack.c.l.b16 %v102
  %v598 = vunpack.c.h.b16 %v102
  %v599 = vunpack.c.l.b16 %v103
  %v600 = vunpack.c.h.b16 %v103
  %v601 = vunpack.c.l.b16 %v104
  %v602 = vunpack.c.h.b16 %v104
  %v603 = vunpack.c.l.b16 %v105
  %v604 = vunpack.c.h.b16 %v105
  %v605 = vunpack.c.l.b16 %v106
  %v606 = vunpack.c.h.b16 %v106
  %v607 = vunpack.c.l.b16 %v107
  %v608 = vunpack.c.h.b16 %v107
  %v609 = vunpack.c.l.b16 %v108
  %v610 = vunpack.c.h.b16 %v108
  %v611 = vunpack.c.l.b16 %v109
  %v612 = vunpack.c.h.b16 %v109
  %v613 = vunpack.c.l.b16 %v110
  %v614 = vunpack.c.h.b16 %v110
  %v615 = vunpack.c.l.b16 %v111
  %v616 = vunpack.c.h.b16 %v111
  %v617 = vunpack.c.l.b16 %v112
  %v618 = vunpack.c.h.b16 %v112
  %v619 = vunpack.c.l.b16 %v113
  %v620 = vunpack.c.h.b16 %v113
  %v621 = vunpack.c.l.b16 %v114
  %v622 = vunpack.c.h.b16 %v114
  %v623 = vunpack.c.l.b16 %v115
  %v624 = vunpack.c.h.b16 %v115
  %v625 = vunpack.c.l.b16 %v116
  %v626 = vunpack.c.h.b16 %v116
  %v627 = vunpack.c.l.b16 %v117
  %v628 = vunpack.c.h.b16 %v117
  %v629 = vunpack.c.l.b16 %v118
  %v630 = vunpack.c.h.b16 %v118
  %v631 = vunpack.c.l.b16 %v119
  %v632 = vunpack.c.h.b16 %v119
  %v633 = vunpack.c.l.b16 %v120
  %v634 = vunpack.c.h.b16 %v120
  %v635 = vunpack.c.l.b16 %v121
  %v636 = vunpack.c.h.b16 %v121
  %v637 = vunpack.c.l.b16 %v122
  %v638 = vunpack.c.h.b16 %v122
  %v639 = vunpack.c.l.b16 %v123
  %v640 = vunpack.c.h.b16 %v123
  %v641 = vunpack.c.l.b16 %v124
  %v642 = vunpack.c.h.b16 %v124
  %v643 = vunpack.c.l.b16 %v125
  %v644 = vunpack.c.h.b16 %v125
  %v645 = vunpack.c.l.b16 %v126
  %v646 = vunpack.c.h.b16 %v126
  %v647 = vunpack.c.l.b16 %v127
  %v648 = vunpack.c.h.b16 %v127
  %v649 = vunpack.c.l.b16 %v128
  %v650 = vunpack.c.h.b16 %v128
  %v651 = vunpack.c.l.b16 %v129
  %v652 = vunpack.c.h.b16 %v129
  %v653 = vunpack.c.l.b16 %v130
  %v654 = vunpack.c.h.b16 %v130
  %v655 = vunpack.c.l.b16 %v131
  %v656 = vunpack.c.h.b16 %v131
  %v657 = vunpack.c.l.b16 %v132
  %v658 = vunpack.c.h.b16 %v132
  %v659 = vunpack.c.l.b16 %v133
  %v660 = vunpack.c.h.b16 %v133
  %v661 = vunpack.c.l.b16 %v134
  %v662 = vunpack.c.h.b16 %v134
  %v663 = vunpack.c.l.b16 %v135
  %v664 = vunpack.c.h.b16 %v135
  %v665 = vunpack.c.l.b16 %v136
  %v666 = vunpack.c.h.b16 %v136
  %v667 = vunpack.c.l.b16 %v137
  %v668 = vunpack.c.h.b16 %v137
  %v669 = vunpack.c.l.b16 %v138
  %v670 = vunpack.c.h.b16 %v138
  %v671 = vunpack.c.l.b16 %v139
  %v672 = vunpack.c.h.b16 %v139
  %v673 = vunpack.c.l.b16 %v140
  %v674 = vunpack.c.h.b16 %v140
  %v675 = vunpack.c.l.b16 %v141
  %v676 = vunpack.c.h.b16 %v141
  %v677 = vunpack.c.l.b16 %v142
  %v678 = vunpack.c.h.b16 %v142
  %v679 = vunpack.c.l.b16 %v143
  %v680 = vunpack.c.h.b16 %v143
  %v681 = vunpack.c.l.b16 %v144
  %v682 = vunpack.c.h.b16 %v144
  %v683 = vunpack.c.l.b16 %v145
  %v684 = vunpack.c.h.b16 %v145
  %v685 = vunpack.c.l.b16 %v146
  %v686 = vunpack.c.h.b16 %v146
  %v687 = vunpack.c.l.b16 %v147
  %v688 = vunpack.c.h.b16 %v147
  %v689 = vunpack.c.l.b16 %v148
  %v690 = vunpack.c.h.b16 %v148
  %v691 = vunpack.c.l.b16 %v149
  %v692 = vunpack.c.h.b16 %v149
  %v693 = vunpack.c.l.b16 %v150
  %v694 = vunpack.c.h.b16 %v150
  %v695 = vunpack.c.l.b16 %v151
  %v696 = vunpack.c.h.b16 %v151
  %v697 = vunpack.c.l.b16 %v152
  %v698 = vunpack.c.h.b16 %v152
  %v699 = vunpack.c.l.b16 %v153
  %v700 = vunpack.c.h.b16 %v153
  %v701 = vunpack.c.l.b16 %v154
  %v702 = vunpack.c.h.b16 %v154
  %v703 = vunpack.c.l.b16 %v155
  %v704 = vunpack.c.h.b16 %v155
  %v705 = vunpack.c.l.b16 %v156
  %v706 = vunpack.c.h.b16 %v156
  %v707 = vunpack.c.l.b16 %v157
  %v708 = vunpack.c.h.b16 %v157
  %v709 = vunpack.c.l.b16 %v158
  %v710 = vunpack.c.h.b16 %v158
  %v711 = vpack.c.b16 %v585, %v583
  %v712 = vpack.c.b16 %v586, %v584
  %v713 = vpack.c.b16 %v589, %v587
  %v714 = vpack.c.b16 %v590, %v588
  %v715 = vpack.c.b16 %v593, %v591
  %v716 = vpack.c.b16 %v594, %v592
  %v717 = vpack.c.b16 %v597, %v595
  %v718 = vpack.c.b16 %v598, %v596
  %v719 = vpack.c.b16 %v601, %v599
  %v720 = vpack.c.b16 %v602, %v600
  %v721 = vpack.c.b16 %v605, %v603
  %v722 = vpack.c.b16 %v606, %v604
  %v723 = vpack.c.b16 %v609, %v607
  %v724 = vpack.c.b16 %v610, %v608
  %v725 = vpack.c.b16 %v613, %v611
  %v726 = vpack.c.b16 %v614, %v612
  %v727 = vpack.c.b16 %v617, %v615
  %v728 = vpack.c.b16 %v618, %v616
  %v729 = vpack.c.b16 %v621, %v619
  %v730 = vpack.c.b16 %v622, %v620
  %v731 = vpack.c.b16 %v625, %v623
  %v732 = vpack.c.b16 %v626, %v624
  %v733 = vpack.c.b16 %v629, %v627
  %v734 = vpack.c.b16 %v630, %v628
  %v735 = vpack.c.b16 %v633, %v631
  %v736 = vpack.c.b16 %v634, %v632
  %v737 = vpack.c.b16 %v637, %v635
  %v738 = vpack.c.b16 %v638, %v636
  %v739 = vpack.c.b16 %v641, %v639
  %v740 = vpack.c.b16 %v642, %v640
  %v741 = vpack.c.b16 %v645, %v643
  %v742 = vpack.c.b16 %v646, %v644
  %v743 = vpack.c.b16 %v649, %v647
  %v744 = vpack.c.b16 %v650, %v648
  %v745 = vpack.c.b16 %v653, %v651
  %v746 = vpack.c.b16 %v654, %v652
  %v747 = vpack.c.b16 %v657, %v655
  %v748 = vpack.c.b16 %v658, %v656
  %v749 = vpack.c.b16 %v661, %v659
  %v750 = vpack.c.b16 %v662, %v660
  %v751 = vpack.c.b16 %v665, %v663
  %v752 = vpack.c.b16 %v666, %v664
  %v753 = vpack.c.b16 %v669, %v667
  %v754 = vpack.c.b16 %v670, %v668
  %v755 = vpack.c.b16 %v673, %v671
  %v756 = vpack.c.b16 %v674, %v672
  %v757 = vpack.c.b16 %v677, %v675
  %v758 = vpack.c.b16 %v678, %v676
  %v759 = vpack.c.b16 %v681, %v679
  %v760 = vpack.c.b16 %v682, %v680
  %v761 = vpack.c.b16 %v685, %v683
  %v762 = vpack.c.b16 %v686, %v684
  %v763 = vpack.c.b16 %v689, %v687
  %v764 = vpack.c.b16 %v690, %v688
  %v765 = vpack.c.b16 %v693, %v691
  %v766 = vpack.c.b16 %v694, %v692
  %v767 = vpack.c.b16 %v697, %v695
  %v768 = vpack.c.b16 %v698, %v696
  %v769 = vpack.c.b16 %v701, %v699
  %v770 = vpack.c.b16 %v702, %v700
  %v771 = vpack.c.b16 %v705, %v703
  %v772 = vpack.c.b16 %v706, %v704
  %v773 = vpack.c.b16 %v709, %v707
  %v774 = vpack.c.b16 %v710, %v708
  %839 = vmatpush.bf16.msra.mxu0 %v725
  %840 = vmatpush.bf16.msra.mxu0 %v723
  %841 = vmatpush.bf16.msra.mxu0 %v721
  %842 = vmatpush.bf16.msra.mxu0 %v719
  %843 = vmatpush.bf16.msra.mxu0 %v717
  %844 = vmatpush.bf16.msra.mxu0 %v715
  %845 = vmatpush.bf16.msra.mxu0 %v713
  %846 = vmatpush.bf16.msra.mxu0 %v711
  %847 = vmatmul.bf16.gmra.mxu0 %v375
  %v848 = vpop.f32.mrf.mxu0
  %v849 = vadd.f32 0.0, %v848
  %v850 = vpop.f32.mrf.mxu0
  %v851 = vadd.f32 0.0, %v850
  %852 = vmatmul.bf16.gmra.mxu0 %v379
  %v853 = vpop.f32.mrf.mxu0
  %v854 = vadd.f32 0.0, %v853
  %v855 = vpop.f32.mrf.mxu0
  %v856 = vadd.f32 0.0, %v855
  %857 = vmatmul.bf16.gmra.mxu0 %v383
  %v858 = vpop.f32.mrf.mxu0
  %v859 = vadd.f32 0.0, %v858
  %v860 = vpop.f32.mrf.mxu0
  %v861 = vadd.f32 0.0, %v860
  %862 = vmatmul.bf16.gmra.mxu0 %v387
  %v863 = vpop.f32.mrf.mxu0
  %v864 = vadd.f32 0.0, %v863
  %v865 = vpop.f32.mrf.mxu0
  %v866 = vadd.f32 0.0, %v865
  %867 = vmatmul.bf16.gmra.mxu0 %v391
  %v868 = vpop.f32.mrf.mxu0
  %v869 = vadd.f32 0.0, %v868
  %v870 = vpop.f32.mrf.mxu0
  %v871 = vadd.f32 0.0, %v870
  %872 = vmatmul.bf16.gmra.mxu0 %v395
  %v873 = vpop.f32.mrf.mxu0
  %v874 = vadd.f32 0.0, %v873
  %v875 = vpop.f32.mrf.mxu0
  %v876 = vadd.f32 0.0, %v875
  %877 = vmatmul.bf16.gmra.mxu0 %v399
  %v878 = vpop.f32.mrf.mxu0
  %v879 = vadd.f32 0.0, %v878
  %v880 = vpop.f32.mrf.mxu0
  %v881 = vadd.f32 0.0, %v880
  %882 = vmatmul.bf16.gmra.mxu0 %v403
  %v883 = vpop.f32.mrf.mxu0
  %v884 = vadd.f32 0.0, %v883
  %v885 = vpop.f32.mrf.mxu0
  %v886 = vadd.f32 0.0, %v885
  %887 = vmatmul.bf16.gmra.mxu0 %v407
  %v888 = vpop.f32.mrf.mxu0
  %v889 = vadd.f32 0.0, %v888
  %v890 = vpop.f32.mrf.mxu0
  %v891 = vadd.f32 0.0, %v890
  %892 = vmatmul.bf16.gmra.mxu0 %v411
  %v893 = vpop.f32.mrf.mxu0
  %v894 = vadd.f32 0.0, %v893
  %v895 = vpop.f32.mrf.mxu0
  %v896 = vadd.f32 0.0, %v895
  %897 = vmatmul.bf16.gmra.mxu0 %v415
  %v898 = vpop.f32.mrf.mxu0
  %v899 = vadd.f32 0.0, %v898
  %v900 = vpop.f32.mrf.mxu0
  %v901 = vadd.f32 0.0, %v900
  %902 = vmatmul.bf16.gmra.mxu0 %v419
  %v903 = vpop.f32.mrf.mxu0
  %v904 = vadd.f32 0.0, %v903
  %v905 = vpop.f32.mrf.mxu0
  %v906 = vadd.f32 0.0, %v905
  %907 = vmatmul.bf16.gmra.mxu0 %v423
  %v908 = vpop.f32.mrf.mxu0
  %v909 = vadd.f32 0.0, %v908
  %v910 = vpop.f32.mrf.mxu0
  %v911 = vadd.f32 0.0, %v910
  %912 = vmatmul.bf16.gmra.mxu0 %v427
  %v913 = vpop.f32.mrf.mxu0
  %v914 = vadd.f32 0.0, %v913
  %v915 = vpop.f32.mrf.mxu0
  %v916 = vadd.f32 0.0, %v915
  %917 = vmatmul.bf16.gmra.mxu0 %v431
  %v918 = vpop.f32.mrf.mxu0
  %v919 = vadd.f32 0.0, %v918
  %v920 = vpop.f32.mrf.mxu0
  %v921 = vadd.f32 0.0, %v920
  %922 = vmatmul.bf16.gmra.mxu0 %v435
  %v923 = vpop.f32.mrf.mxu0
  %v924 = vadd.f32 0.0, %v923
  %v925 = vpop.f32.mrf.mxu0
  %v926 = vadd.f32 0.0, %v925
  %927 = vmatmul.bf16.gmra.mxu0 %v439
  %v928 = vpop.f32.mrf.mxu0
  %v929 = vadd.f32 0.0, %v928
  %v930 = vpop.f32.mrf.mxu0
  %v931 = vadd.f32 0.0, %v930
  %932 = vmatmul.bf16.gmra.mxu0 %v443
  %v933 = vpop.f32.mrf.mxu0
  %v934 = vadd.f32 0.0, %v933
  %v935 = vpop.f32.mrf.mxu0
  %v936 = vadd.f32 0.0, %v935
  %937 = vdwg.mxu0
  %938 = vmatpush.bf16.msra.mxu0 %v741
  %939 = vmatpush.bf16.msra.mxu0 %v739
  %940 = vmatpush.bf16.msra.mxu0 %v737
  %941 = vmatpush.bf16.msra.mxu0 %v735
  %942 = vmatpush.bf16.msra.mxu0 %v733
  %943 = vmatpush.bf16.msra.mxu0 %v731
  %944 = vmatpush.bf16.msra.mxu0 %v729
  %945 = vmatpush.bf16.msra.mxu0 %v727
  %946 = vmatmul.bf16.gmra.mxu0 %v376
  %v947 = vpop.f32.mrf.mxu0
  %v948 = vadd.f32 %v849, %v947
  %v949 = vpop.f32.mrf.mxu0
  %v950 = vadd.f32 %v851, %v949
  %951 = vmatmul.bf16.gmra.mxu0 %v380
  %v952 = vpop.f32.mrf.mxu0
  %v953 = vadd.f32 %v854, %v952
  %v954 = vpop.f32.mrf.mxu0
  %v955 = vadd.f32 %v856, %v954
  %956 = vmatmul.bf16.gmra.mxu0 %v384
  %v957 = vpop.f32.mrf.mxu0
  %v958 = vadd.f32 %v859, %v957
  %v959 = vpop.f32.mrf.mxu0
  %v960 = vadd.f32 %v861, %v959
  %961 = vmatmul.bf16.gmra.mxu0 %v388
  %v962 = vpop.f32.mrf.mxu0
  %v963 = vadd.f32 %v864, %v962
  %v964 = vpop.f32.mrf.mxu0
  %v965 = vadd.f32 %v866, %v964
  %966 = vmatmul.bf16.gmra.mxu0 %v392
  %v967 = vpop.f32.mrf.mxu0
  %v968 = vadd.f32 %v869, %v967
  %v969 = vpop.f32.mrf.mxu0
  %v970 = vadd.f32 %v871, %v969
  %971 = vmatmul.bf16.gmra.mxu0 %v396
  %v972 = vpop.f32.mrf.mxu0
  %v973 = vadd.f32 %v874, %v972
  %v974 = vpop.f32.mrf.mxu0
  %v975 = vadd.f32 %v876, %v974
  %976 = vmatmul.bf16.gmra.mxu0 %v400
  %v977 = vpop.f32.mrf.mxu0
  %v978 = vadd.f32 %v879, %v977
  %v979 = vpop.f32.mrf.mxu0
  %v980 = vadd.f32 %v881, %v979
  %981 = vmatmul.bf16.gmra.mxu0 %v404
  %v982 = vpop.f32.mrf.mxu0
  %v983 = vadd.f32 %v884, %v982
  %v984 = vpop.f32.mrf.mxu0
  %v985 = vadd.f32 %v886, %v984
  %986 = vmatmul.bf16.gmra.mxu0 %v408
  %v987 = vpop.f32.mrf.mxu0
  %v988 = vadd.f32 %v889, %v987
  %v989 = vpop.f32.mrf.mxu0
  %v990 = vadd.f32 %v891, %v989
  %991 = vmatmul.bf16.gmra.mxu0 %v412
  %v992 = vpop.f32.mrf.mxu0
  %v993 = vadd.f32 %v894, %v992
  %v994 = vpop.f32.mrf.mxu0
  %v995 = vadd.f32 %v896, %v994
  %996 = vmatmul.bf16.gmra.mxu0 %v416
  %v997 = vpop.f32.mrf.mxu0
  %v998 = vadd.f32 %v899, %v997
  %v999 = vpop.f32.mrf.mxu0
  %v1000 = vadd.f32 %v901, %v999
  %1001 = vmatmul.bf16.gmra.mxu0 %v420
  %v1002 = vpop.f32.mrf.mxu0
  %v1003 = vadd.f32 %v904, %v1002
  %v1004 = vpop.f32.mrf.mxu0
  %v1005 = vadd.f32 %v906, %v1004
  %1006 = vmatmul.bf16.gmra.mxu0 %v424
  %v1007 = vpop.f32.mrf.mxu0
  %v1008 = vadd.f32 %v909, %v1007
  %v1009 = vpop.f32.mrf.mxu0
  %v1010 = vadd.f32 %v911, %v1009
  %1011 = vmatmul.bf16.gmra.mxu0 %v428
  %v1012 = vpop.f32.mrf.mxu0
  %v1013 = vadd.f32 %v914, %v1012
  %v1014 = vpop.f32.mrf.mxu0
  %v1015 = vadd.f32 %v916, %v1014
  %1016 = vmatmul.bf16.gmra.mxu0 %v432
  %v1017 = vpop.f32.mrf.mxu0
  %v1018 = vadd.f32 %v919, %v1017
  %v1019 = vpop.f32.mrf.mxu0
  %v1020 = vadd.f32 %v921, %v1019
  %1021 = vmatmul.bf16.gmra.mxu0 %v436
  %v1022 = vpop.f32.mrf.mxu0
  %v1023 = vadd.f32 %v924, %v1022
  %v1024 = vpop.f32.mrf.mxu0
  %v1025 = vadd.f32 %v926, %v1024
  %1026 = vmatmul.bf16.gmra.mxu0 %v440
  %v1027 = vpop.f32.mrf.mxu0
  %v1028 = vadd.f32 %v929, %v1027
  %v1029 = vpop.f32.mrf.mxu0
  %v1030 = vadd.f32 %v931, %v1029
  %1031 = vmatmul.bf16.gmra.mxu0 %v444
  %v1032 = vpop.f32.mrf.mxu0
  %v1033 = vadd.f32 %v934, %v1032
  %v1034 = vpop.f32.mrf.mxu0
  %v1035 = vadd.f32 %v936, %v1034
  %1036 = vdwg.mxu0
  %1037 = vmatpush.bf16.msra.mxu0 %v757
  %1038 = vmatpush.bf16.msra.mxu0 %v755
  %1039 = vmatpush.bf16.msra.mxu0 %v753
  %1040 = vmatpush.bf16.msra.mxu0 %v751
  %1041 = vmatpush.bf16.msra.mxu0 %v749
  %1042 = vmatpush.bf16.msra.mxu0 %v747
  %1043 = vmatpush.bf16.msra.mxu0 %v745
  %1044 = vmatpush.bf16.msra.mxu0 %v743
  %1045 = vmatmul.bf16.gmra.mxu0 %v377
  %v1046 = vpop.f32.mrf.mxu0
  %v1047 = vadd.f32 %v948, %v1046
  %v1048 = vpop.f32.mrf.mxu0
  %v1049 = vadd.f32 %v950, %v1048
  %1050 = vmatmul.bf16.gmra.mxu0 %v381
  %v1051 = vpop.f32.mrf.mxu0
  %v1052 = vadd.f32 %v953, %v1051
  %v1053 = vpop.f32.mrf.mxu0
  %v1054 = vadd.f32 %v955, %v1053
  %1055 = vmatmul.bf16.gmra.mxu0 %v385
  %v1056 = vpop.f32.mrf.mxu0
  %v1057 = vadd.f32 %v958, %v1056
  %v1058 = vpop.f32.mrf.mxu0
  %v1059 = vadd.f32 %v960, %v1058
  %1060 = vmatmul.bf16.gmra.mxu0 %v389
  %v1061 = vpop.f32.mrf.mxu0
  %v1062 = vadd.f32 %v963, %v1061
  %v1063 = vpop.f32.mrf.mxu0
  %v1064 = vadd.f32 %v965, %v1063
  %1065 = vmatmul.bf16.gmra.mxu0 %v393
  %v1066 = vpop.f32.mrf.mxu0
  %v1067 = vadd.f32 %v968, %v1066
  %v1068 = vpop.f32.mrf.mxu0
  %v1069 = vadd.f32 %v970, %v1068
  %1070 = vmatmul.bf16.gmra.mxu0 %v397
  %v1071 = vpop.f32.mrf.mxu0
  %v1072 = vadd.f32 %v973, %v1071
  %v1073 = vpop.f32.mrf.mxu0
  %v1074 = vadd.f32 %v975, %v1073
  %1075 = vmatmul.bf16.gmra.mxu0 %v401
  %v1076 = vpop.f32.mrf.mxu0
  %v1077 = vadd.f32 %v978, %v1076
  %v1078 = vpop.f32.mrf.mxu0
  %v1079 = vadd.f32 %v980, %v1078
  %1080 = vmatmul.bf16.gmra.mxu0 %v405
  %v1081 = vpop.f32.mrf.mxu0
  %v1082 = vadd.f32 %v983, %v1081
  %v1083 = vpop.f32.mrf.mxu0
  %v1084 = vadd.f32 %v985, %v1083
  %1085 = vmatmul.bf16.gmra.mxu0 %v409
  %v1086 = vpop.f32.mrf.mxu0
  %v1087 = vadd.f32 %v988, %v1086
  %v1088 = vpop.f32.mrf.mxu0
  %v1089 = vadd.f32 %v990, %v1088
  %1090 = vmatmul.bf16.gmra.mxu0 %v413
  %v1091 = vpop.f32.mrf.mxu0
  %v1092 = vadd.f32 %v993, %v1091
  %v1093 = vpop.f32.mrf.mxu0
  %v1094 = vadd.f32 %v995, %v1093
  %1095 = vmatmul.bf16.gmra.mxu0 %v417
  %v1096 = vpop.f32.mrf.mxu0
  %v1097 = vadd.f32 %v998, %v1096
  %v1098 = vpop.f32.mrf.mxu0
  %v1099 = vadd.f32 %v1000, %v1098
  %1100 = vmatmul.bf16.gmra.mxu0 %v421
  %v1101 = vpop.f32.mrf.mxu0
  %v1102 = vadd.f32 %v1003, %v1101
  %v1103 = vpop.f32.mrf.mxu0
  %v1104 = vadd.f32 %v1005, %v1103
  %1105 = vmatmul.bf16.gmra.mxu0 %v425
  %v1106 = vpop.f32.mrf.mxu0
  %v1107 = vadd.f32 %v1008, %v1106
  %v1108 = vpop.f32.mrf.mxu0
  %v1109 = vadd.f32 %v1010, %v1108
  %1110 = vmatmul.bf16.gmra.mxu0 %v429
  %v1111 = vpop.f32.mrf.mxu0
  %v1112 = vadd.f32 %v1013, %v1111
  %v1113 = vpop.f32.mrf.mxu0
  %v1114 = vadd.f32 %v1015, %v1113
  %1115 = vmatmul.bf16.gmra.mxu0 %v433
  %v1116 = vpop.f32.mrf.mxu0
  %v1117 = vadd.f32 %v1018, %v1116
  %v1118 = vpop.f32.mrf.mxu0
  %v1119 = vadd.f32 %v1020, %v1118
  %1120 = vmatmul.bf16.gmra.mxu0 %v437
  %v1121 = vpop.f32.mrf.mxu0
  %v1122 = vadd.f32 %v1023, %v1121
  %v1123 = vpop.f32.mrf.mxu0
  %v1124 = vadd.f32 %v1025, %v1123
  %1125 = vmatmul.bf16.gmra.mxu0 %v441
  %v1126 = vpop.f32.mrf.mxu0
  %v1127 = vadd.f32 %v1028, %v1126
  %v1128 = vpop.f32.mrf.mxu0
  %v1129 = vadd.f32 %v1030, %v1128
  %1130 = vmatmul.bf16.gmra.mxu0 %v445
  %v1131 = vpop.f32.mrf.mxu0
  %v1132 = vadd.f32 %v1033, %v1131
  %v1133 = vpop.f32.mrf.mxu0
  %v1134 = vadd.f32 %v1035, %v1133
  %1135 = vdwg.mxu0
  %1136 = vmatpush.bf16.msra.mxu0 %v773
  %1137 = vmatpush.bf16.msra.mxu0 %v771
  %1138 = vmatpush.bf16.msra.mxu0 %v769
  %1139 = vmatpush.bf16.msra.mxu0 %v767
  %1140 = vmatpush.bf16.msra.mxu0 %v765
  %1141 = vmatpush.bf16.msra.mxu0 %v763
  %1142 = vmatpush.bf16.msra.mxu0 %v761
  %1143 = vmatpush.bf16.msra.mxu0 %v759
  %1144 = vmatmul.bf16.gmra.mxu0 %v378
  %v1145 = vpop.f32.mrf.mxu0
  %v1146 = vadd.f32 %v1047, %v1145
  %v1147 = vpop.f32.mrf.mxu0
  %v1148 = vadd.f32 %v1049, %v1147
  %1149 = vmatmul.bf16.gmra.mxu0 %v382
  %v1150 = vpop.f32.mrf.mxu0
  %v1151 = vadd.f32 %v1052, %v1150
  %v1152 = vpop.f32.mrf.mxu0
  %v1153 = vadd.f32 %v1054, %v1152
  %1154 = vmatmul.bf16.gmra.mxu0 %v386
  %v1155 = vpop.f32.mrf.mxu0
  %v1156 = vadd.f32 %v1057, %v1155
  %v1157 = vpop.f32.mrf.mxu0
  %v1158 = vadd.f32 %v1059, %v1157
  %1159 = vmatmul.bf16.gmra.mxu0 %v390
  %v1160 = vpop.f32.mrf.mxu0
  %v1161 = vadd.f32 %v1062, %v1160
  %v1162 = vpop.f32.mrf.mxu0
  %v1163 = vadd.f32 %v1064, %v1162
  %1164 = vmatmul.bf16.gmra.mxu0 %v394
  %v1165 = vpop.f32.mrf.mxu0
  %v1166 = vadd.f32 %v1067, %v1165
  %v1167 = vpop.f32.mrf.mxu0
  %v1168 = vadd.f32 %v1069, %v1167
  %1169 = vmatmul.bf16.gmra.mxu0 %v398
  %v1170 = vpop.f32.mrf.mxu0
  %v1171 = vadd.f32 %v1072, %v1170
  %v1172 = vpop.f32.mrf.mxu0
  %v1173 = vadd.f32 %v1074, %v1172
  %1174 = vmatmul.bf16.gmra.mxu0 %v402
  %v1175 = vpop.f32.mrf.mxu0
  %v1176 = vadd.f32 %v1077, %v1175
  %v1177 = vpop.f32.mrf.mxu0
  %v1178 = vadd.f32 %v1079, %v1177
  %1179 = vmatmul.bf16.gmra.mxu0 %v406
  %v1180 = vpop.f32.mrf.mxu0
  %v1181 = vadd.f32 %v1082, %v1180
  %v1182 = vpop.f32.mrf.mxu0
  %v1183 = vadd.f32 %v1084, %v1182
  %1184 = vmatmul.bf16.gmra.mxu0 %v410
  %v1185 = vpop.f32.mrf.mxu0
  %v1186 = vadd.f32 %v1087, %v1185
  %v1187 = vpop.f32.mrf.mxu0
  %v1188 = vadd.f32 %v1089, %v1187
  %1189 = vmatmul.bf16.gmra.mxu0 %v414
  %v1190 = vpop.f32.mrf.mxu0
  %v1191 = vadd.f32 %v1092, %v1190
  %v1192 = vpop.f32.mrf.mxu0
  %v1193 = vadd.f32 %v1094, %v1192
  %1194 = vmatmul.bf16.gmra.mxu0 %v418
  %v1195 = vpop.f32.mrf.mxu0
  %v1196 = vadd.f32 %v1097, %v1195
  %v1197 = vpop.f32.mrf.mxu0
  %v1198 = vadd.f32 %v1099, %v1197
  %1199 = vmatmul.bf16.gmra.mxu0 %v422
  %v1200 = vpop.f32.mrf.mxu0
  %v1201 = vadd.f32 %v1102, %v1200
  %v1202 = vpop.f32.mrf.mxu0
  %v1203 = vadd.f32 %v1104, %v1202
  %1204 = vmatmul.bf16.gmra.mxu0 %v426
  %v1205 = vpop.f32.mrf.mxu0
  %v1206 = vadd.f32 %v1107, %v1205
  %v1207 = vpop.f32.mrf.mxu0
  %v1208 = vadd.f32 %v1109, %v1207
  %1209 = vmatmul.bf16.gmra.mxu0 %v430
  %v1210 = vpop.f32.mrf.mxu0
  %v1211 = vadd.f32 %v1112, %v1210
  %v1212 = vpop.f32.mrf.mxu0
  %v1213 = vadd.f32 %v1114, %v1212
  %1214 = vmatmul.bf16.gmra.mxu0 %v434
  %v1215 = vpop.f32.mrf.mxu0
  %v1216 = vadd.f32 %v1117, %v1215
  %v1217 = vpop.f32.mrf.mxu0
  %v1218 = vadd.f32 %v1119, %v1217
  %1219 = vmatmul.bf16.gmra.mxu0 %v438
  %v1220 = vpop.f32.mrf.mxu0
  %v1221 = vadd.f32 %v1122, %v1220
  %v1222 = vpop.f32.mrf.mxu0
  %v1223 = vadd.f32 %v1124, %v1222
  %1224 = vmatmul.bf16.gmra.mxu0 %v442
  %v1225 = vpop.f32.mrf.mxu0
  %v1226 = vadd.f32 %v1127, %v1225
  %v1227 = vpop.f32.mrf.mxu0
  %v1228 = vadd.f32 %v1129, %v1227
  %1229 = vmatmul.bf16.gmra.mxu0 %v446
  %v1230 = vpop.f32.mrf.mxu0
  %v1231 = vadd.f32 %v1132, %v1230
  %v1232 = vpop.f32.mrf.mxu0
  %v1233 = vadd.f32 %v1134, %v1232
  %1234 = vdwg.mxu0
  %1235 = vmatpush.bf16.msra.mxu0 %v726
  %1236 = vmatpush.bf16.msra.mxu0 %v724
  %1237 = vmatpush.bf16.msra.mxu0 %v722
  %1238 = vmatpush.bf16.msra.mxu0 %v720
  %1239 = vmatpush.bf16.msra.mxu0 %v718
  %1240 = vmatpush.bf16.msra.mxu0 %v716
  %1241 = vmatpush.bf16.msra.mxu0 %v714
  %1242 = vmatpush.bf16.msra.mxu0 %v712
  %1243 = vmatmul.bf16.gmra.mxu0 %v375
  %v1244 = vpop.f32.mrf.mxu0
  %v1245 = vadd.f32 0.0, %v1244
  %v1246 = vpop.f32.mrf.mxu0
  %v1247 = vadd.f32 0.0, %v1246
  %1248 = vmatmul.bf16.gmra.mxu0 %v379
  %v1249 = vpop.f32.mrf.mxu0
  %v1250 = vadd.f32 0.0, %v1249
  %v1251 = vpop.f32.mrf.mxu0
  %v1252 = vadd.f32 0.0, %v1251
  %1253 = vmatmul.bf16.gmra.mxu0 %v383
  %v1254 = vpop.f32.mrf.mxu0
  %v1255 = vadd.f32 0.0, %v1254
  %v1256 = vpop.f32.mrf.mxu0
  %v1257 = vadd.f32 0.0, %v1256
  %1258 = vmatmul.bf16.gmra.mxu0 %v387
  %v1259 = vpop.f32.mrf.mxu0
  %v1260 = vadd.f32 0.0, %v1259
  %v1261 = vpop.f32.mrf.mxu0
  %v1262 = vadd.f32 0.0, %v1261
  %1263 = vmatmul.bf16.gmra.mxu0 %v391
  %v1264 = vpop.f32.mrf.mxu0
  %v1265 = vadd.f32 0.0, %v1264
  %v1266 = vpop.f32.mrf.mxu0
  %v1267 = vadd.f32 0.0, %v1266
  %1268 = vmatmul.bf16.gmra.mxu0 %v395
  %v1269 = vpop.f32.mrf.mxu0
  %v1270 = vadd.f32 0.0, %v1269
  %v1271 = vpop.f32.mrf.mxu0
  %v1272 = vadd.f32 0.0, %v1271
  %1273 = vmatmul.bf16.gmra.mxu0 %v399
  %v1274 = vpop.f32.mrf.mxu0
  %v1275 = vadd.f32 0.0, %v1274
  %v1276 = vpop.f32.mrf.mxu0
  %v1277 = vadd.f32 0.0, %v1276
  %1278 = vmatmul.bf16.gmra.mxu0 %v403
  %v1279 = vpop.f32.mrf.mxu0
  %v1280 = vadd.f32 0.0, %v1279
  %v1281 = vpop.f32.mrf.mxu0
  %v1282 = vadd.f32 0.0, %v1281
  %1283 = vmatmul.bf16.gmra.mxu0 %v407
  %v1284 = vpop.f32.mrf.mxu0
  %v1285 = vadd.f32 0.0, %v1284
  %v1286 = vpop.f32.mrf.mxu0
  %v1287 = vadd.f32 0.0, %v1286
  %1288 = vmatmul.bf16.gmra.mxu0 %v411
  %v1289 = vpop.f32.mrf.mxu0
  %v1290 = vadd.f32 0.0, %v1289
  %v1291 = vpop.f32.mrf.mxu0
  %v1292 = vadd.f32 0.0, %v1291
  %1293 = vmatmul.bf16.gmra.mxu0 %v415
  %v1294 = vpop.f32.mrf.mxu0
  %v1295 = vadd.f32 0.0, %v1294
  %v1296 = vpop.f32.mrf.mxu0
  %v1297 = vadd.f32 0.0, %v1296
  %1298 = vmatmul.bf16.gmra.mxu0 %v419
  %v1299 = vpop.f32.mrf.mxu0
  %v1300 = vadd.f32 0.0, %v1299
  %v1301 = vpop.f32.mrf.mxu0
  %v1302 = vadd.f32 0.0, %v1301
  %1303 = vmatmul.bf16.gmra.mxu0 %v423
  %v1304 = vpop.f32.mrf.mxu0
  %v1305 = vadd.f32 0.0, %v1304
  %v1306 = vpop.f32.mrf.mxu0
  %v1307 = vadd.f32 0.0, %v1306
  %1308 = vmatmul.bf16.gmra.mxu0 %v427
  %v1309 = vpop.f32.mrf.mxu0
  %v1310 = vadd.f32 0.0, %v1309
  %v1311 = vpop.f32.mrf.mxu0
  %v1312 = vadd.f32 0.0, %v1311
  %1313 = vmatmul.bf16.gmra.mxu0 %v431
  %v1314 = vpop.f32.mrf.mxu0
  %v1315 = vadd.f32 0.0, %v1314
  %v1316 = vpop.f32.mrf.mxu0
  %v1317 = vadd.f32 0.0, %v1316
  %1318 = vmatmul.bf16.gmra.mxu0 %v435
  %v1319 = vpop.f32.mrf.mxu0
  %v1320 = vadd.f32 0.0, %v1319
  %v1321 = vpop.f32.mrf.mxu0
  %v1322 = vadd.f32 0.0, %v1321
  %1323 = vmatmul.bf16.gmra.mxu0 %v439
  %v1324 = vpop.f32.mrf.mxu0
  %v1325 = vadd.f32 0.0, %v1324
  %v1326 = vpop.f32.mrf.mxu0
  %v1327 = vadd.f32 0.0, %v1326
  %1328 = vmatmul.bf16.gmra.mxu0 %v443
  %v1329 = vpop.f32.mrf.mxu0
  %v1330 = vadd.f32 0.0, %v1329
  %v1331 = vpop.f32.mrf.mxu0
  %v1332 = vadd.f32 0.0, %v1331
  %1333 = vdwg.mxu0
  %1334 = vmatpush.bf16.msra.mxu0 %v742
  %1335 = vmatpush.bf16.msra.mxu0 %v740
  %1336 = vmatpush.bf16.msra.mxu0 %v738
  %1337 = vmatpush.bf16.msra.mxu0 %v736
  %1338 = vmatpush.bf16.msra.mxu0 %v734
  %1339 = vmatpush.bf16.msra.mxu0 %v732
  %1340 = vmatpush.bf16.msra.mxu0 %v730
  %1341 = vmatpush.bf16.msra.mxu0 %v728
  %1342 = vmatmul.bf16.gmra.mxu0 %v376
  %v1343 = vpop.f32.mrf.mxu0
  %v1344 = vadd.f32 %v1245, %v1343
  %v1345 = vpop.f32.mrf.mxu0
  %v1346 = vadd.f32 %v1247, %v1345
  %1347 = vmatmul.bf16.gmra.mxu0 %v380
  %v1348 = vpop.f32.mrf.mxu0
  %v1349 = vadd.f32 %v1250, %v1348
  %v1350 = vpop.f32.mrf.mxu0
  %v1351 = vadd.f32 %v1252, %v1350
  %1352 = vmatmul.bf16.gmra.mxu0 %v384
  %v1353 = vpop.f32.mrf.mxu0
  %v1354 = vadd.f32 %v1255, %v1353
  %v1355 = vpop.f32.mrf.mxu0
  %v1356 = vadd.f32 %v1257, %v1355
  %1357 = vmatmul.bf16.gmra.mxu0 %v388
  %v1358 = vpop.f32.mrf.mxu0
  %v1359 = vadd.f32 %v1260, %v1358
  %v1360 = vpop.f32.mrf.mxu0
  %v1361 = vadd.f32 %v1262, %v1360
  %1362 = vmatmul.bf16.gmra.mxu0 %v392
  %v1363 = vpop.f32.mrf.mxu0
  %v1364 = vadd.f32 %v1265, %v1363
  %v1365 = vpop.f32.mrf.mxu0
  %v1366 = vadd.f32 %v1267, %v1365
  %1367 = vmatmul.bf16.gmra.mxu0 %v396
  %v1368 = vpop.f32.mrf.mxu0
  %v1369 = vadd.f32 %v1270, %v1368
  %v1370 = vpop.f32.mrf.mxu0
  %v1371 = vadd.f32 %v1272, %v1370
  %1372 = vmatmul.bf16.gmra.mxu0 %v400
  %v1373 = vpop.f32.mrf.mxu0
  %v1374 = vadd.f32 %v1275, %v1373
  %v1375 = vpop.f32.mrf.mxu0
  %v1376 = vadd.f32 %v1277, %v1375
  %1377 = vmatmul.bf16.gmra.mxu0 %v404
  %v1378 = vpop.f32.mrf.mxu0
  %v1379 = vadd.f32 %v1280, %v1378
  %v1380 = vpop.f32.mrf.mxu0
  %v1381 = vadd.f32 %v1282, %v1380
  %1382 = vmatmul.bf16.gmra.mxu0 %v408
  %v1383 = vpop.f32.mrf.mxu0
  %v1384 = vadd.f32 %v1285, %v1383
  %v1385 = vpop.f32.mrf.mxu0
  %v1386 = vadd.f32 %v1287, %v1385
  %1387 = vmatmul.bf16.gmra.mxu0 %v412
  %v1388 = vpop.f32.mrf.mxu0
  %v1389 = vadd.f32 %v1290, %v1388
  %v1390 = vpop.f32.mrf.mxu0
  %v1391 = vadd.f32 %v1292, %v1390
  %1392 = vmatmul.bf16.gmra.mxu0 %v416
  %v1393 = vpop.f32.mrf.mxu0
  %v1394 = vadd.f32 %v1295, %v1393
  %v1395 = vpop.f32.mrf.mxu0
  %v1396 = vadd.f32 %v1297, %v1395
  %1397 = vmatmul.bf16.gmra.mxu0 %v420
  %v1398 = vpop.f32.mrf.mxu0
  %v1399 = vadd.f32 %v1300, %v1398
  %v1400 = vpop.f32.mrf.mxu0
  %v1401 = vadd.f32 %v1302, %v1400
  %1402 = vmatmul.bf16.gmra.mxu0 %v424
  %v1403 = vpop.f32.mrf.mxu0
  %v1404 = vadd.f32 %v1305, %v1403
  %v1405 = vpop.f32.mrf.mxu0
  %v1406 = vadd.f32 %v1307, %v1405
  %1407 = vmatmul.bf16.gmra.mxu0 %v428
  %v1408 = vpop.f32.mrf.mxu0
  %v1409 = vadd.f32 %v1310, %v1408
  %v1410 = vpop.f32.mrf.mxu0
  %v1411 = vadd.f32 %v1312, %v1410
  %1412 = vmatmul.bf16.gmra.mxu0 %v432
  %v1413 = vpop.f32.mrf.mxu0
  %v1414 = vadd.f32 %v1315, %v1413
  %v1415 = vpop.f32.mrf.mxu0
  %v1416 = vadd.f32 %v1317, %v1415
  %1417 = vmatmul.bf16.gmra.mxu0 %v436
  %v1418 = vpop.f32.mrf.mxu0
  %v1419 = vadd.f32 %v1320, %v1418
  %v1420 = vpop.f32.mrf.mxu0
  %v1421 = vadd.f32 %v1322, %v1420
  %1422 = vmatmul.bf16.gmra.mxu0 %v440
  %v1423 = vpop.f32.mrf.mxu0
  %v1424 = vadd.f32 %v1325, %v1423
  %v1425 = vpop.f32.mrf.mxu0
  %v1426 = vadd.f32 %v1327, %v1425
  %1427 = vmatmul.bf16.gmra.mxu0 %v444
  %v1428 = vpop.f32.mrf.mxu0
  %v1429 = vadd.f32 %v1330, %v1428
  %v1430 = vpop.f32.mrf.mxu0
  %v1431 = vadd.f32 %v1332, %v1430
  %1432 = vdwg.mxu0
  %1433 = vmatpush.bf16.msra.mxu0 %v758
  %1434 = vmatpush.bf16.msra.mxu0 %v756
  %1435 = vmatpush.bf16.msra.mxu0 %v754
  %1436 = vmatpush.bf16.msra.mxu0 %v752
  %1437 = vmatpush.bf16.msra.mxu0 %v750
  %1438 = vmatpush.bf16.msra.mxu0 %v748
  %1439 = vmatpush.bf16.msra.mxu0 %v746
  %1440 = vmatpush.bf16.msra.mxu0 %v744
  %1441 = vmatmul.bf16.gmra.mxu0 %v377
  %v1442 = vpop.f32.mrf.mxu0
  %v1443 = vadd.f32 %v1344, %v1442
  %v1444 = vpop.f32.mrf.mxu0
  %v1445 = vadd.f32 %v1346, %v1444
  %1446 = vmatmul.bf16.gmra.mxu0 %v381
  %v1447 = vpop.f32.mrf.mxu0
  %v1448 = vadd.f32 %v1349, %v1447
  %v1449 = vpop.f32.mrf.mxu0
  %v1450 = vadd.f32 %v1351, %v1449
  %1451 = vmatmul.bf16.gmra.mxu0 %v385
  %v1452 = vpop.f32.mrf.mxu0
  %v1453 = vadd.f32 %v1354, %v1452
  %v1454 = vpop.f32.mrf.mxu0
  %v1455 = vadd.f32 %v1356, %v1454
  %1456 = vmatmul.bf16.gmra.mxu0 %v389
  %v1457 = vpop.f32.mrf.mxu0
  %v1458 = vadd.f32 %v1359, %v1457
  %v1459 = vpop.f32.mrf.mxu0
  %v1460 = vadd.f32 %v1361, %v1459
  %1461 = vmatmul.bf16.gmra.mxu0 %v393
  %v1462 = vpop.f32.mrf.mxu0
  %v1463 = vadd.f32 %v1364, %v1462
  %v1464 = vpop.f32.mrf.mxu0
  %v1465 = vadd.f32 %v1366, %v1464
  %1466 = vmatmul.bf16.gmra.mxu0 %v397
  %v1467 = vpop.f32.mrf.mxu0
  %v1468 = vadd.f32 %v1369, %v1467
  %v1469 = vpop.f32.mrf.mxu0
  %v1470 = vadd.f32 %v1371, %v1469
  %1471 = vmatmul.bf16.gmra.mxu0 %v401
  %v1472 = vpop.f32.mrf.mxu0
  %v1473 = vadd.f32 %v1374, %v1472
  %v1474 = vpop.f32.mrf.mxu0
  %v1475 = vadd.f32 %v1376, %v1474
  %1476 = vmatmul.bf16.gmra.mxu0 %v405
  %v1477 = vpop.f32.mrf.mxu0
  %v1478 = vadd.f32 %v1379, %v1477
  %v1479 = vpop.f32.mrf.mxu0
  %v1480 = vadd.f32 %v1381, %v1479
  %1481 = vmatmul.bf16.gmra.mxu0 %v409
  %v1482 = vpop.f32.mrf.mxu0
  %v1483 = vadd.f32 %v1384, %v1482
  %v1484 = vpop.f32.mrf.mxu0
  %v1485 = vadd.f32 %v1386, %v1484
  %1486 = vmatmul.bf16.gmra.mxu0 %v413
  %v1487 = vpop.f32.mrf.mxu0
  %v1488 = vadd.f32 %v1389, %v1487
  %v1489 = vpop.f32.mrf.mxu0
  %v1490 = vadd.f32 %v1391, %v1489
  %1491 = vmatmul.bf16.gmra.mxu0 %v417
  %v1492 = vpop.f32.mrf.mxu0
  %v1493 = vadd.f32 %v1394, %v1492
  %v1494 = vpop.f32.mrf.mxu0
  %v1495 = vadd.f32 %v1396, %v1494
  %1496 = vmatmul.bf16.gmra.mxu0 %v421
  %v1497 = vpop.f32.mrf.mxu0
  %v1498 = vadd.f32 %v1399, %v1497
  %v1499 = vpop.f32.mrf.mxu0
  %v1500 = vadd.f32 %v1401, %v1499
  %1501 = vmatmul.bf16.gmra.mxu0 %v425
  %v1502 = vpop.f32.mrf.mxu0
  %v1503 = vadd.f32 %v1404, %v1502
  %v1504 = vpop.f32.mrf.mxu0
  %v1505 = vadd.f32 %v1406, %v1504
  %1506 = vmatmul.bf16.gmra.mxu0 %v429
  %v1507 = vpop.f32.mrf.mxu0
  %v1508 = vadd.f32 %v1409, %v1507
  %v1509 = vpop.f32.mrf.mxu0
  %v1510 = vadd.f32 %v1411, %v1509
  %1511 = vmatmul.bf16.gmra.mxu0 %v433
  %v1512 = vpop.f32.mrf.mxu0
  %v1513 = vadd.f32 %v1414, %v1512
  %v1514 = vpop.f32.mrf.mxu0
  %v1515 = vadd.f32 %v1416, %v1514
  %1516 = vmatmul.bf16.gmra.mxu0 %v437
  %v1517 = vpop.f32.mrf.mxu0
  %v1518 = vadd.f32 %v1419, %v1517
  %v1519 = vpop.f32.mrf.mxu0
  %v1520 = vadd.f32 %v1421, %v1519
  %1521 = vmatmul.bf16.gmra.mxu0 %v441
  %v1522 = vpop.f32.mrf.mxu0
  %v1523 = vadd.f32 %v1424, %v1522
  %v1524 = vpop.f32.mrf.mxu0
  %v1525 = vadd.f32 %v1426, %v1524
  %1526 = vmatmul.bf16.gmra.mxu0 %v445
  %v1527 = vpop.f32.mrf.mxu0
  %v1528 = vadd.f32 %v1429, %v1527
  %v1529 = vpop.f32.mrf.mxu0
  %v1530 = vadd.f32 %v1431, %v1529
  %1531 = vdwg.mxu0
  %1532 = vmatpush.bf16.msra.mxu0 %v774
  %1533 = vmatpush.bf16.msra.mxu0 %v772
  %1534 = vmatpush.bf16.msra.mxu0 %v770
  %1535 = vmatpush.bf16.msra.mxu0 %v768
  %1536 = vmatpush.bf16.msra.mxu0 %v766
  %1537 = vmatpush.bf16.msra.mxu0 %v764
  %1538 = vmatpush.bf16.msra.mxu0 %v762
  %1539 = vmatpush.bf16.msra.mxu0 %v760
  %1540 = vmatmul.bf16.gmra.mxu0 %v378
  %v1541 = vpop.f32.mrf.mxu0
  %v1542 = vadd.f32 %v1443, %v1541
  %v1543 = vpop.f32.mrf.mxu0
  %v1544 = vadd.f32 %v1445, %v1543
  %1545 = vmatmul.bf16.gmra.mxu0 %v382
  %v1546 = vpop.f32.mrf.mxu0
  %v1547 = vadd.f32 %v1448, %v1546
  %v1548 = vpop.f32.mrf.mxu0
  %v1549 = vadd.f32 %v1450, %v1548
  %1550 = vmatmul.bf16.gmra.mxu0 %v386
  %v1551 = vpop.f32.mrf.mxu0
  %v1552 = vadd.f32 %v1453, %v1551
  %v1553 = vpop.f32.mrf.mxu0
  %v1554 = vadd.f32 %v1455, %v1553
  %1555 = vmatmul.bf16.gmra.mxu0 %v390
  %v1556 = vpop.f32.mrf.mxu0
  %v1557 = vadd.f32 %v1458, %v1556
  %v1558 = vpop.f32.mrf.mxu0
  %v1559 = vadd.f32 %v1460, %v1558
  %1560 = vmatmul.bf16.gmra.mxu0 %v394
  %v1561 = vpop.f32.mrf.mxu0
  %v1562 = vadd.f32 %v1463, %v1561
  %v1563 = vpop.f32.mrf.mxu0
  %v1564 = vadd.f32 %v1465, %v1563
  %1565 = vmatmul.bf16.gmra.mxu0 %v398
  %v1566 = vpop.f32.mrf.mxu0
  %v1567 = vadd.f32 %v1468, %v1566
  %v1568 = vpop.f32.mrf.mxu0
  %v1569 = vadd.f32 %v1470, %v1568
  %1570 = vmatmul.bf16.gmra.mxu0 %v402
  %v1571 = vpop.f32.mrf.mxu0
  %v1572 = vadd.f32 %v1473, %v1571
  %v1573 = vpop.f32.mrf.mxu0
  %v1574 = vadd.f32 %v1475, %v1573
  %1575 = vmatmul.bf16.gmra.mxu0 %v406
  %v1576 = vpop.f32.mrf.mxu0
  %v1577 = vadd.f32 %v1478, %v1576
  %v1578 = vpop.f32.mrf.mxu0
  %v1579 = vadd.f32 %v1480, %v1578
  %1580 = vmatmul.bf16.gmra.mxu0 %v410
  %v1581 = vpop.f32.mrf.mxu0
  %v1582 = vadd.f32 %v1483, %v1581
  %v1583 = vpop.f32.mrf.mxu0
  %v1584 = vadd.f32 %v1485, %v1583
  %1585 = vmatmul.bf16.gmra.mxu0 %v414
  %v1586 = vpop.f32.mrf.mxu0
  %v1587 = vadd.f32 %v1488, %v1586
  %v1588 = vpop.f32.mrf.mxu0
  %v1589 = vadd.f32 %v1490, %v1588
  %1590 = vmatmul.bf16.gmra.mxu0 %v418
  %v1591 = vpop.f32.mrf.mxu0
  %v1592 = vadd.f32 %v1493, %v1591
  %v1593 = vpop.f32.mrf.mxu0
  %v1594 = vadd.f32 %v1495, %v1593
  %1595 = vmatmul.bf16.gmra.mxu0 %v422
  %v1596 = vpop.f32.mrf.mxu0
  %v1597 = vadd.f32 %v1498, %v1596
  %v1598 = vpop.f32.mrf.mxu0
  %v1599 = vadd.f32 %v1500, %v1598
  %1600 = vmatmul.bf16.gmra.mxu0 %v426
  %v1601 = vpop.f32.mrf.mxu0
  %v1602 = vadd.f32 %v1503, %v1601
  %v1603 = vpop.f32.mrf.mxu0
  %v1604 = vadd.f32 %v1505, %v1603
  %1605 = vmatmul.bf16.gmra.mxu0 %v430
  %v1606 = vpop.f32.mrf.mxu0
  %v1607 = vadd.f32 %v1508, %v1606
  %v1608 = vpop.f32.mrf.mxu0
  %v1609 = vadd.f32 %v1510, %v1608
  %1610 = vmatmul.bf16.gmra.mxu0 %v434
  %v1611 = vpop.f32.mrf.mxu0
  %v1612 = vadd.f32 %v1513, %v1611
  %v1613 = vpop.f32.mrf.mxu0
  %v1614 = vadd.f32 %v1515, %v1613
  %1615 = vmatmul.bf16.gmra.mxu0 %v438
  %v1616 = vpop.f32.mrf.mxu0
  %v1617 = vadd.f32 %v1518, %v1616
  %v1618 = vpop.f32.mrf.mxu0
  %v1619 = vadd.f32 %v1520, %v1618
  %1620 = vmatmul.bf16.gmra.mxu0 %v442
  %v1621 = vpop.f32.mrf.mxu0
  %v1622 = vadd.f32 %v1523, %v1621
  %v1623 = vpop.f32.mrf.mxu0
  %v1624 = vadd.f32 %v1525, %v1623
  %1625 = vmatmul.bf16.gmra.mxu0 %v446
  %v1626 = vpop.f32.mrf.mxu0
  %v1627 = vadd.f32 %v1528, %v1626
  %v1628 = vpop.f32.mrf.mxu0
  %v1629 = vadd.f32 %v1530, %v1628
  %1630 = vdwg.mxu0
  %v1631 = vpack.c.bf16 %v1542, %v1146
  %v1632 = vpack.c.bf16 %v1544, %v1148
  %v1633 = vpack.c.bf16 %v1547, %v1151
  %v1634 = vpack.c.bf16 %v1549, %v1153
  %v1635 = vpack.c.bf16 %v1552, %v1156
  %v1636 = vpack.c.bf16 %v1554, %v1158
  %v1637 = vpack.c.bf16 %v1557, %v1161
  %v1638 = vpack.c.bf16 %v1559, %v1163
  %v1639 = vpack.c.bf16 %v1562, %v1166
  %v1640 = vpack.c.bf16 %v1564, %v1168
  %v1641 = vpack.c.bf16 %v1567, %v1171
  %v1642 = vpack.c.bf16 %v1569, %v1173
  %v1643 = vpack.c.bf16 %v1572, %v1176
  %v1644 = vpack.c.bf16 %v1574, %v1178
  %v1645 = vpack.c.bf16 %v1577, %v1181
  %v1646 = vpack.c.bf16 %v1579, %v1183
  %v1647 = vpack.c.bf16 %v1582, %v1186
  %v1648 = vpack.c.bf16 %v1584, %v1188
  %v1649 = vpack.c.bf16 %v1587, %v1191
  %v1650 = vpack.c.bf16 %v1589, %v1193
  %v1651 = vpack.c.bf16 %v1592, %v1196
  %v1652 = vpack.c.bf16 %v1594, %v1198
  %v1653 = vpack.c.bf16 %v1597, %v1201
  %v1654 = vpack.c.bf16 %v1599, %v1203
  %v1655 = vpack.c.bf16 %v1602, %v1206
  %v1656 = vpack.c.bf16 %v1604, %v1208
  %v1657 = vpack.c.bf16 %v1607, %v1211
  %v1658 = vpack.c.bf16 %v1609, %v1213
  %v1659 = vpack.c.bf16 %v1612, %v1216
  %v1660 = vpack.c.bf16 %v1614, %v1218
  %v1661 = vpack.c.bf16 %v1617, %v1221
  %v1662 = vpack.c.bf16 %v1619, %v1223
  %v1663 = vpack.c.bf16 %v1622, %v1226
  %v1664 = vpack.c.bf16 %v1624, %v1228
  %v1665 = vpack.c.bf16 %v1627, %v1231
  %v1666 = vpack.c.bf16 %v1629, %v1233
  %1667 = vst [vmem:[#allocation2] sm:$0xff] %v1631
  %1668 = vst [vmem:[#allocation2 + $0x8] sm:$0xff] %v1632
  %1669 = vst [vmem:[#allocation2 + $0x10] sm:$0xff] %v1633
  %1670 = vst [vmem:[#allocation2 + $0x18] sm:$0xff] %v1634
  %1671 = vst [vmem:[#allocation2 + $0x20] sm:$0xff] %v1635
  %1672 = vst [vmem:[#allocation2 + $0x28] sm:$0xff] %v1636
  %1673 = vst [vmem:[#allocation2 + $0x30] sm:$0xff] %v1637
  %1674 = vst [vmem:[#allocation2 + $0x38] sm:$0xff] %v1638
  %1675 = vst [vmem:[#allocation2 + $0x40] sm:$0xff] %v1639
  %1676 = vst [vmem:[#allocation2 + $0x48] sm:$0xff] %v1640
  %1677 = vst [vmem:[#allocation2 + $0x50] sm:$0xff] %v1641
  %1678 = vst [vmem:[#allocation2 + $0x58] sm:$0xff] %v1642
  %1679 = vst [vmem:[#allocation2 + $0x60] sm:$0xff] %v1643
  %1680 = vst [vmem:[#allocation2 + $0x68] sm:$0xff] %v1644
  %1681 = vst [vmem:[#allocation2 + $0x70] sm:$0xff] %v1645
  %1682 = vst [vmem:[#allocation2 + $0x78] sm:$0xff] %v1646
  %1683 = vst [vmem:[#allocation2 + $0x80] sm:$0xff] %v1647
  %1684 = vst [vmem:[#allocation2 + $0x88] sm:$0xff] %v1648
  %1685 = vst [vmem:[#allocation2 + $0x90] sm:$0xff] %v1649
  %1686 = vst [vmem:[#allocation2 + $0x98] sm:$0xff] %v1650
  %1687 = vst [vmem:[#allocation2 + $0xa0] sm:$0xff] %v1651
  %1688 = vst [vmem:[#allocation2 + $0xa8] sm:$0xff] %v1652
  %1689 = vst [vmem:[#allocation2 + $0xb0] sm:$0xff] %v1653
  %1690 = vst [vmem:[#allocation2 + $0xb8] sm:$0xff] %v1654
  %1691 = vst [vmem:[#allocation2 + $0xc0] sm:$0xff] %v1655
  %1692 = vst [vmem:[#allocation2 + $0xc8] sm:$0xff] %v1656
  %1693 = vst [vmem:[#allocation2 + $0xd0] sm:$0xff] %v1657
  %1694 = vst [vmem:[#allocation2 + $0xd8] sm:$0xff] %v1658
  %1695 = vst [vmem:[#allocation2 + $0xe0] sm:$0xff] %v1659
  %1696 = vst [vmem:[#allocation2 + $0xe8] sm:$0xff] %v1660
  %1697 = vst [vmem:[#allocation2 + $0xf0] sm:$0xff] %v1661
  %1698 = vst [vmem:[#allocation2 + $0xf8] sm:$0xff] %v1662
  %1699 = vst [vmem:[#allocation2 + $0x100] sm:$0xff] %v1663
  %1700 = vst [vmem:[#allocation2 + $0x108] sm:$0xff] %v1664
  %1701 = vst [vmem:[#allocation2 + $0x110] sm:$0xff] %v1665
  %1702 = vst [vmem:[#allocation2 + $0x118] sm:$0xff] %v1666
  %v1703 = vld [vmem:[#allocation2] sm:$0xff]
  %v1704 = vld [vmem:[#allocation2 + $0x8] sm:$0xff]
  %v1705 = vld [vmem:[#allocation2 + $0x10] sm:$0xff]
  %v1706 = vld [vmem:[#allocation2 + $0x18] sm:$0xff]
  %v1707 = vld [vmem:[%s2] sm:$0xf]
  %v1708 = vld [vmem:[%s2 + $0x4] sm:$0xf]
  %v1709 = vld [vmem:[%s2 + $0x8] sm:$0xf]
  %v1710 = vld [vmem:[%s2 + $0xc] sm:$0xf]
  %v1711 = vld [vmem:[%s2 + $0x10] sm:$0xf]
  %v1712 = vld [vmem:[%s2 + $0x14] sm:$0xf]
  %v1713 = vld [vmem:[%s2 + $0x18] sm:$0xf]
  %v1714 = vld [vmem:[%s2 + $0x1c] sm:$0xf]
  %v1715 = vld [vmem:[%s2 + $0x20] sm:$0xf]
  %v1716 = vld [vmem:[%s2 + $0x24] sm:$0xf]
  %v1717 = vld [vmem:[%s2 + $0x28] sm:$0xf]
  %v1718 = vld [vmem:[%s2 + $0x2c] sm:$0xf]
  %v1719 = vld [vmem:[%s2 + $0x30] sm:$0xf]
  %v1720 = vld [vmem:[%s2 + $0x34] sm:$0xf]
  %v1721 = vld [vmem:[%s2 + $0x38] sm:$0xf]
  %v1722 = vld [vmem:[%s2 + $0x3c] sm:$0xf]
  %v1723 = vld [vmem:[%s2 + $0x40] sm:$0xf]
  %v1724 = vld [vmem:[%s2 + $0x44] sm:$0xf]
  %v1725 = vld [vmem:[%s2 + $0x48] sm:$0xf]
  %v1726 = vld [vmem:[%s2 + $0x4c] sm:$0xf]
  %v1727 = vld [vmem:[%s2 + $0x50] sm:$0xf]
  %v1728 = vld [vmem:[%s2 + $0x54] sm:$0xf]
  %v1729 = vld [vmem:[%s2 + $0x58] sm:$0xf]
  %v1730 = vld [vmem:[%s2 + $0x5c] sm:$0xf]
  %v1731 = vld [vmem:[%s2 + $0x60] sm:$0xf]
  %v1732 = vld [vmem:[%s2 + $0x64] sm:$0xf]
  %v1733 = vld [vmem:[%s2 + $0x68] sm:$0xf]
  %v1734 = vld [vmem:[%s2 + $0x6c] sm:$0xf]
  %v1735 = vld [vmem:[%s2 + $0x70] sm:$0xf]
  %v1736 = vld [vmem:[%s2 + $0x74] sm:$0xf]
  %v1737 = vld [vmem:[%s2 + $0x78] sm:$0xf]
  %v1738 = vld [vmem:[%s2 + $0x7c] sm:$0xf]
  %v1739 = vld [vmem:[#allocation2 + $0x20] sm:$0xff]
  %v1740 = vld [vmem:[#allocation2 + $0x28] sm:$0xff]
  %v1741 = vld [vmem:[#allocation2 + $0x30] sm:$0xff]
  %v1742 = vld [vmem:[#allocation2 + $0x38] sm:$0xff]
  %s1743 = scalar_lea.vmem %s2, 128
  %v1744 = vld [vmem:[%s1743] sm:$0xf]
  %v1745 = vld [vmem:[%s1743 + $0x4] sm:$0xf]
  %v1746 = vld [vmem:[%s1743 + $0x8] sm:$0xf]
  %v1747 = vld [vmem:[%s1743 + $0xc] sm:$0xf]
  %v1748 = vld [vmem:[%s1743 + $0x10] sm:$0xf]
  %v1749 = vld [vmem:[%s1743 + $0x14] sm:$0xf]
  %v1750 = vld [vmem:[%s1743 + $0x18] sm:$0xf]
  %v1751 = vld [vmem:[%s1743 + $0x1c] sm:$0xf]
  %v1752 = vld [vmem:[%s1743 + $0x20] sm:$0xf]
  %v1753 = vld [vmem:[%s1743 + $0x24] sm:$0xf]
  %v1754 = vld [vmem:[%s1743 + $0x28] sm:$0xf]
  %v1755 = vld [vmem:[%s1743 + $0x2c] sm:$0xf]
  %v1756 = vld [vmem:[%s1743 + $0x30] sm:$0xf]
  %v1757 = vld [vmem:[%s1743 + $0x34] sm:$0xf]
  %v1758 = vld [vmem:[%s1743 + $0x38] sm:$0xf]
  %v1759 = vld [vmem:[%s1743 + $0x3c] sm:$0xf]
  %v1760 = vld [vmem:[%s1743 + $0x40] sm:$0xf]
  %v1761 = vld [vmem:[%s1743 + $0x44] sm:$0xf]
  %v1762 = vld [vmem:[%s1743 + $0x48] sm:$0xf]
  %v1763 = vld [vmem:[%s1743 + $0x4c] sm:$0xf]
  %v1764 = vld [vmem:[%s1743 + $0x50] sm:$0xf]
  %v1765 = vld [vmem:[%s1743 + $0x54] sm:$0xf]
  %v1766 = vld [vmem:[%s1743 + $0x58] sm:$0xf]
  %v1767 = vld [vmem:[%s1743 + $0x5c] sm:$0xf]
  %v1768 = vld [vmem:[%s1743 + $0x60] sm:$0xf]
  %v1769 = vld [vmem:[%s1743 + $0x64] sm:$0xf]
  %v1770 = vld [vmem:[%s1743 + $0x68] sm:$0xf]
  %v1771 = vld [vmem:[%s1743 + $0x6c] sm:$0xf]
  %v1772 = vld [vmem:[%s1743 + $0x70] sm:$0xf]
  %v1773 = vld [vmem:[%s1743 + $0x74] sm:$0xf]
  %v1774 = vld [vmem:[%s1743 + $0x78] sm:$0xf]
  %v1775 = vld [vmem:[%s1743 + $0x7c] sm:$0xf]
  %v1780 = vunpack.c.l.b16 %v1739
  %v1781 = vunpack.c.h.b16 %v1739
  %v1782 = vunpack.c.l.b16 %v1740
  %v1783 = vunpack.c.h.b16 %v1740
  %v1784 = vunpack.c.l.b16 %v1741
  %v1785 = vunpack.c.h.b16 %v1741
  %v1786 = vunpack.c.l.b16 %v1742
  %v1787 = vunpack.c.h.b16 %v1742
  %v1788 = vpack.c.b16 %v1782, %v1780
  %v1789 = vpack.c.b16 %v1783, %v1781
  %v1790 = vpack.c.b16 %v1786, %v1784
  %v1791 = vpack.c.b16 %v1787, %v1785
  %v1828 = vunpack.c.l.b16 %v1744
  %v1829 = vunpack.c.l.b16 %v1745
  %v1830 = vunpack.c.l.b16 %v1746
  %v1831 = vunpack.c.l.b16 %v1747
  %v1832 = vunpack.c.l.b16 %v1748
  %v1833 = vunpack.c.l.b16 %v1749
  %v1834 = vunpack.c.l.b16 %v1750
  %v1835 = vunpack.c.l.b16 %v1751
  %v1836 = vunpack.c.l.b16 %v1752
  %v1837 = vunpack.c.l.b16 %v1753
  %v1838 = vunpack.c.l.b16 %v1754
  %v1839 = vunpack.c.l.b16 %v1755
  %v1840 = vunpack.c.l.b16 %v1756
  %v1841 = vunpack.c.l.b16 %v1757
  %v1842 = vunpack.c.l.b16 %v1758
  %v1843 = vunpack.c.l.b16 %v1759
  %v1844 = vunpack.c.l.b16 %v1760
  %v1845 = vunpack.c.l.b16 %v1761
  %v1846 = vunpack.c.l.b16 %v1762
  %v1847 = vunpack.c.l.b16 %v1763
  %v1848 = vunpack.c.l.b16 %v1764
  %v1849 = vunpack.c.l.b16 %v1765
  %v1850 = vunpack.c.l.b16 %v1766
  %v1851 = vunpack.c.l.b16 %v1767
  %v1852 = vunpack.c.l.b16 %v1768
  %v1853 = vunpack.c.l.b16 %v1769
  %v1854 = vunpack.c.l.b16 %v1770
  %v1855 = vunpack.c.l.b16 %v1771
  %v1856 = vunpack.c.l.b16 %v1772
  %v1857 = vunpack.c.l.b16 %v1773
  %v1858 = vunpack.c.l.b16 %v1774
  %v1859 = vunpack.c.l.b16 %v1775
  %v1860 = vpack.c.b16 %v1829, %v1828
  %v1861 = vpack.c.b16 %v1831, %v1830
  %v1862 = vpack.c.b16 %v1833, %v1832
  %v1863 = vpack.c.b16 %v1835, %v1834
  %v1864 = vpack.c.b16 %v1837, %v1836
  %v1865 = vpack.c.b16 %v1839, %v1838
  %v1866 = vpack.c.b16 %v1841, %v1840
  %v1867 = vpack.c.b16 %v1843, %v1842
  %v1868 = vpack.c.b16 %v1845, %v1844
  %v1869 = vpack.c.b16 %v1847, %v1846
  %v1870 = vpack.c.b16 %v1849, %v1848
  %v1871 = vpack.c.b16 %v1851, %v1850
  %v1872 = vpack.c.b16 %v1853, %v1852
  %v1873 = vpack.c.b16 %v1855, %v1854
  %v1874 = vpack.c.b16 %v1857, %v1856
  %v1875 = vpack.c.b16 %v1859, %v1858
  %1892 = vmatpush.bf16.msra.mxu0 %v1867
  %1893 = vmatpush.bf16.msra.mxu0 %v1866
  %1894 = vmatpush.bf16.msra.mxu0 %v1865
  %1895 = vmatpush.bf16.msra.mxu0 %v1864
  %1896 = vmatpush.bf16.msra.mxu0 %v1863
  %1897 = vmatpush.bf16.msra.mxu0 %v1862
  %1898 = vmatpush.bf16.msra.mxu0 %v1861
  %1899 = vmatpush.bf16.msra.mxu0 %v1860
  %1900 = vmatmul.bf16.gmra.mxu0 %v1788
  %v1901 = vpop.f32.mrf.mxu0
  %v1902 = vadd.f32 0.0, %v1901
  %v1903 = vpop.f32.mrf.mxu0
  %v1904 = vadd.f32 0.0, %v1903
  %1905 = vmatmul.bf16.gmra.mxu0 %v1790
  %v1906 = vpop.f32.mrf.mxu0
  %v1907 = vadd.f32 0.0, %v1906
  %v1908 = vpop.f32.mrf.mxu0
  %v1909 = vadd.f32 0.0, %v1908
  %1910 = vdwg.mxu0
  %1911 = vmatpush.bf16.msra.mxu0 %v1875
  %1912 = vmatpush.bf16.msra.mxu0 %v1874
  %1913 = vmatpush.bf16.msra.mxu0 %v1873
  %1914 = vmatpush.bf16.msra.mxu0 %v1872
  %1915 = vmatpush.bf16.msra.mxu0 %v1871
  %1916 = vmatpush.bf16.msra.mxu0 %v1870
  %1917 = vmatpush.bf16.msra.mxu0 %v1869
  %1918 = vmatpush.bf16.msra.mxu0 %v1868
  %1919 = vmatmul.bf16.gmra.mxu0 %v1789
  %v1920 = vpop.f32.mrf.mxu0
  %v1921 = vadd.f32 %v1902, %v1920
  %v1922 = vpop.f32.mrf.mxu0
  %v1923 = vadd.f32 %v1904, %v1922
  %1924 = vmatmul.bf16.gmra.mxu0 %v1791
  %v1925 = vpop.f32.mrf.mxu0
  %v1926 = vadd.f32 %v1907, %v1925
  %v1927 = vpop.f32.mrf.mxu0
  %v1928 = vadd.f32 %v1909, %v1927
  %1929 = vdwg.mxu0
  %v1934 = vunpack.c.l.b16 %v1703
  %v1935 = vunpack.c.h.b16 %v1703
  %v1936 = vunpack.c.l.b16 %v1704
  %v1937 = vunpack.c.h.b16 %v1704
  %v1938 = vunpack.c.l.b16 %v1705
  %v1939 = vunpack.c.h.b16 %v1705
  %v1940 = vunpack.c.l.b16 %v1706
  %v1941 = vunpack.c.h.b16 %v1706
  %v1942 = vpack.c.b16 %v1936, %v1934
  %v1943 = vpack.c.b16 %v1937, %v1935
  %v1944 = vpack.c.b16 %v1940, %v1938
  %v1945 = vpack.c.b16 %v1941, %v1939
  %v1982 = vunpack.c.l.b16 %v1707
  %v1983 = vunpack.c.l.b16 %v1708
  %v1984 = vunpack.c.l.b16 %v1709
  %v1985 = vunpack.c.l.b16 %v1710
  %v1986 = vunpack.c.l.b16 %v1711
  %v1987 = vunpack.c.l.b16 %v1712
  %v1988 = vunpack.c.l.b16 %v1713
  %v1989 = vunpack.c.l.b16 %v1714
  %v1990 = vunpack.c.l.b16 %v1715
  %v1991 = vunpack.c.l.b16 %v1716
  %v1992 = vunpack.c.l.b16 %v1717
  %v1993 = vunpack.c.l.b16 %v1718
  %v1994 = vunpack.c.l.b16 %v1719
  %v1995 = vunpack.c.l.b16 %v1720
  %v1996 = vunpack.c.l.b16 %v1721
  %v1997 = vunpack.c.l.b16 %v1722
  %v1998 = vunpack.c.l.b16 %v1723
  %v1999 = vunpack.c.l.b16 %v1724
  %v2000 = vunpack.c.l.b16 %v1725
  %v2001 = vunpack.c.l.b16 %v1726
  %v2002 = vunpack.c.l.b16 %v1727
  %v2003 = vunpack.c.l.b16 %v1728
  %v2004 = vunpack.c.l.b16 %v1729
  %v2005 = vunpack.c.l.b16 %v1730
  %v2006 = vunpack.c.l.b16 %v1731
  %v2007 = vunpack.c.l.b16 %v1732
  %v2008 = vunpack.c.l.b16 %v1733
  %v2009 = vunpack.c.l.b16 %v1734
  %v2010 = vunpack.c.l.b16 %v1735
  %v2011 = vunpack.c.l.b16 %v1736
  %v2012 = vunpack.c.l.b16 %v1737
  %v2013 = vunpack.c.l.b16 %v1738
  %v2014 = vpack.c.b16 %v1983, %v1982
  %v2015 = vpack.c.b16 %v1985, %v1984
  %v2016 = vpack.c.b16 %v1987, %v1986
  %v2017 = vpack.c.b16 %v1989, %v1988
  %v2018 = vpack.c.b16 %v1991, %v1990
  %v2019 = vpack.c.b16 %v1993, %v1992
  %v2020 = vpack.c.b16 %v1995, %v1994
  %v2021 = vpack.c.b16 %v1997, %v1996
  %v2022 = vpack.c.b16 %v1999, %v1998
  %v2023 = vpack.c.b16 %v2001, %v2000
  %v2024 = vpack.c.b16 %v2003, %v2002
  %v2025 = vpack.c.b16 %v2005, %v2004
  %v2026 = vpack.c.b16 %v2007, %v2006
  %v2027 = vpack.c.b16 %v2009, %v2008
  %v2028 = vpack.c.b16 %v2011, %v2010
  %v2029 = vpack.c.b16 %v2013, %v2012
  %2046 = vmatpush.bf16.msra.mxu0 %v2021
  %2047 = vmatpush.bf16.msra.mxu0 %v2020
  %2048 = vmatpush.bf16.msra.mxu0 %v2019
  %2049 = vmatpush.bf16.msra.mxu0 %v2018
  %2050 = vmatpush.bf16.msra.mxu0 %v2017
  %2051 = vmatpush.bf16.msra.mxu0 %v2016
  %2052 = vmatpush.bf16.msra.mxu0 %v2015
  %2053 = vmatpush.bf16.msra.mxu0 %v2014
  %2054 = vmatmul.bf16.gmra.mxu0 %v1942
  %v2055 = vpop.f32.mrf.mxu0
  %v2056 = vadd.f32 %v1921, %v2055
  %v2057 = vpop.f32.mrf.mxu0
  %v2058 = vadd.f32 %v1923, %v2057
  %2059 = vmatmul.bf16.gmra.mxu0 %v1944
  %v2060 = vpop.f32.mrf.mxu0
  %v2061 = vadd.f32 %v1926, %v2060
  %v2062 = vpop.f32.mrf.mxu0
  %v2063 = vadd.f32 %v1928, %v2062
  %2064 = vdwg.mxu0
  %2065 = vmatpush.bf16.msra.mxu0 %v2029
  %2066 = vmatpush.bf16.msra.mxu0 %v2028
  %2067 = vmatpush.bf16.msra.mxu0 %v2027
  %2068 = vmatpush.bf16.msra.mxu0 %v2026
  %2069 = vmatpush.bf16.msra.mxu0 %v2025
  %2070 = vmatpush.bf16.msra.mxu0 %v2024
  %2071 = vmatpush.bf16.msra.mxu0 %v2023
  %2072 = vmatpush.bf16.msra.mxu0 %v2022
  %2073 = vmatmul.bf16.gmra.mxu0 %v1943
  %v2074 = vpop.f32.mrf.mxu0
  %v2075 = vadd.f32 %v2056, %v2074
  %v2076 = vpop.f32.mrf.mxu0
  %v2077 = vadd.f32 %v2058, %v2076
  %2078 = vmatmul.bf16.gmra.mxu0 %v1945
  %v2079 = vpop.f32.mrf.mxu0
  %v2080 = vadd.f32 %v2061, %v2079
  %v2081 = vpop.f32.mrf.mxu0
  %v2082 = vadd.f32 %v2063, %v2081
  %2083 = vdwg.mxu0
  %v2084 = vld [vmem:[#allocation2 + $0x40] sm:$0xff]
  %v2085 = vld [vmem:[#allocation2 + $0x48] sm:$0xff]
  %v2086 = vld [vmem:[#allocation2 + $0x50] sm:$0xff]
  %v2087 = vld [vmem:[#allocation2 + $0x58] sm:$0xff]
  %s2088 = scalar_lea.vmem %s2, 256
  %v2089 = vld [vmem:[%s2088] sm:$0xf]
  %v2090 = vld [vmem:[%s2088 + $0x4] sm:$0xf]
  %v2091 = vld [vmem:[%s2088 + $0x8] sm:$0xf]
  %v2092 = vld [vmem:[%s2088 + $0xc] sm:$0xf]
  %v2093 = vld [vmem:[%s2088 + $0x10] sm:$0xf]
  %v2094 = vld [vmem:[%s2088 + $0x14] sm:$0xf]
  %v2095 = vld [vmem:[%s2088 + $0x18] sm:$0xf]
  %v2096 = vld [vmem:[%s2088 + $0x1c] sm:$0xf]
  %v2097 = vld [vmem:[%s2088 + $0x20] sm:$0xf]
  %v2098 = vld [vmem:[%s2088 + $0x24] sm:$0xf]
  %v2099 = vld [vmem:[%s2088 + $0x28] sm:$0xf]
  %v2100 = vld [vmem:[%s2088 + $0x2c] sm:$0xf]
  %v2101 = vld [vmem:[%s2088 + $0x30] sm:$0xf]
  %v2102 = vld [vmem:[%s2088 + $0x34] sm:$0xf]
  %v2103 = vld [vmem:[%s2088 + $0x38] sm:$0xf]
  %v2104 = vld [vmem:[%s2088 + $0x3c] sm:$0xf]
  %v2105 = vld [vmem:[%s2088 + $0x40] sm:$0xf]
  %v2106 = vld [vmem:[%s2088 + $0x44] sm:$0xf]
  %v2107 = vld [vmem:[%s2088 + $0x48] sm:$0xf]
  %v2108 = vld [vmem:[%s2088 + $0x4c] sm:$0xf]
  %v2109 = vld [vmem:[%s2088 + $0x50] sm:$0xf]
  %v2110 = vld [vmem:[%s2088 + $0x54] sm:$0xf]
  %v2111 = vld [vmem:[%s2088 + $0x58] sm:$0xf]
  %v2112 = vld [vmem:[%s2088 + $0x5c] sm:$0xf]
  %v2113 = vld [vmem:[%s2088 + $0x60] sm:$0xf]
  %v2114 = vld [vmem:[%s2088 + $0x64] sm:$0xf]
  %v2115 = vld [vmem:[%s2088 + $0x68] sm:$0xf]
  %v2116 = vld [vmem:[%s2088 + $0x6c] sm:$0xf]
  %v2117 = vld [vmem:[%s2088 + $0x70] sm:$0xf]
  %v2118 = vld [vmem:[%s2088 + $0x74] sm:$0xf]
  %v2119 = vld [vmem:[%s2088 + $0x78] sm:$0xf]
  %v2120 = vld [vmem:[%s2088 + $0x7c] sm:$0xf]
  %v2125 = vunpack.c.l.b16 %v2084
  %v2126 = vunpack.c.h.b16 %v2084
  %v2127 = vunpack.c.l.b16 %v2085
  %v2128 = vunpack.c.h.b16 %v2085
  %v2129 = vunpack.c.l.b16 %v2086
  %v2130 = vunpack.c.h.b16 %v2086
  %v2131 = vunpack.c.l.b16 %v2087
  %v2132 = vunpack.c.h.b16 %v2087
  %v2133 = vpack.c.b16 %v2127, %v2125
  %v2134 = vpack.c.b16 %v2128, %v2126
  %v2135 = vpack.c.b16 %v2131, %v2129
  %v2136 = vpack.c.b16 %v2132, %v2130
  %v2173 = vunpack.c.l.b16 %v2089
  %v2174 = vunpack.c.l.b16 %v2090
  %v2175 = vunpack.c.l.b16 %v2091
  %v2176 = vunpack.c.l.b16 %v2092
  %v2177 = vunpack.c.l.b16 %v2093
  %v2178 = vunpack.c.l.b16 %v2094
  %v2179 = vunpack.c.l.b16 %v2095
  %v2180 = vunpack.c.l.b16 %v2096
  %v2181 = vunpack.c.l.b16 %v2097
  %v2182 = vunpack.c.l.b16 %v2098
  %v2183 = vunpack.c.l.b16 %v2099
  %v2184 = vunpack.c.l.b16 %v2100
  %v2185 = vunpack.c.l.b16 %v2101
  %v2186 = vunpack.c.l.b16 %v2102
  %v2187 = vunpack.c.l.b16 %v2103
  %v2188 = vunpack.c.l.b16 %v2104
  %v2189 = vunpack.c.l.b16 %v2105
  %v2190 = vunpack.c.l.b16 %v2106
  %v2191 = vunpack.c.l.b16 %v2107
  %v2192 = vunpack.c.l.b16 %v2108
  %v2193 = vunpack.c.l.b16 %v2109
  %v2194 = vunpack.c.l.b16 %v2110
  %v2195 = vunpack.c.l.b16 %v2111
  %v2196 = vunpack.c.l.b16 %v2112
  %v2197 = vunpack.c.l.b16 %v2113
  %v2198 = vunpack.c.l.b16 %v2114
  %v2199 = vunpack.c.l.b16 %v2115
  %v2200 = vunpack.c.l.b16 %v2116
  %v2201 = vunpack.c.l.b16 %v2117
  %v2202 = vunpack.c.l.b16 %v2118
  %v2203 = vunpack.c.l.b16 %v2119
  %v2204 = vunpack.c.l.b16 %v2120
  %v2205 = vpack.c.b16 %v2174, %v2173
  %v2206 = vpack.c.b16 %v2176, %v2175
  %v2207 = vpack.c.b16 %v2178, %v2177
  %v2208 = vpack.c.b16 %v2180, %v2179
  %v2209 = vpack.c.b16 %v2182, %v2181
  %v2210 = vpack.c.b16 %v2184, %v2183
  %v2211 = vpack.c.b16 %v2186, %v2185
  %v2212 = vpack.c.b16 %v2188, %v2187
  %v2213 = vpack.c.b16 %v2190, %v2189
  %v2214 = vpack.c.b16 %v2192, %v2191
  %v2215 = vpack.c.b16 %v2194, %v2193
  %v2216 = vpack.c.b16 %v2196, %v2195
  %v2217 = vpack.c.b16 %v2198, %v2197
  %v2218 = vpack.c.b16 %v2200, %v2199
  %v2219 = vpack.c.b16 %v2202, %v2201
  %v2220 = vpack.c.b16 %v2204, %v2203
  %2237 = vmatpush.bf16.msra.mxu0 %v2212
  %2238 = vmatpush.bf16.msra.mxu0 %v2211
  %2239 = vmatpush.bf16.msra.mxu0 %v2210
  %2240 = vmatpush.bf16.msra.mxu0 %v2209
  %2241 = vmatpush.bf16.msra.mxu0 %v2208
  %2242 = vmatpush.bf16.msra.mxu0 %v2207
  %2243 = vmatpush.bf16.msra.mxu0 %v2206
  %2244 = vmatpush.bf16.msra.mxu0 %v2205
  %2245 = vmatmul.bf16.gmra.mxu0 %v2133
  %v2246 = vpop.f32.mrf.mxu0
  %v2247 = vadd.f32 0.0, %v2246
  %v2248 = vpop.f32.mrf.mxu0
  %v2249 = vadd.f32 0.0, %v2248
  %2250 = vmatmul.bf16.gmra.mxu0 %v2135
  %v2251 = vpop.f32.mrf.mxu0
  %v2252 = vadd.f32 0.0, %v2251
  %v2253 = vpop.f32.mrf.mxu0
  %v2254 = vadd.f32 0.0, %v2253
  %2255 = vdwg.mxu0
  %2256 = vmatpush.bf16.msra.mxu0 %v2220
  %2257 = vmatpush.bf16.msra.mxu0 %v2219
  %2258 = vmatpush.bf16.msra.mxu0 %v2218
  %2259 = vmatpush.bf16.msra.mxu0 %v2217
  %2260 = vmatpush.bf16.msra.mxu0 %v2216
  %2261 = vmatpush.bf16.msra.mxu0 %v2215
  %2262 = vmatpush.bf16.msra.mxu0 %v2214
  %2263 = vmatpush.bf16.msra.mxu0 %v2213
  %2264 = vmatmul.bf16.gmra.mxu0 %v2134
  %v2265 = vpop.f32.mrf.mxu0
  %v2266 = vadd.f32 %v2247, %v2265
  %v2267 = vpop.f32.mrf.mxu0
  %v2268 = vadd.f32 %v2249, %v2267
  %2269 = vmatmul.bf16.gmra.mxu0 %v2136
  %v2270 = vpop.f32.mrf.mxu0
  %v2271 = vadd.f32 %v2252, %v2270
  %v2272 = vpop.f32.mrf.mxu0
  %v2273 = vadd.f32 %v2254, %v2272
  %2274 = vdwg.mxu0
  %v2275 = vadd.f32 %v2075, %v2266
  %v2276 = vadd.f32 %v2077, %v2268
  %v2277 = vadd.f32 %v2080, %v2271
  %v2278 = vadd.f32 %v2082, %v2273
  %v2279 = vld [vmem:[#allocation2 + $0x60] sm:$0xff]
  %v2280 = vld [vmem:[#allocation2 + $0x68] sm:$0xff]
  %v2281 = vld [vmem:[#allocation2 + $0x70] sm:$0xff]
  %v2282 = vld [vmem:[#allocation2 + $0x78] sm:$0xff]
  %s2283 = scalar_lea.vmem %s2, 384
  %v2284 = vld [vmem:[%s2283] sm:$0xf]
  %v2285 = vld [vmem:[%s2283 + $0x4] sm:$0xf]
  %v2286 = vld [vmem:[%s2283 + $0x8] sm:$0xf]
  %v2287 = vld [vmem:[%s2283 + $0xc] sm:$0xf]
  %v2288 = vld [vmem:[%s2283 + $0x10] sm:$0xf]
  %v2289 = vld [vmem:[%s2283 + $0x14] sm:$0xf]
  %v2290 = vld [vmem:[%s2283 + $0x18] sm:$0xf]
  %v2291 = vld [vmem:[%s2283 + $0x1c] sm:$0xf]
  %v2292 = vld [vmem:[%s2283 + $0x20] sm:$0xf]
  %v2293 = vld [vmem:[%s2283 + $0x24] sm:$0xf]
  %v2294 = vld [vmem:[%s2283 + $0x28] sm:$0xf]
  %v2295 = vld [vmem:[%s2283 + $0x2c] sm:$0xf]
  %v2296 = vld [vmem:[%s2283 + $0x30] sm:$0xf]
  %v2297 = vld [vmem:[%s2283 + $0x34] sm:$0xf]
  %v2298 = vld [vmem:[%s2283 + $0x38] sm:$0xf]
  %v2299 = vld [vmem:[%s2283 + $0x3c] sm:$0xf]
  %v2300 = vld [vmem:[%s2283 + $0x40] sm:$0xf]
  %v2301 = vld [vmem:[%s2283 + $0x44] sm:$0xf]
  %v2302 = vld [vmem:[%s2283 + $0x48] sm:$0xf]
  %v2303 = vld [vmem:[%s2283 + $0x4c] sm:$0xf]
  %v2304 = vld [vmem:[%s2283 + $0x50] sm:$0xf]
  %v2305 = vld [vmem:[%s2283 + $0x54] sm:$0xf]
  %v2306 = vld [vmem:[%s2283 + $0x58] sm:$0xf]
  %v2307 = vld [vmem:[%s2283 + $0x5c] sm:$0xf]
  %v2308 = vld [vmem:[%s2283 + $0x60] sm:$0xf]
  %v2309 = vld [vmem:[%s2283 + $0x64] sm:$0xf]
  %v2310 = vld [vmem:[%s2283 + $0x68] sm:$0xf]
  %v2311 = vld [vmem:[%s2283 + $0x6c] sm:$0xf]
  %v2312 = vld [vmem:[%s2283 + $0x70] sm:$0xf]
  %v2313 = vld [vmem:[%s2283 + $0x74] sm:$0xf]
  %v2314 = vld [vmem:[%s2283 + $0x78] sm:$0xf]
  %v2315 = vld [vmem:[%s2283 + $0x7c] sm:$0xf]
  %v2320 = vunpack.c.l.b16 %v2279
  %v2321 = vunpack.c.h.b16 %v2279
  %v2322 = vunpack.c.l.b16 %v2280
  %v2323 = vunpack.c.h.b16 %v2280
  %v2324 = vunpack.c.l.b16 %v2281
  %v2325 = vunpack.c.h.b16 %v2281
  %v2326 = vunpack.c.l.b16 %v2282
  %v2327 = vunpack.c.h.b16 %v2282
  %v2328 = vpack.c.b16 %v2322, %v2320
  %v2329 = vpack.c.b16 %v2323, %v2321
  %v2330 = vpack.c.b16 %v2326, %v2324
  %v2331 = vpack.c.b16 %v2327, %v2325
  %v2368 = vunpack.c.l.b16 %v2284
  %v2369 = vunpack.c.l.b16 %v2285
  %v2370 = vunpack.c.l.b16 %v2286
  %v2371 = vunpack.c.l.b16 %v2287
  %v2372 = vunpack.c.l.b16 %v2288
  %v2373 = vunpack.c.l.b16 %v2289
  %v2374 = vunpack.c.l.b16 %v2290
  %v2375 = vunpack.c.l.b16 %v2291
  %v2376 = vunpack.c.l.b16 %v2292
  %v2377 = vunpack.c.l.b16 %v2293
  %v2378 = vunpack.c.l.b16 %v2294
  %v2379 = vunpack.c.l.b16 %v2295
  %v2380 = vunpack.c.l.b16 %v2296
  %v2381 = vunpack.c.l.b16 %v2297
  %v2382 = vunpack.c.l.b16 %v2298
  %v2383 = vunpack.c.l.b16 %v2299
  %v2384 = vunpack.c.l.b16 %v2300
  %v2385 = vunpack.c.l.b16 %v2301
  %v2386 = vunpack.c.l.b16 %v2302
  %v2387 = vunpack.c.l.b16 %v2303
  %v2388 = vunpack.c.l.b16 %v2304
  %v2389 = vunpack.c.l.b16 %v2305
  %v2390 = vunpack.c.l.b16 %v2306
  %v2391 = vunpack.c.l.b16 %v2307
  %v2392 = vunpack.c.l.b16 %v2308
  %v2393 = vunpack.c.l.b16 %v2309
  %v2394 = vunpack.c.l.b16 %v2310
  %v2395 = vunpack.c.l.b16 %v2311
  %v2396 = vunpack.c.l.b16 %v2312
  %v2397 = vunpack.c.l.b16 %v2313
  %v2398 = vunpack.c.l.b16 %v2314
  %v2399 = vunpack.c.l.b16 %v2315
  %v2400 = vpack.c.b16 %v2369, %v2368
  %v2401 = vpack.c.b16 %v2371, %v2370
  %v2402 = vpack.c.b16 %v2373, %v2372
  %v2403 = vpack.c.b16 %v2375, %v2374
  %v2404 = vpack.c.b16 %v2377, %v2376
  %v2405 = vpack.c.b16 %v2379, %v2378
  %v2406 = vpack.c.b16 %v2381, %v2380
  %v2407 = vpack.c.b16 %v2383, %v2382
  %v2408 = vpack.c.b16 %v2385, %v2384
  %v2409 = vpack.c.b16 %v2387, %v2386
  %v2410 = vpack.c.b16 %v2389, %v2388
  %v2411 = vpack.c.b16 %v2391, %v2390
  %v2412 = vpack.c.b16 %v2393, %v2392
  %v2413 = vpack.c.b16 %v2395, %v2394
  %v2414 = vpack.c.b16 %v2397, %v2396
  %v2415 = vpack.c.b16 %v2399, %v2398
  %2432 = vmatpush.bf16.msra.mxu0 %v2407
  %2433 = vmatpush.bf16.msra.mxu0 %v2406
  %2434 = vmatpush.bf16.msra.mxu0 %v2405
  %2435 = vmatpush.bf16.msra.mxu0 %v2404
  %2436 = vmatpush.bf16.msra.mxu0 %v2403
  %2437 = vmatpush.bf16.msra.mxu0 %v2402
  %2438 = vmatpush.bf16.msra.mxu0 %v2401
  %2439 = vmatpush.bf16.msra.mxu0 %v2400
  %2440 = vmatmul.bf16.gmra.mxu0 %v2328
  %v2441 = vpop.f32.mrf.mxu0
  %v2442 = vadd.f32 0.0, %v2441
  %v2443 = vpop.f32.mrf.mxu0
  %v2444 = vadd.f32 0.0, %v2443
  %2445 = vmatmul.bf16.gmra.mxu0 %v2330
  %v2446 = vpop.f32.mrf.mxu0
  %v2447 = vadd.f32 0.0, %v2446
  %v2448 = vpop.f32.mrf.mxu0
  %v2449 = vadd.f32 0.0, %v2448
  %2450 = vdwg.mxu0
  %2451 = vmatpush.bf16.msra.mxu0 %v2415
  %2452 = vmatpush.bf16.msra.mxu0 %v2414
  %2453 = vmatpush.bf16.msra.mxu0 %v2413
  %2454 = vmatpush.bf16.msra.mxu0 %v2412
  %2455 = vmatpush.bf16.msra.mxu0 %v2411
  %2456 = vmatpush.bf16.msra.mxu0 %v2410
  %2457 = vmatpush.bf16.msra.mxu0 %v2409
  %2458 = vmatpush.bf16.msra.mxu0 %v2408
  %2459 = vmatmul.bf16.gmra.mxu0 %v2329
  %v2460 = vpop.f32.mrf.mxu0
  %v2461 = vadd.f32 %v2442, %v2460
  %v2462 = vpop.f32.mrf.mxu0
  %v2463 = vadd.f32 %v2444, %v2462
  %2464 = vmatmul.bf16.gmra.mxu0 %v2331
  %v2465 = vpop.f32.mrf.mxu0
  %v2466 = vadd.f32 %v2447, %v2465
  %v2467 = vpop.f32.mrf.mxu0
  %v2468 = vadd.f32 %v2449, %v2467
  %2469 = vdwg.mxu0
  %v2470 = vadd.f32 %v2275, %v2461
  %v2471 = vadd.f32 %v2276, %v2463
  %v2472 = vadd.f32 %v2277, %v2466
  %v2473 = vadd.f32 %v2278, %v2468
  %v2474 = vld [vmem:[#allocation2 + $0x80] sm:$0xff]
  %v2475 = vld [vmem:[#allocation2 + $0x88] sm:$0xff]
  %v2476 = vld [vmem:[#allocation2 + $0x90] sm:$0xff]
  %v2477 = vld [vmem:[#allocation2 + $0x98] sm:$0xff]
  %s2478 = scalar_lea.vmem %s2, 512
  %v2479 = vld [vmem:[%s2478] sm:$0xf]
  %v2480 = vld [vmem:[%s2478 + $0x4] sm:$0xf]
  %v2481 = vld [vmem:[%s2478 + $0x8] sm:$0xf]
  %v2482 = vld [vmem:[%s2478 + $0xc] sm:$0xf]
  %v2483 = vld [vmem:[%s2478 + $0x10] sm:$0xf]
  %v2484 = vld [vmem:[%s2478 + $0x14] sm:$0xf]
  %v2485 = vld [vmem:[%s2478 + $0x18] sm:$0xf]
  %v2486 = vld [vmem:[%s2478 + $0x1c] sm:$0xf]
  %v2487 = vld [vmem:[%s2478 + $0x20] sm:$0xf]
  %v2488 = vld [vmem:[%s2478 + $0x24] sm:$0xf]
  %v2489 = vld [vmem:[%s2478 + $0x28] sm:$0xf]
  %v2490 = vld [vmem:[%s2478 + $0x2c] sm:$0xf]
  %v2491 = vld [vmem:[%s2478 + $0x30] sm:$0xf]
  %v2492 = vld [vmem:[%s2478 + $0x34] sm:$0xf]
  %v2493 = vld [vmem:[%s2478 + $0x38] sm:$0xf]
  %v2494 = vld [vmem:[%s2478 + $0x3c] sm:$0xf]
  %v2495 = vld [vmem:[%s2478 + $0x40] sm:$0xf]
  %v2496 = vld [vmem:[%s2478 + $0x44] sm:$0xf]
  %v2497 = vld [vmem:[%s2478 + $0x48] sm:$0xf]
  %v2498 = vld [vmem:[%s2478 + $0x4c] sm:$0xf]
  %v2499 = vld [vmem:[%s2478 + $0x50] sm:$0xf]
  %v2500 = vld [vmem:[%s2478 + $0x54] sm:$0xf]
  %v2501 = vld [vmem:[%s2478 + $0x58] sm:$0xf]
  %v2502 = vld [vmem:[%s2478 + $0x5c] sm:$0xf]
  %v2503 = vld [vmem:[%s2478 + $0x60] sm:$0xf]
  %v2504 = vld [vmem:[%s2478 + $0x64] sm:$0xf]
  %v2505 = vld [vmem:[%s2478 + $0x68] sm:$0xf]
  %v2506 = vld [vmem:[%s2478 + $0x6c] sm:$0xf]
  %v2507 = vld [vmem:[%s2478 + $0x70] sm:$0xf]
  %v2508 = vld [vmem:[%s2478 + $0x74] sm:$0xf]
  %v2509 = vld [vmem:[%s2478 + $0x78] sm:$0xf]
  %v2510 = vld [vmem:[%s2478 + $0x7c] sm:$0xf]
  %v2515 = vunpack.c.l.b16 %v2474
  %v2516 = vunpack.c.h.b16 %v2474
  %v2517 = vunpack.c.l.b16 %v2475
  %v2518 = vunpack.c.h.b16 %v2475
  %v2519 = vunpack.c.l.b16 %v2476
  %v2520 = vunpack.c.h.b16 %v2476
  %v2521 = vunpack.c.l.b16 %v2477
  %v2522 = vunpack.c.h.b16 %v2477
  %v2523 = vpack.c.b16 %v2517, %v2515
  %v2524 = vpack.c.b16 %v2518, %v2516
  %v2525 = vpack.c.b16 %v2521, %v2519
  %v2526 = vpack.c.b16 %v2522, %v2520
  %v2563 = vunpack.c.l.b16 %v2479
  %v2564 = vunpack.c.l.b16 %v2480
  %v2565 = vunpack.c.l.b16 %v2481
  %v2566 = vunpack.c.l.b16 %v2482
  %v2567 = vunpack.c.l.b16 %v2483
  %v2568 = vunpack.c.l.b16 %v2484
  %v2569 = vunpack.c.l.b16 %v2485
  %v2570 = vunpack.c.l.b16 %v2486
  %v2571 = vunpack.c.l.b16 %v2487
  %v2572 = vunpack.c.l.b16 %v2488
  %v2573 = vunpack.c.l.b16 %v2489
  %v2574 = vunpack.c.l.b16 %v2490
  %v2575 = vunpack.c.l.b16 %v2491
  %v2576 = vunpack.c.l.b16 %v2492
  %v2577 = vunpack.c.l.b16 %v2493
  %v2578 = vunpack.c.l.b16 %v2494
  %v2579 = vunpack.c.l.b16 %v2495
  %v2580 = vunpack.c.l.b16 %v2496
  %v2581 = vunpack.c.l.b16 %v2497
  %v2582 = vunpack.c.l.b16 %v2498
  %v2583 = vunpack.c.l.b16 %v2499
  %v2584 = vunpack.c.l.b16 %v2500
  %v2585 = vunpack.c.l.b16 %v2501
  %v2586 = vunpack.c.l.b16 %v2502
  %v2587 = vunpack.c.l.b16 %v2503
  %v2588 = vunpack.c.l.b16 %v2504
  %v2589 = vunpack.c.l.b16 %v2505
  %v2590 = vunpack.c.l.b16 %v2506
  %v2591 = vunpack.c.l.b16 %v2507
  %v2592 = vunpack.c.l.b16 %v2508
  %v2593 = vunpack.c.l.b16 %v2509
  %v2594 = vunpack.c.l.b16 %v2510
  %v2595 = vpack.c.b16 %v2564, %v2563
  %v2596 = vpack.c.b16 %v2566, %v2565
  %v2597 = vpack.c.b16 %v2568, %v2567
  %v2598 = vpack.c.b16 %v2570, %v2569
  %v2599 = vpack.c.b16 %v2572, %v2571
  %v2600 = vpack.c.b16 %v2574, %v2573
  %v2601 = vpack.c.b16 %v2576, %v2575
  %v2602 = vpack.c.b16 %v2578, %v2577
  %v2603 = vpack.c.b16 %v2580, %v2579
  %v2604 = vpack.c.b16 %v2582, %v2581
  %v2605 = vpack.c.b16 %v2584, %v2583
  %v2606 = vpack.c.b16 %v2586, %v2585
  %v2607 = vpack.c.b16 %v2588, %v2587
  %v2608 = vpack.c.b16 %v2590, %v2589
  %v2609 = vpack.c.b16 %v2592, %v2591
  %v2610 = vpack.c.b16 %v2594, %v2593
  %2627 = vmatpush.bf16.msra.mxu0 %v2602
  %2628 = vmatpush.bf16.msra.mxu0 %v2601
  %2629 = vmatpush.bf16.msra.mxu0 %v2600
  %2630 = vmatpush.bf16.msra.mxu0 %v2599
  %2631 = vmatpush.bf16.msra.mxu0 %v2598
  %2632 = vmatpush.bf16.msra.mxu0 %v2597
  %2633 = vmatpush.bf16.msra.mxu0 %v2596
  %2634 = vmatpush.bf16.msra.mxu0 %v2595
  %2635 = vmatmul.bf16.gmra.mxu0 %v2523
  %v2636 = vpop.f32.mrf.mxu0
  %v2637 = vadd.f32 0.0, %v2636
  %v2638 = vpop.f32.mrf.mxu0
  %v2639 = vadd.f32 0.0, %v2638
  %2640 = vmatmul.bf16.gmra.mxu0 %v2525
  %v2641 = vpop.f32.mrf.mxu0
  %v2642 = vadd.f32 0.0, %v2641
  %v2643 = vpop.f32.mrf.mxu0
  %v2644 = vadd.f32 0.0, %v2643
  %2645 = vdwg.mxu0
  %2646 = vmatpush.bf16.msra.mxu0 %v2610
  %2647 = vmatpush.bf16.msra.mxu0 %v2609
  %2648 = vmatpush.bf16.msra.mxu0 %v2608
  %2649 = vmatpush.bf16.msra.mxu0 %v2607
  %2650 = vmatpush.bf16.msra.mxu0 %v2606
  %2651 = vmatpush.bf16.msra.mxu0 %v2605
  %2652 = vmatpush.bf16.msra.mxu0 %v2604
  %2653 = vmatpush.bf16.msra.mxu0 %v2603
  %2654 = vmatmul.bf16.gmra.mxu0 %v2524
  %v2655 = vpop.f32.mrf.mxu0
  %v2656 = vadd.f32 %v2637, %v2655
  %v2657 = vpop.f32.mrf.mxu0
  %v2658 = vadd.f32 %v2639, %v2657
  %2659 = vmatmul.bf16.gmra.mxu0 %v2526
  %v2660 = vpop.f32.mrf.mxu0
  %v2661 = vadd.f32 %v2642, %v2660
  %v2662 = vpop.f32.mrf.mxu0
  %v2663 = vadd.f32 %v2644, %v2662
  %2664 = vdwg.mxu0
  %v2665 = vadd.f32 %v2470, %v2656
  %v2666 = vadd.f32 %v2471, %v2658
  %v2667 = vadd.f32 %v2472, %v2661
  %v2668 = vadd.f32 %v2473, %v2663
  %v2669 = vld [vmem:[#allocation2 + $0xa0] sm:$0xff]
  %v2670 = vld [vmem:[#allocation2 + $0xa8] sm:$0xff]
  %v2671 = vld [vmem:[#allocation2 + $0xb0] sm:$0xff]
  %v2672 = vld [vmem:[#allocation2 + $0xb8] sm:$0xff]
  %s2673 = scalar_lea.vmem %s2, 640
  %v2674 = vld [vmem:[%s2673] sm:$0xf]
  %v2675 = vld [vmem:[%s2673 + $0x4] sm:$0xf]
  %v2676 = vld [vmem:[%s2673 + $0x8] sm:$0xf]
  %v2677 = vld [vmem:[%s2673 + $0xc] sm:$0xf]
  %v2678 = vld [vmem:[%s2673 + $0x10] sm:$0xf]
  %v2679 = vld [vmem:[%s2673 + $0x14] sm:$0xf]
  %v2680 = vld [vmem:[%s2673 + $0x18] sm:$0xf]
  %v2681 = vld [vmem:[%s2673 + $0x1c] sm:$0xf]
  %v2682 = vld [vmem:[%s2673 + $0x20] sm:$0xf]
  %v2683 = vld [vmem:[%s2673 + $0x24] sm:$0xf]
  %v2684 = vld [vmem:[%s2673 + $0x28] sm:$0xf]
  %v2685 = vld [vmem:[%s2673 + $0x2c] sm:$0xf]
  %v2686 = vld [vmem:[%s2673 + $0x30] sm:$0xf]
  %v2687 = vld [vmem:[%s2673 + $0x34] sm:$0xf]
  %v2688 = vld [vmem:[%s2673 + $0x38] sm:$0xf]
  %v2689 = vld [vmem:[%s2673 + $0x3c] sm:$0xf]
  %v2690 = vld [vmem:[%s2673 + $0x40] sm:$0xf]
  %v2691 = vld [vmem:[%s2673 + $0x44] sm:$0xf]
  %v2692 = vld [vmem:[%s2673 + $0x48] sm:$0xf]
  %v2693 = vld [vmem:[%s2673 + $0x4c] sm:$0xf]
  %v2694 = vld [vmem:[%s2673 + $0x50] sm:$0xf]
  %v2695 = vld [vmem:[%s2673 + $0x54] sm:$0xf]
  %v2696 = vld [vmem:[%s2673 + $0x58] sm:$0xf]
  %v2697 = vld [vmem:[%s2673 + $0x5c] sm:$0xf]
  %v2698 = vld [vmem:[%s2673 + $0x60] sm:$0xf]
  %v2699 = vld [vmem:[%s2673 + $0x64] sm:$0xf]
  %v2700 = vld [vmem:[%s2673 + $0x68] sm:$0xf]
  %v2701 = vld [vmem:[%s2673 + $0x6c] sm:$0xf]
  %v2702 = vld [vmem:[%s2673 + $0x70] sm:$0xf]
  %v2703 = vld [vmem:[%s2673 + $0x74] sm:$0xf]
  %v2704 = vld [vmem:[%s2673 + $0x78] sm:$0xf]
  %v2705 = vld [vmem:[%s2673 + $0x7c] sm:$0xf]
  %v2710 = vunpack.c.l.b16 %v2669
  %v2711 = vunpack.c.h.b16 %v2669
  %v2712 = vunpack.c.l.b16 %v2670
  %v2713 = vunpack.c.h.b16 %v2670
  %v2714 = vunpack.c.l.b16 %v2671
  %v2715 = vunpack.c.h.b16 %v2671
  %v2716 = vunpack.c.l.b16 %v2672
  %v2717 = vunpack.c.h.b16 %v2672
  %v2718 = vpack.c.b16 %v2712, %v2710
  %v2719 = vpack.c.b16 %v2713, %v2711
  %v2720 = vpack.c.b16 %v2716, %v2714
  %v2721 = vpack.c.b16 %v2717, %v2715
  %v2758 = vunpack.c.l.b16 %v2674
  %v2759 = vunpack.c.l.b16 %v2675
  %v2760 = vunpack.c.l.b16 %v2676
  %v2761 = vunpack.c.l.b16 %v2677
  %v2762 = vunpack.c.l.b16 %v2678
  %v2763 = vunpack.c.l.b16 %v2679
  %v2764 = vunpack.c.l.b16 %v2680
  %v2765 = vunpack.c.l.b16 %v2681
  %v2766 = vunpack.c.l.b16 %v2682
  %v2767 = vunpack.c.l.b16 %v2683
  %v2768 = vunpack.c.l.b16 %v2684
  %v2769 = vunpack.c.l.b16 %v2685
  %v2770 = vunpack.c.l.b16 %v2686
  %v2771 = vunpack.c.l.b16 %v2687
  %v2772 = vunpack.c.l.b16 %v2688
  %v2773 = vunpack.c.l.b16 %v2689
  %v2774 = vunpack.c.l.b16 %v2690
  %v2775 = vunpack.c.l.b16 %v2691
  %v2776 = vunpack.c.l.b16 %v2692
  %v2777 = vunpack.c.l.b16 %v2693
  %v2778 = vunpack.c.l.b16 %v2694
  %v2779 = vunpack.c.l.b16 %v2695
  %v2780 = vunpack.c.l.b16 %v2696
  %v2781 = vunpack.c.l.b16 %v2697
  %v2782 = vunpack.c.l.b16 %v2698
  %v2783 = vunpack.c.l.b16 %v2699
  %v2784 = vunpack.c.l.b16 %v2700
  %v2785 = vunpack.c.l.b16 %v2701
  %v2786 = vunpack.c.l.b16 %v2702
  %v2787 = vunpack.c.l.b16 %v2703
  %v2788 = vunpack.c.l.b16 %v2704
  %v2789 = vunpack.c.l.b16 %v2705
  %v2790 = vpack.c.b16 %v2759, %v2758
  %v2791 = vpack.c.b16 %v2761, %v2760
  %v2792 = vpack.c.b16 %v2763, %v2762
  %v2793 = vpack.c.b16 %v2765, %v2764
  %v2794 = vpack.c.b16 %v2767, %v2766
  %v2795 = vpack.c.b16 %v2769, %v2768
  %v2796 = vpack.c.b16 %v2771, %v2770
  %v2797 = vpack.c.b16 %v2773, %v2772
  %v2798 = vpack.c.b16 %v2775, %v2774
  %v2799 = vpack.c.b16 %v2777, %v2776
  %v2800 = vpack.c.b16 %v2779, %v2778
  %v2801 = vpack.c.b16 %v2781, %v2780
  %v2802 = vpack.c.b16 %v2783, %v2782
  %v2803 = vpack.c.b16 %v2785, %v2784
  %v2804 = vpack.c.b16 %v2787, %v2786
  %v2805 = vpack.c.b16 %v2789, %v2788
  %2822 = vmatpush.bf16.msra.mxu0 %v2797
  %2823 = vmatpush.bf16.msra.mxu0 %v2796
  %2824 = vmatpush.bf16.msra.mxu0 %v2795
  %2825 = vmatpush.bf16.msra.mxu0 %v2794
  %2826 = vmatpush.bf16.msra.mxu0 %v2793
  %2827 = vmatpush.bf16.msra.mxu0 %v2792
  %2828 = vmatpush.bf16.msra.mxu0 %v2791
  %2829 = vmatpush.bf16.msra.mxu0 %v2790
  %2830 = vmatmul.bf16.gmra.mxu0 %v2718
  %v2831 = vpop.f32.mrf.mxu0
  %v2832 = vadd.f32 0.0, %v2831
  %v2833 = vpop.f32.mrf.mxu0
  %v2834 = vadd.f32 0.0, %v2833
  %2835 = vmatmul.bf16.gmra.mxu0 %v2720
  %v2836 = vpop.f32.mrf.mxu0
  %v2837 = vadd.f32 0.0, %v2836
  %v2838 = vpop.f32.mrf.mxu0
  %v2839 = vadd.f32 0.0, %v2838
  %2840 = vdwg.mxu0
  %2841 = vmatpush.bf16.msra.mxu0 %v2805
  %2842 = vmatpush.bf16.msra.mxu0 %v2804
  %2843 = vmatpush.bf16.msra.mxu0 %v2803
  %2844 = vmatpush.bf16.msra.mxu0 %v2802
  %2845 = vmatpush.bf16.msra.mxu0 %v2801
  %2846 = vmatpush.bf16.msra.mxu0 %v2800
  %2847 = vmatpush.bf16.msra.mxu0 %v2799
  %2848 = vmatpush.bf16.msra.mxu0 %v2798
  %2849 = vmatmul.bf16.gmra.mxu0 %v2719
  %v2850 = vpop.f32.mrf.mxu0
  %v2851 = vadd.f32 %v2832, %v2850
  %v2852 = vpop.f32.mrf.mxu0
  %v2853 = vadd.f32 %v2834, %v2852
  %2854 = vmatmul.bf16.gmra.mxu0 %v2721
  %v2855 = vpop.f32.mrf.mxu0
  %v2856 = vadd.f32 %v2837, %v2855
  %v2857 = vpop.f32.mrf.mxu0
  %v2858 = vadd.f32 %v2839, %v2857
  %2859 = vdwg.mxu0
  %v2860 = vadd.f32 %v2665, %v2851
  %v2861 = vadd.f32 %v2666, %v2853
  %v2862 = vadd.f32 %v2667, %v2856
  %v2863 = vadd.f32 %v2668, %v2858
  %v2864 = vld [vmem:[#allocation2 + $0xc0] sm:$0xff]
  %v2865 = vld [vmem:[#allocation2 + $0xc8] sm:$0xff]
  %v2866 = vld [vmem:[#allocation2 + $0xd0] sm:$0xff]
  %v2867 = vld [vmem:[#allocation2 + $0xd8] sm:$0xff]
  %s2868 = scalar_lea.vmem %s2, 768
  %v2869 = vld [vmem:[%s2868] sm:$0xf]
  %v2870 = vld [vmem:[%s2868 + $0x4] sm:$0xf]
  %v2871 = vld [vmem:[%s2868 + $0x8] sm:$0xf]
  %v2872 = vld [vmem:[%s2868 + $0xc] sm:$0xf]
  %v2873 = vld [vmem:[%s2868 + $0x10] sm:$0xf]
  %v2874 = vld [vmem:[%s2868 + $0x14] sm:$0xf]
  %v2875 = vld [vmem:[%s2868 + $0x18] sm:$0xf]
  %v2876 = vld [vmem:[%s2868 + $0x1c] sm:$0xf]
  %v2877 = vld [vmem:[%s2868 + $0x20] sm:$0xf]
  %v2878 = vld [vmem:[%s2868 + $0x24] sm:$0xf]
  %v2879 = vld [vmem:[%s2868 + $0x28] sm:$0xf]
  %v2880 = vld [vmem:[%s2868 + $0x2c] sm:$0xf]
  %v2881 = vld [vmem:[%s2868 + $0x30] sm:$0xf]
  %v2882 = vld [vmem:[%s2868 + $0x34] sm:$0xf]
  %v2883 = vld [vmem:[%s2868 + $0x38] sm:$0xf]
  %v2884 = vld [vmem:[%s2868 + $0x3c] sm:$0xf]
  %v2885 = vld [vmem:[%s2868 + $0x40] sm:$0xf]
  %v2886 = vld [vmem:[%s2868 + $0x44] sm:$0xf]
  %v2887 = vld [vmem:[%s2868 + $0x48] sm:$0xf]
  %v2888 = vld [vmem:[%s2868 + $0x4c] sm:$0xf]
  %v2889 = vld [vmem:[%s2868 + $0x50] sm:$0xf]
  %v2890 = vld [vmem:[%s2868 + $0x54] sm:$0xf]
  %v2891 = vld [vmem:[%s2868 + $0x58] sm:$0xf]
  %v2892 = vld [vmem:[%s2868 + $0x5c] sm:$0xf]
  %v2893 = vld [vmem:[%s2868 + $0x60] sm:$0xf]
  %v2894 = vld [vmem:[%s2868 + $0x64] sm:$0xf]
  %v2895 = vld [vmem:[%s2868 + $0x68] sm:$0xf]
  %v2896 = vld [vmem:[%s2868 + $0x6c] sm:$0xf]
  %v2897 = vld [vmem:[%s2868 + $0x70] sm:$0xf]
  %v2898 = vld [vmem:[%s2868 + $0x74] sm:$0xf]
  %v2899 = vld [vmem:[%s2868 + $0x78] sm:$0xf]
  %v2900 = vld [vmem:[%s2868 + $0x7c] sm:$0xf]
  %v2905 = vunpack.c.l.b16 %v2864
  %v2906 = vunpack.c.h.b16 %v2864
  %v2907 = vunpack.c.l.b16 %v2865
  %v2908 = vunpack.c.h.b16 %v2865
  %v2909 = vunpack.c.l.b16 %v2866
  %v2910 = vunpack.c.h.b16 %v2866
  %v2911 = vunpack.c.l.b16 %v2867
  %v2912 = vunpack.c.h.b16 %v2867
  %v2913 = vpack.c.b16 %v2907, %v2905
  %v2914 = vpack.c.b16 %v2908, %v2906
  %v2915 = vpack.c.b16 %v2911, %v2909
  %v2916 = vpack.c.b16 %v2912, %v2910
  %v2953 = vunpack.c.l.b16 %v2869
  %v2954 = vunpack.c.l.b16 %v2870
  %v2955 = vunpack.c.l.b16 %v2871
  %v2956 = vunpack.c.l.b16 %v2872
  %v2957 = vunpack.c.l.b16 %v2873
  %v2958 = vunpack.c.l.b16 %v2874
  %v2959 = vunpack.c.l.b16 %v2875
  %v2960 = vunpack.c.l.b16 %v2876
  %v2961 = vunpack.c.l.b16 %v2877
  %v2962 = vunpack.c.l.b16 %v2878
  %v2963 = vunpack.c.l.b16 %v2879
  %v2964 = vunpack.c.l.b16 %v2880
  %v2965 = vunpack.c.l.b16 %v2881
  %v2966 = vunpack.c.l.b16 %v2882
  %v2967 = vunpack.c.l.b16 %v2883
  %v2968 = vunpack.c.l.b16 %v2884
  %v2969 = vunpack.c.l.b16 %v2885
  %v2970 = vunpack.c.l.b16 %v2886
  %v2971 = vunpack.c.l.b16 %v2887
  %v2972 = vunpack.c.l.b16 %v2888
  %v2973 = vunpack.c.l.b16 %v2889
  %v2974 = vunpack.c.l.b16 %v2890
  %v2975 = vunpack.c.l.b16 %v2891
  %v2976 = vunpack.c.l.b16 %v2892
  %v2977 = vunpack.c.l.b16 %v2893
  %v2978 = vunpack.c.l.b16 %v2894
  %v2979 = vunpack.c.l.b16 %v2895
  %v2980 = vunpack.c.l.b16 %v2896
  %v2981 = vunpack.c.l.b16 %v2897
  %v2982 = vunpack.c.l.b16 %v2898
  %v2983 = vunpack.c.l.b16 %v2899
  %v2984 = vunpack.c.l.b16 %v2900
  %v2985 = vpack.c.b16 %v2954, %v2953
  %v2986 = vpack.c.b16 %v2956, %v2955
  %v2987 = vpack.c.b16 %v2958, %v2957
  %v2988 = vpack.c.b16 %v2960, %v2959
  %v2989 = vpack.c.b16 %v2962, %v2961
  %v2990 = vpack.c.b16 %v2964, %v2963
  %v2991 = vpack.c.b16 %v2966, %v2965
  %v2992 = vpack.c.b16 %v2968, %v2967
  %v2993 = vpack.c.b16 %v2970, %v2969
  %v2994 = vpack.c.b16 %v2972, %v2971
  %v2995 = vpack.c.b16 %v2974, %v2973
  %v2996 = vpack.c.b16 %v2976, %v2975
  %v2997 = vpack.c.b16 %v2978, %v2977
  %v2998 = vpack.c.b16 %v2980, %v2979
  %v2999 = vpack.c.b16 %v2982, %v2981
  %v3000 = vpack.c.b16 %v2984, %v2983
  %3017 = vmatpush.bf16.msra.mxu0 %v2992
  %3018 = vmatpush.bf16.msra.mxu0 %v2991
  %3019 = vmatpush.bf16.msra.mxu0 %v2990
  %3020 = vmatpush.bf16.msra.mxu0 %v2989
  %3021 = vmatpush.bf16.msra.mxu0 %v2988
  %3022 = vmatpush.bf16.msra.mxu0 %v2987
  %3023 = vmatpush.bf16.msra.mxu0 %v2986
  %3024 = vmatpush.bf16.msra.mxu0 %v2985
  %3025 = vmatmul.bf16.gmra.mxu0 %v2913
  %v3026 = vpop.f32.mrf.mxu0
  %v3027 = vadd.f32 0.0, %v3026
  %v3028 = vpop.f32.mrf.mxu0
  %v3029 = vadd.f32 0.0, %v3028
  %3030 = vmatmul.bf16.gmra.mxu0 %v2915
  %v3031 = vpop.f32.mrf.mxu0
  %v3032 = vadd.f32 0.0, %v3031
  %v3033 = vpop.f32.mrf.mxu0
  %v3034 = vadd.f32 0.0, %v3033
  %3035 = vdwg.mxu0
  %3036 = vmatpush.bf16.msra.mxu0 %v3000
  %3037 = vmatpush.bf16.msra.mxu0 %v2999
  %3038 = vmatpush.bf16.msra.mxu0 %v2998
  %3039 = vmatpush.bf16.msra.mxu0 %v2997
  %3040 = vmatpush.bf16.msra.mxu0 %v2996
  %3041 = vmatpush.bf16.msra.mxu0 %v2995
  %3042 = vmatpush.bf16.msra.mxu0 %v2994
  %3043 = vmatpush.bf16.msra.mxu0 %v2993
  %3044 = vmatmul.bf16.gmra.mxu0 %v2914
  %v3045 = vpop.f32.mrf.mxu0
  %v3046 = vadd.f32 %v3027, %v3045
  %v3047 = vpop.f32.mrf.mxu0
  %v3048 = vadd.f32 %v3029, %v3047
  %3049 = vmatmul.bf16.gmra.mxu0 %v2916
  %v3050 = vpop.f32.mrf.mxu0
  %v3051 = vadd.f32 %v3032, %v3050
  %v3052 = vpop.f32.mrf.mxu0
  %v3053 = vadd.f32 %v3034, %v3052
  %3054 = vdwg.mxu0
  %v3055 = vadd.f32 %v2860, %v3046
  %v3056 = vadd.f32 %v2861, %v3048
  %v3057 = vadd.f32 %v2862, %v3051
  %v3058 = vadd.f32 %v2863, %v3053
  %v3059 = vld [vmem:[#allocation2 + $0xe0] sm:$0xff]
  %v3060 = vld [vmem:[#allocation2 + $0xe8] sm:$0xff]
  %v3061 = vld [vmem:[#allocation2 + $0xf0] sm:$0xff]
  %v3062 = vld [vmem:[#allocation2 + $0xf8] sm:$0xff]
  %s3063 = scalar_lea.vmem %s2, 896
  %v3064 = vld [vmem:[%s3063] sm:$0xf]
  %v3065 = vld [vmem:[%s3063 + $0x4] sm:$0xf]
  %v3066 = vld [vmem:[%s3063 + $0x8] sm:$0xf]
  %v3067 = vld [vmem:[%s3063 + $0xc] sm:$0xf]
  %v3068 = vld [vmem:[%s3063 + $0x10] sm:$0xf]
  %v3069 = vld [vmem:[%s3063 + $0x14] sm:$0xf]
  %v3070 = vld [vmem:[%s3063 + $0x18] sm:$0xf]
  %v3071 = vld [vmem:[%s3063 + $0x1c] sm:$0xf]
  %v3072 = vld [vmem:[%s3063 + $0x20] sm:$0xf]
  %v3073 = vld [vmem:[%s3063 + $0x24] sm:$0xf]
  %v3074 = vld [vmem:[%s3063 + $0x28] sm:$0xf]
  %v3075 = vld [vmem:[%s3063 + $0x2c] sm:$0xf]
  %v3076 = vld [vmem:[%s3063 + $0x30] sm:$0xf]
  %v3077 = vld [vmem:[%s3063 + $0x34] sm:$0xf]
  %v3078 = vld [vmem:[%s3063 + $0x38] sm:$0xf]
  %v3079 = vld [vmem:[%s3063 + $0x3c] sm:$0xf]
  %v3080 = vld [vmem:[%s3063 + $0x40] sm:$0xf]
  %v3081 = vld [vmem:[%s3063 + $0x44] sm:$0xf]
  %v3082 = vld [vmem:[%s3063 + $0x48] sm:$0xf]
  %v3083 = vld [vmem:[%s3063 + $0x4c] sm:$0xf]
  %v3084 = vld [vmem:[%s3063 + $0x50] sm:$0xf]
  %v3085 = vld [vmem:[%s3063 + $0x54] sm:$0xf]
  %v3086 = vld [vmem:[%s3063 + $0x58] sm:$0xf]
  %v3087 = vld [vmem:[%s3063 + $0x5c] sm:$0xf]
  %v3088 = vld [vmem:[%s3063 + $0x60] sm:$0xf]
  %v3089 = vld [vmem:[%s3063 + $0x64] sm:$0xf]
  %v3090 = vld [vmem:[%s3063 + $0x68] sm:$0xf]
  %v3091 = vld [vmem:[%s3063 + $0x6c] sm:$0xf]
  %v3092 = vld [vmem:[%s3063 + $0x70] sm:$0xf]
  %v3093 = vld [vmem:[%s3063 + $0x74] sm:$0xf]
  %v3094 = vld [vmem:[%s3063 + $0x78] sm:$0xf]
  %v3095 = vld [vmem:[%s3063 + $0x7c] sm:$0xf]
  %v3100 = vunpack.c.l.b16 %v3059
  %v3101 = vunpack.c.h.b16 %v3059
  %v3102 = vunpack.c.l.b16 %v3060
  %v3103 = vunpack.c.h.b16 %v3060
  %v3104 = vunpack.c.l.b16 %v3061
  %v3105 = vunpack.c.h.b16 %v3061
  %v3106 = vunpack.c.l.b16 %v3062
  %v3107 = vunpack.c.h.b16 %v3062
  %v3108 = vpack.c.b16 %v3102, %v3100
  %v3109 = vpack.c.b16 %v3103, %v3101
  %v3110 = vpack.c.b16 %v3106, %v3104
  %v3111 = vpack.c.b16 %v3107, %v3105
  %v3148 = vunpack.c.l.b16 %v3064
  %v3149 = vunpack.c.l.b16 %v3065
  %v3150 = vunpack.c.l.b16 %v3066
  %v3151 = vunpack.c.l.b16 %v3067
  %v3152 = vunpack.c.l.b16 %v3068
  %v3153 = vunpack.c.l.b16 %v3069
  %v3154 = vunpack.c.l.b16 %v3070
  %v3155 = vunpack.c.l.b16 %v3071
  %v3156 = vunpack.c.l.b16 %v3072
  %v3157 = vunpack.c.l.b16 %v3073
  %v3158 = vunpack.c.l.b16 %v3074
  %v3159 = vunpack.c.l.b16 %v3075
  %v3160 = vunpack.c.l.b16 %v3076
  %v3161 = vunpack.c.l.b16 %v3077
  %v3162 = vunpack.c.l.b16 %v3078
  %v3163 = vunpack.c.l.b16 %v3079
  %v3164 = vunpack.c.l.b16 %v3080
  %v3165 = vunpack.c.l.b16 %v3081
  %v3166 = vunpack.c.l.b16 %v3082
  %v3167 = vunpack.c.l.b16 %v3083
  %v3168 = vunpack.c.l.b16 %v3084
  %v3169 = vunpack.c.l.b16 %v3085
  %v3170 = vunpack.c.l.b16 %v3086
  %v3171 = vunpack.c.l.b16 %v3087
  %v3172 = vunpack.c.l.b16 %v3088
  %v3173 = vunpack.c.l.b16 %v3089
  %v3174 = vunpack.c.l.b16 %v3090
  %v3175 = vunpack.c.l.b16 %v3091
  %v3176 = vunpack.c.l.b16 %v3092
  %v3177 = vunpack.c.l.b16 %v3093
  %v3178 = vunpack.c.l.b16 %v3094
  %v3179 = vunpack.c.l.b16 %v3095
  %v3180 = vpack.c.b16 %v3149, %v3148
  %v3181 = vpack.c.b16 %v3151, %v3150
  %v3182 = vpack.c.b16 %v3153, %v3152
  %v3183 = vpack.c.b16 %v3155, %v3154
  %v3184 = vpack.c.b16 %v3157, %v3156
  %v3185 = vpack.c.b16 %v3159, %v3158
  %v3186 = vpack.c.b16 %v3161, %v3160
  %v3187 = vpack.c.b16 %v3163, %v3162
  %v3188 = vpack.c.b16 %v3165, %v3164
  %v3189 = vpack.c.b16 %v3167, %v3166
  %v3190 = vpack.c.b16 %v3169, %v3168
  %v3191 = vpack.c.b16 %v3171, %v3170
  %v3192 = vpack.c.b16 %v3173, %v3172
  %v3193 = vpack.c.b16 %v3175, %v3174
  %v3194 = vpack.c.b16 %v3177, %v3176
  %v3195 = vpack.c.b16 %v3179, %v3178
  %3212 = vmatpush.bf16.msra.mxu0 %v3187
  %3213 = vmatpush.bf16.msra.mxu0 %v3186
  %3214 = vmatpush.bf16.msra.mxu0 %v3185
  %3215 = vmatpush.bf16.msra.mxu0 %v3184
  %3216 = vmatpush.bf16.msra.mxu0 %v3183
  %3217 = vmatpush.bf16.msra.mxu0 %v3182
  %3218 = vmatpush.bf16.msra.mxu0 %v3181
  %3219 = vmatpush.bf16.msra.mxu0 %v3180
  %3220 = vmatmul.bf16.gmra.mxu0 %v3108
  %v3221 = vpop.f32.mrf.mxu0
  %v3222 = vadd.f32 0.0, %v3221
  %v3223 = vpop.f32.mrf.mxu0
  %v3224 = vadd.f32 0.0, %v3223
  %3225 = vmatmul.bf16.gmra.mxu0 %v3110
  %v3226 = vpop.f32.mrf.mxu0
  %v3227 = vadd.f32 0.0, %v3226
  %v3228 = vpop.f32.mrf.mxu0
  %v3229 = vadd.f32 0.0, %v3228
  %3230 = vdwg.mxu0
  %3231 = vmatpush.bf16.msra.mxu0 %v3195
  %3232 = vmatpush.bf16.msra.mxu0 %v3194
  %3233 = vmatpush.bf16.msra.mxu0 %v3193
  %3234 = vmatpush.bf16.msra.mxu0 %v3192
  %3235 = vmatpush.bf16.msra.mxu0 %v3191
  %3236 = vmatpush.bf16.msra.mxu0 %v3190
  %3237 = vmatpush.bf16.msra.mxu0 %v3189
  %3238 = vmatpush.bf16.msra.mxu0 %v3188
  %3239 = vmatmul.bf16.gmra.mxu0 %v3109
  %v3240 = vpop.f32.mrf.mxu0
  %v3241 = vadd.f32 %v3222, %v3240
  %v3242 = vpop.f32.mrf.mxu0
  %v3243 = vadd.f32 %v3224, %v3242
  %3244 = vmatmul.bf16.gmra.mxu0 %v3111
  %v3245 = vpop.f32.mrf.mxu0
  %v3246 = vadd.f32 %v3227, %v3245
  %v3247 = vpop.f32.mrf.mxu0
  %v3248 = vadd.f32 %v3229, %v3247
  %3249 = vdwg.mxu0
  %v3250 = vadd.f32 %v3055, %v3241
  %v3251 = vadd.f32 %v3056, %v3243
  %v3252 = vadd.f32 %v3057, %v3246
  %v3253 = vadd.f32 %v3058, %v3248
  %v3254 = vld [vmem:[#allocation2 + $0x100] sm:$0xff]
  %v3255 = vld [vmem:[#allocation2 + $0x108] sm:$0xff]
  %v3256 = vld [vmem:[#allocation2 + $0x110] sm:$0xff]
  %v3257 = vld [vmem:[#allocation2 + $0x118] sm:$0xff]
  %s3258 = scalar_lea.vmem %s2, 1024
  %v3259 = vld [vmem:[%s3258] sm:$0xf]
  %v3260 = vld [vmem:[%s3258 + $0x4] sm:$0xf]
  %v3261 = vld [vmem:[%s3258 + $0x8] sm:$0xf]
  %v3262 = vld [vmem:[%s3258 + $0xc] sm:$0xf]
  %v3263 = vld [vmem:[%s3258 + $0x10] sm:$0xf]
  %v3264 = vld [vmem:[%s3258 + $0x14] sm:$0xf]
  %v3265 = vld [vmem:[%s3258 + $0x18] sm:$0xf]
  %v3266 = vld [vmem:[%s3258 + $0x1c] sm:$0xf]
  %v3267 = vld [vmem:[%s3258 + $0x20] sm:$0xf]
  %v3268 = vld [vmem:[%s3258 + $0x24] sm:$0xf]
  %v3269 = vld [vmem:[%s3258 + $0x28] sm:$0xf]
  %v3270 = vld [vmem:[%s3258 + $0x2c] sm:$0xf]
  %v3271 = vld [vmem:[%s3258 + $0x30] sm:$0xf]
  %v3272 = vld [vmem:[%s3258 + $0x34] sm:$0xf]
  %v3273 = vld [vmem:[%s3258 + $0x38] sm:$0xf]
  %v3274 = vld [vmem:[%s3258 + $0x3c] sm:$0xf]
  %v3275 = vld [vmem:[%s3258 + $0x40] sm:$0xf]
  %v3276 = vld [vmem:[%s3258 + $0x44] sm:$0xf]
  %v3277 = vld [vmem:[%s3258 + $0x48] sm:$0xf]
  %v3278 = vld [vmem:[%s3258 + $0x4c] sm:$0xf]
  %v3279 = vld [vmem:[%s3258 + $0x50] sm:$0xf]
  %v3280 = vld [vmem:[%s3258 + $0x54] sm:$0xf]
  %v3281 = vld [vmem:[%s3258 + $0x58] sm:$0xf]
  %v3282 = vld [vmem:[%s3258 + $0x5c] sm:$0xf]
  %v3283 = vld [vmem:[%s3258 + $0x60] sm:$0xf]
  %v3284 = vld [vmem:[%s3258 + $0x64] sm:$0xf]
  %v3285 = vld [vmem:[%s3258 + $0x68] sm:$0xf]
  %v3286 = vld [vmem:[%s3258 + $0x6c] sm:$0xf]
  %v3287 = vld [vmem:[%s3258 + $0x70] sm:$0xf]
  %v3288 = vld [vmem:[%s3258 + $0x74] sm:$0xf]
  %v3289 = vld [vmem:[%s3258 + $0x78] sm:$0xf]
  %v3290 = vld [vmem:[%s3258 + $0x7c] sm:$0xf]
  %v3295 = vunpack.c.l.b16 %v3254
  %v3296 = vunpack.c.h.b16 %v3254
  %v3297 = vunpack.c.l.b16 %v3255
  %v3298 = vunpack.c.h.b16 %v3255
  %v3299 = vunpack.c.l.b16 %v3256
  %v3300 = vunpack.c.h.b16 %v3256
  %v3301 = vunpack.c.l.b16 %v3257
  %v3302 = vunpack.c.h.b16 %v3257
  %v3303 = vpack.c.b16 %v3297, %v3295
  %v3304 = vpack.c.b16 %v3298, %v3296
  %v3305 = vpack.c.b16 %v3301, %v3299
  %v3306 = vpack.c.b16 %v3302, %v3300
  %v3343 = vunpack.c.l.b16 %v3259
  %v3344 = vunpack.c.l.b16 %v3260
  %v3345 = vunpack.c.l.b16 %v3261
  %v3346 = vunpack.c.l.b16 %v3262
  %v3347 = vunpack.c.l.b16 %v3263
  %v3348 = vunpack.c.l.b16 %v3264
  %v3349 = vunpack.c.l.b16 %v3265
  %v3350 = vunpack.c.l.b16 %v3266
  %v3351 = vunpack.c.l.b16 %v3267
  %v3352 = vunpack.c.l.b16 %v3268
  %v3353 = vunpack.c.l.b16 %v3269
  %v3354 = vunpack.c.l.b16 %v3270
  %v3355 = vunpack.c.l.b16 %v3271
  %v3356 = vunpack.c.l.b16 %v3272
  %v3357 = vunpack.c.l.b16 %v3273
  %v3358 = vunpack.c.l.b16 %v3274
  %v3359 = vunpack.c.l.b16 %v3275
  %v3360 = vunpack.c.l.b16 %v3276
  %v3361 = vunpack.c.l.b16 %v3277
  %v3362 = vunpack.c.l.b16 %v3278
  %v3363 = vunpack.c.l.b16 %v3279
  %v3364 = vunpack.c.l.b16 %v3280
  %v3365 = vunpack.c.l.b16 %v3281
  %v3366 = vunpack.c.l.b16 %v3282
  %v3367 = vunpack.c.l.b16 %v3283
  %v3368 = vunpack.c.l.b16 %v3284
  %v3369 = vunpack.c.l.b16 %v3285
  %v3370 = vunpack.c.l.b16 %v3286
  %v3371 = vunpack.c.l.b16 %v3287
  %v3372 = vunpack.c.l.b16 %v3288
  %v3373 = vunpack.c.l.b16 %v3289
  %v3374 = vunpack.c.l.b16 %v3290
  %v3375 = vpack.c.b16 %v3344, %v3343
  %v3376 = vpack.c.b16 %v3346, %v3345
  %v3377 = vpack.c.b16 %v3348, %v3347
  %v3378 = vpack.c.b16 %v3350, %v3349
  %v3379 = vpack.c.b16 %v3352, %v3351
  %v3380 = vpack.c.b16 %v3354, %v3353
  %v3381 = vpack.c.b16 %v3356, %v3355
  %v3382 = vpack.c.b16 %v3358, %v3357
  %v3383 = vpack.c.b16 %v3360, %v3359
  %v3384 = vpack.c.b16 %v3362, %v3361
  %v3385 = vpack.c.b16 %v3364, %v3363
  %v3386 = vpack.c.b16 %v3366, %v3365
  %v3387 = vpack.c.b16 %v3368, %v3367
  %v3388 = vpack.c.b16 %v3370, %v3369
  %v3389 = vpack.c.b16 %v3372, %v3371
  %v3390 = vpack.c.b16 %v3374, %v3373
  %3407 = vmatpush.bf16.msra.mxu0 %v3382
  %3408 = vmatpush.bf16.msra.mxu0 %v3381
  %3409 = vmatpush.bf16.msra.mxu0 %v3380
  %3410 = vmatpush.bf16.msra.mxu0 %v3379
  %3411 = vmatpush.bf16.msra.mxu0 %v3378
  %3412 = vmatpush.bf16.msra.mxu0 %v3377
  %3413 = vmatpush.bf16.msra.mxu0 %v3376
  %3414 = vmatpush.bf16.msra.mxu0 %v3375
  %3415 = vmatmul.bf16.gmra.mxu0 %v3303
  %v3416 = vpop.f32.mrf.mxu0
  %v3417 = vadd.f32 0.0, %v3416
  %v3418 = vpop.f32.mrf.mxu0
  %v3419 = vadd.f32 0.0, %v3418
  %3420 = vmatmul.bf16.gmra.mxu0 %v3305
  %v3421 = vpop.f32.mrf.mxu0
  %v3422 = vadd.f32 0.0, %v3421
  %v3423 = vpop.f32.mrf.mxu0
  %v3424 = vadd.f32 0.0, %v3423
  %3425 = vdwg.mxu0
  %3426 = vmatpush.bf16.msra.mxu0 %v3390
  %3427 = vmatpush.bf16.msra.mxu0 %v3389
  %3428 = vmatpush.bf16.msra.mxu0 %v3388
  %3429 = vmatpush.bf16.msra.mxu0 %v3387
  %3430 = vmatpush.bf16.msra.mxu0 %v3386
  %3431 = vmatpush.bf16.msra.mxu0 %v3385
  %3432 = vmatpush.bf16.msra.mxu0 %v3384
  %3433 = vmatpush.bf16.msra.mxu0 %v3383
  %3434 = vmatmul.bf16.gmra.mxu0 %v3304
  %v3435 = vpop.f32.mrf.mxu0
  %v3436 = vadd.f32 %v3417, %v3435
  %v3437 = vpop.f32.mrf.mxu0
  %v3438 = vadd.f32 %v3419, %v3437
  %3439 = vmatmul.bf16.gmra.mxu0 %v3306
  %v3440 = vpop.f32.mrf.mxu0
  %v3441 = vadd.f32 %v3422, %v3440
  %v3442 = vpop.f32.mrf.mxu0
  %v3443 = vadd.f32 %v3424, %v3442
  %3444 = vdwg.mxu0
  %v3445 = vadd.f32 %v3250, %v3436
  %v3446 = vadd.f32 %v3251, %v3438
  %v3447 = vadd.f32 %v3252, %v3441
  %v3448 = vadd.f32 %v3253, %v3443
  %v3449 = vld [vmem:[%s3] sm:$0xff]
  %v3450 = vld [vmem:[%s3 + $0x8] sm:$0xff]
  %v3451 = vld [vmem:[%s3 + $0x10] sm:$0xff]
  %v3452 = vld [vmem:[%s3 + $0x18] sm:$0xff]
  %v3453 = vadd.f32 %v3445, %v3449
  %v3454 = vadd.f32 %v3446, %v3450
  %v3455 = vadd.f32 %v3447, %v3451
  %v3456 = vadd.f32 %v3448, %v3452
  %v3457 = vmul.f32 %v3453, 0.5
  %v3458 = vmul.f32 %v3454, 0.5
  %v3459 = vmul.f32 %v3455, 0.5
  %v3460 = vmul.f32 %v3456, 0.5
  %v3461 = vmul.f32 %v3453, %v3453
  %v3462 = vmul.f32 %v3454, %v3454
  %v3463 = vmul.f32 %v3455, %v3455
  %v3464 = vmul.f32 %v3456, %v3456
  %v3465 = vmul.f32 %v3461, %v3453
  %v3466 = vmul.f32 %v3462, %v3454
  %v3467 = vmul.f32 %v3463, %v3455
  %v3468 = vmul.f32 %v3464, %v3456
  %v3469 = vmul.f32 %v3465, 0.044715
  %v3470 = vmul.f32 %v3466, 0.044715
  %v3471 = vmul.f32 %v3467, 0.044715
  %v3472 = vmul.f32 %v3468, 0.044715
  %v3473 = vadd.f32 %v3453, %v3469
  %v3474 = vadd.f32 %v3454, %v3470
  %v3475 = vadd.f32 %v3455, %v3471
  %v3476 = vadd.f32 %v3456, %v3472
  %v3477 = vmul.f32 %v3473, 0.7978846
  %v3478 = vmul.f32 %v3474, 0.7978846
  %v3479 = vmul.f32 %v3475, 0.7978846
  %v3480 = vmul.f32 %v3476, 0.7978846
  %v3481 = vtanh.pop %v3477
  %v3482 = vtanh.pop %v3478
  %v3483 = vtanh.pop %v3479
  %v3484 = vtanh.pop %v3480
  %v3485 = vadd.f32 %v3481, 1.0
  %v3486 = vadd.f32 %v3482, 1.0
  %v3487 = vadd.f32 %v3483, 1.0
  %v3488 = vadd.f32 %v3484, 1.0
  %v3489 = vmul.f32 %v3457, %v3485
  %v3490 = vmul.f32 %v3458, %v3486
  %v3491 = vmul.f32 %v3459, %v3487
  %v3492 = vmul.f32 %v3460, %v3488
  %3493 = vxpose.xlu0.b32.start [1/16] %v3489, 128
  %3494 = vxpose.xlu0.b32.cont [2/16] %v3490, 128
  %3495 = vxpose.xlu0.b32.cont [3/16] %v3491, 128
  %3496 = vxpose.xlu0.b32.cont [4/16] %v3492, 128
  %3497 = vxpose.xlu0.b32.cont [5/16] 0.0, 128
  %3498 = vxpose.xlu0.b32.cont [6/16] 0.0, 128
  %3499 = vxpose.xlu0.b32.cont [7/16] 0.0, 128
  %3500 = vxpose.xlu0.b32.cont [8/16] 0.0, 128
  %3501 = vxpose.xlu0.b32.cont [9/16] 0.0, 128
  %3502 = vxpose.xlu0.b32.cont [10/16] 0.0, 128
  %3503 = vxpose.xlu0.b32.cont [11/16] 0.0, 128
  %3504 = vxpose.xlu0.b32.cont [12/16] 0.0, 128
  %3505 = vxpose.xlu0.b32.cont [13/16] 0.0, 128
  %3506 = vxpose.xlu0.b32.cont [14/16] 0.0, 128
  %3507 = vxpose.xlu0.b32.cont [15/16] 0.0, 128
  %3508 = vxpose.xlu0.b32.end [16/16] 0.0, 128
  %v3509 = vpop.trf.xlu0
  %v3510 = vpop.trf.xlu0
  %v3511 = vpop.trf.xlu0
  %v3512 = vpop.trf.xlu0
  %v3513 = vpop.trf.xlu0
  %v3514 = vpop.trf.xlu0
  %v3515 = vpop.trf.xlu0
  %v3516 = vpop.trf.xlu0
  %v3517 = vpop.trf.xlu0
  %v3518 = vpop.trf.xlu0
  %v3519 = vpop.trf.xlu0
  %v3520 = vpop.trf.xlu0
  %v3521 = vpop.trf.xlu0
  %v3522 = vpop.trf.xlu0
  %v3523 = vpop.trf.xlu0
  %v3524 = vpop.trf.xlu0
  %3541 = vrot.lane.b32.xlu0 %v3509, 119
  %v3542 = vpop.permute.xlu0 %3541
  %3543 = vrot.lane.b32.xlu0 %v3510, 119
  %v3544 = vpop.permute.xlu0 %3543
  %3545 = vrot.lane.b32.xlu0 %v3511, 119
  %v3546 = vpop.permute.xlu0 %3545
  %3547 = vrot.lane.b32.xlu0 %v3512, 119
  %v3548 = vpop.permute.xlu0 %3547
  %3549 = vrot.lane.b32.xlu0 %v3513, 119
  %v3550 = vpop.permute.xlu0 %3549
  %3551 = vrot.lane.b32.xlu0 %v3514, 119
  %v3552 = vpop.permute.xlu0 %3551
  %3553 = vrot.lane.b32.xlu0 %v3515, 119
  %v3554 = vpop.permute.xlu0 %3553
  %3555 = vrot.lane.b32.xlu0 %v3516, 119
  %v3556 = vpop.permute.xlu0 %3555
  %3557 = vrot.lane.b32.xlu0 %v3517, 119
  %v3558 = vpop.permute.xlu0 %3557
  %3559 = vrot.lane.b32.xlu0 %v3518, 119
  %v3560 = vpop.permute.xlu0 %3559
  %3561 = vrot.lane.b32.xlu0 %v3519, 119
  %v3562 = vpop.permute.xlu0 %3561
  %3563 = vrot.lane.b32.xlu0 %v3520, 119
  %v3564 = vpop.permute.xlu0 %3563
  %3565 = vrot.lane.b32.xlu0 %v3521, 119
  %v3566 = vpop.permute.xlu0 %3565
  %3567 = vrot.lane.b32.xlu0 %v3522, 119
  %v3568 = vpop.permute.xlu0 %3567
  %3569 = vrot.lane.b32.xlu0 %v3523, 119
  %v3570 = vpop.permute.xlu0 %3569
  %3571 = vrot.lane.b32.xlu0 %v3524, 119
  %v3572 = vpop.permute.xlu0 %3571
  %3589 = vrot.lane.b32.xlu0 %v3509, 110
  %v3590 = vpop.permute.xlu0 %3589
  %3591 = vrot.lane.b32.xlu0 %v3510, 110
  %v3592 = vpop.permute.xlu0 %3591
  %3593 = vrot.lane.b32.xlu0 %v3511, 110
  %v3594 = vpop.permute.xlu0 %3593
  %3595 = vrot.lane.b32.xlu0 %v3512, 110
  %v3596 = vpop.permute.xlu0 %3595
  %3597 = vrot.lane.b32.xlu0 %v3513, 110
  %v3598 = vpop.permute.xlu0 %3597
  %3599 = vrot.lane.b32.xlu0 %v3514, 110
  %v3600 = vpop.permute.xlu0 %3599
  %3601 = vrot.lane.b32.xlu0 %v3515, 110
  %v3602 = vpop.permute.xlu0 %3601
  %3603 = vrot.lane.b32.xlu0 %v3516, 110
  %v3604 = vpop.permute.xlu0 %3603
  %3605 = vrot.lane.b32.xlu0 %v3517, 110
  %v3606 = vpop.permute.xlu0 %3605
  %3607 = vrot.lane.b32.xlu0 %v3518, 110
  %v3608 = vpop.permute.xlu0 %3607
  %3609 = vrot.lane.b32.xlu0 %v3519, 110
  %v3610 = vpop.permute.xlu0 %3609
  %3611 = vrot.lane.b32.xlu0 %v3520, 110
  %v3612 = vpop.permute.xlu0 %3611
  %3613 = vrot.lane.b32.xlu0 %v3521, 110
  %v3614 = vpop.permute.xlu0 %3613
  %3615 = vrot.lane.b32.xlu0 %v3522, 110
  %v3616 = vpop.permute.xlu0 %3615
  %3617 = vrot.lane.b32.xlu0 %v3523, 110
  %v3618 = vpop.permute.xlu0 %3617
  %3619 = vrot.lane.b32.xlu0 %v3524, 110
  %v3620 = vpop.permute.xlu0 %3619
  %v3637 = vlaneseq
  %v3638 = vshrl.u32 %v3637, 7
  %v3639 = vadd.s32 %v3638, 8
  %v3640 = vadd.s32 %v3638, 16
  %v3641 = vadd.s32 %v3638, 24
  %v3642 = vadd.s32 %v3638, 32
  %v3643 = vadd.s32 %v3638, 40
  %v3644 = vadd.s32 %v3638, 48
  %v3645 = vadd.s32 %v3638, 56
  %v3646 = vadd.s32 %v3638, 64
  %v3647 = vadd.s32 %v3638, 72
  %v3648 = vadd.s32 %v3638, 80
  %v3649 = vadd.s32 %v3638, 88
  %v3650 = vadd.s32 %v3638, 96
  %v3651 = vadd.s32 %v3638, 104
  %v3652 = vadd.s32 %v3638, 112
  %v3653 = vadd.s32 %v3638, 120
  %v3654 = vlaneseq
  %v3655 = vand.u32 %v3654, 127
  %v3656 = vadd.s32 %v3655, 128
  %v3657 = vadd.s32 %v3655, 256
  %v3658 = vmul.u32 %v3638, 3
  %v3659 = vmul.u32 %v3639, 3
  %v3660 = vmul.u32 %v3640, 3
  %v3661 = vmul.u32 %v3641, 3
  %v3662 = vmul.u32 %v3642, 3
  %v3663 = vmul.u32 %v3643, 3
  %v3664 = vmul.u32 %v3644, 3
  %v3665 = vmul.u32 %v3645, 3
  %v3666 = vmul.u32 %v3646, 3
  %v3667 = vmul.u32 %v3647, 3
  %v3668 = vmul.u32 %v3648, 3
  %v3669 = vmul.u32 %v3649, 3
  %v3670 = vmul.u32 %v3650, 3
  %v3671 = vmul.u32 %v3651, 3
  %v3672 = vmul.u32 %v3652, 3
  %v3673 = vmul.u32 %v3653, 3
  %vm3674 = vcmp.eq.s32.totalorder %v3655, %v3658
  %vm3675 = vcmp.eq.s32.totalorder %v3656, %v3658
  %vm3676 = vcmp.eq.s32.totalorder %v3657, %v3658
  %vm3677 = vcmp.eq.s32.totalorder %v3655, %v3659
  %vm3678 = vcmp.eq.s32.totalorder %v3656, %v3659
  %vm3679 = vcmp.eq.s32.totalorder %v3657, %v3659
  %vm3680 = vcmp.eq.s32.totalorder %v3655, %v3660
  %vm3681 = vcmp.eq.s32.totalorder %v3656, %v3660
  %vm3682 = vcmp.eq.s32.totalorder %v3657, %v3660
  %vm3683 = vcmp.eq.s32.totalorder %v3655, %v3661
  %vm3684 = vcmp.eq.s32.totalorder %v3656, %v3661
  %vm3685 = vcmp.eq.s32.totalorder %v3657, %v3661
  %vm3686 = vcmp.eq.s32.totalorder %v3655, %v3662
  %vm3687 = vcmp.eq.s32.totalorder %v3656, %v3662
  %vm3688 = vcmp.eq.s32.totalorder %v3657, %v3662
  %vm3689 = vcmp.eq.s32.totalorder %v3655, %v3663
  %vm3690 = vcmp.eq.s32.totalorder %v3656, %v3663
  %vm3691 = vcmp.eq.s32.totalorder %v3657, %v3663
  %vm3692 = vcmp.eq.s32.totalorder %v3655, %v3664
  %vm3693 = vcmp.eq.s32.totalorder %v3656, %v3664
  %vm3694 = vcmp.eq.s32.totalorder %v3657, %v3664
  %vm3695 = vcmp.eq.s32.totalorder %v3655, %v3665
  %vm3696 = vcmp.eq.s32.totalorder %v3656, %v3665
  %vm3697 = vcmp.eq.s32.totalorder %v3657, %v3665
  %vm3698 = vcmp.eq.s32.totalorder %v3655, %v3666
  %vm3699 = vcmp.eq.s32.totalorder %v3656, %v3666
  %vm3700 = vcmp.eq.s32.totalorder %v3657, %v3666
  %vm3701 = vcmp.eq.s32.totalorder %v3655, %v3667
  %vm3702 = vcmp.eq.s32.totalorder %v3656, %v3667
  %vm3703 = vcmp.eq.s32.totalorder %v3657, %v3667
  %vm3704 = vcmp.eq.s32.totalorder %v3655, %v3668
  %vm3705 = vcmp.eq.s32.totalorder %v3656, %v3668
  %vm3706 = vcmp.eq.s32.totalorder %v3657, %v3668
  %vm3707 = vcmp.eq.s32.totalorder %v3655, %v3669
  %vm3708 = vcmp.eq.s32.totalorder %v3656, %v3669
  %vm3709 = vcmp.eq.s32.totalorder %v3657, %v3669
  %vm3710 = vcmp.eq.s32.totalorder %v3655, %v3670
  %vm3711 = vcmp.eq.s32.totalorder %v3656, %v3670
  %vm3712 = vcmp.eq.s32.totalorder %v3657, %v3670
  %vm3713 = vcmp.eq.s32.totalorder %v3655, %v3671
  %vm3714 = vcmp.eq.s32.totalorder %v3656, %v3671
  %vm3715 = vcmp.eq.s32.totalorder %v3657, %v3671
  %vm3716 = vcmp.eq.s32.totalorder %v3655, %v3672
  %vm3717 = vcmp.eq.s32.totalorder %v3656, %v3672
  %vm3718 = vcmp.eq.s32.totalorder %v3657, %v3672
  %vm3719 = vcmp.eq.s32.totalorder %v3655, %v3673
  %vm3720 = vcmp.eq.s32.totalorder %v3656, %v3673
  %vm3721 = vcmp.eq.s32.totalorder %v3657, %v3673
  %v3722 = vsel %vm3674, 1, 0
  %v3723 = vsel %vm3675, 1, 0
  %v3724 = vsel %vm3676, 1, 0
  %v3725 = vsel %vm3677, 1, 0
  %v3726 = vsel %vm3678, 1, 0
  %v3727 = vsel %vm3679, 1, 0
  %v3728 = vsel %vm3680, 1, 0
  %v3729 = vsel %vm3681, 1, 0
  %v3730 = vsel %vm3682, 1, 0
  %v3731 = vsel %vm3683, 1, 0
  %v3732 = vsel %vm3684, 1, 0
  %v3733 = vsel %vm3685, 1, 0
  %v3734 = vsel %vm3686, 1, 0
  %v3735 = vsel %vm3687, 1, 0
  %v3736 = vsel %vm3688, 1, 0
  %v3737 = vsel %vm3689, 1, 0
  %v3738 = vsel %vm3690, 1, 0
  %v3739 = vsel %vm3691, 1, 0
  %v3740 = vsel %vm3692, 1, 0
  %v3741 = vsel %vm3693, 1, 0
  %v3742 = vsel %vm3694, 1, 0
  %v3743 = vsel %vm3695, 1, 0
  %v3744 = vsel %vm3696, 1, 0
  %v3745 = vsel %vm3697, 1, 0
  %v3746 = vsel %vm3698, 1, 0
  %v3747 = vsel %vm3699, 1, 0
  %v3748 = vsel %vm3700, 1, 0
  %v3749 = vsel %vm3701, 1, 0
  %v3750 = vsel %vm3702, 1, 0
  %v3751 = vsel %vm3703, 1, 0
  %v3752 = vsel %vm3704, 1, 0
  %v3753 = vsel %vm3705, 1, 0
  %v3754 = vsel %vm3706, 1, 0
  %v3755 = vsel %vm3707, 1, 0
  %v3756 = vsel %vm3708, 1, 0
  %v3757 = vsel %vm3709, 1, 0
  %v3758 = vsel %vm3710, 1, 0
  %v3759 = vsel %vm3711, 1, 0
  %v3760 = vsel %vm3712, 1, 0
  %v3761 = vsel %vm3713, 1, 0
  %v3762 = vsel %vm3714, 1, 0
  %v3763 = vsel %vm3715, 1, 0
  %v3764 = vsel %vm3716, 1, 0
  %v3765 = vsel %vm3717, 1, 0
  %v3766 = vsel %vm3718, 1, 0
  %v3767 = vsel %vm3719, 1, 0
  %v3768 = vsel %vm3720, 1, 0
  %v3769 = vsel %vm3721, 1, 0
  %v3770 = vcvt.s32.f32 %v3722
  %v3771 = vcvt.s32.f32 %v3723
  %v3772 = vcvt.s32.f32 %v3724
  %v3773 = vcvt.s32.f32 %v3725
  %v3774 = vcvt.s32.f32 %v3726
  %v3775 = vcvt.s32.f32 %v3727
  %v3776 = vcvt.s32.f32 %v3728
  %v3777 = vcvt.s32.f32 %v3729
  %v3778 = vcvt.s32.f32 %v3730
  %v3779 = vcvt.s32.f32 %v3731
  %v3780 = vcvt.s32.f32 %v3732
  %v3781 = vcvt.s32.f32 %v3733
  %v3782 = vcvt.s32.f32 %v3734
  %v3783 = vcvt.s32.f32 %v3735
  %v3784 = vcvt.s32.f32 %v3736
  %v3785 = vcvt.s32.f32 %v3737
  %v3786 = vcvt.s32.f32 %v3738
  %v3787 = vcvt.s32.f32 %v3739
  %v3788 = vcvt.s32.f32 %v3740
  %v3789 = vcvt.s32.f32 %v3741
  %v3790 = vcvt.s32.f32 %v3742
  %v3791 = vcvt.s32.f32 %v3743
  %v3792 = vcvt.s32.f32 %v3744
  %v3793 = vcvt.s32.f32 %v3745
  %v3794 = vcvt.s32.f32 %v3746
  %v3795 = vcvt.s32.f32 %v3747
  %v3796 = vcvt.s32.f32 %v3748
  %v3797 = vcvt.s32.f32 %v3749
  %v3798 = vcvt.s32.f32 %v3750
  %v3799 = vcvt.s32.f32 %v3751
  %v3800 = vcvt.s32.f32 %v3752
  %v3801 = vcvt.s32.f32 %v3753
  %v3802 = vcvt.s32.f32 %v3754
  %v3803 = vcvt.s32.f32 %v3755
  %v3804 = vcvt.s32.f32 %v3756
  %v3805 = vcvt.s32.f32 %v3757
  %v3806 = vcvt.s32.f32 %v3758
  %v3807 = vcvt.s32.f32 %v3759
  %v3808 = vcvt.s32.f32 %v3760
  %v3809 = vcvt.s32.f32 %v3761
  %v3810 = vcvt.s32.f32 %v3762
  %v3811 = vcvt.s32.f32 %v3763
  %v3812 = vcvt.s32.f32 %v3764
  %v3813 = vcvt.s32.f32 %v3765
  %v3814 = vcvt.s32.f32 %v3766
  %v3815 = vcvt.s32.f32 %v3767
  %v3816 = vcvt.s32.f32 %v3768
  %v3817 = vcvt.s32.f32 %v3769
  %3818 = vmatpush.msra.mxu0 %v3524
  %3819 = vmatpush.msra.mxu0 %v3523
  %3820 = vmatpush.msra.mxu0 %v3522
  %3821 = vmatpush.msra.mxu0 %v3521
  %3822 = vmatpush.msra.mxu0 %v3520
  %3823 = vmatpush.msra.mxu0 %v3519
  %3824 = vmatpush.msra.mxu0 %v3518
  %3825 = vmatpush.msra.mxu0 %v3517
  %3826 = vmatpush.msra.mxu0 %v3516
  %3827 = vmatpush.msra.mxu0 %v3515
  %3828 = vmatpush.msra.mxu0 %v3514
  %3829 = vmatpush.msra.mxu0 %v3513
  %3830 = vmatpush.msra.mxu0 %v3512
  %3831 = vmatpush.msra.mxu0 %v3511
  %3832 = vmatpush.msra.mxu0 %v3510
  %3833 = vmatpush.msra.mxu0 %v3509
  %3834 = vmatmul.f32.gmra.mxu0 %v3770
  %v3835 = vpop.f32.mrf.mxu0
  %v3836 = vadd.f32 0.0, %v3835
  %3837 = vmatmul.f32.gmra.mxu0 %v3773
  %v3838 = vpop.f32.mrf.mxu0
  %v3839 = vadd.f32 0.0, %v3838
  %3840 = vmatmul.f32.gmra.mxu0 %v3776
  %v3841 = vpop.f32.mrf.mxu0
  %v3842 = vadd.f32 0.0, %v3841
  %3843 = vmatmul.f32.gmra.mxu0 %v3779
  %v3844 = vpop.f32.mrf.mxu0
  %v3845 = vadd.f32 0.0, %v3844
  %3846 = vmatmul.f32.gmra.mxu0 %v3782
  %v3847 = vpop.f32.mrf.mxu0
  %v3848 = vadd.f32 0.0, %v3847
  %3849 = vmatmul.f32.gmra.mxu0 %v3785
  %v3850 = vpop.f32.mrf.mxu0
  %v3851 = vadd.f32 0.0, %v3850
  %3852 = vmatmul.f32.gmra.mxu0 %v3788
  %v3853 = vpop.f32.mrf.mxu0
  %v3854 = vadd.f32 0.0, %v3853
  %3855 = vmatmul.f32.gmra.mxu0 %v3791
  %v3856 = vpop.f32.mrf.mxu0
  %v3857 = vadd.f32 0.0, %v3856
  %3858 = vmatmul.f32.gmra.mxu0 %v3794
  %v3859 = vpop.f32.mrf.mxu0
  %v3860 = vadd.f32 0.0, %v3859
  %3861 = vmatmul.f32.gmra.mxu0 %v3797
  %v3862 = vpop.f32.mrf.mxu0
  %v3863 = vadd.f32 0.0, %v3862
  %3864 = vmatmul.f32.gmra.mxu0 %v3800
  %v3865 = vpop.f32.mrf.mxu0
  %v3866 = vadd.f32 0.0, %v3865
  %3867 = vmatmul.f32.gmra.mxu0 %v3803
  %v3868 = vpop.f32.mrf.mxu0
  %v3869 = vadd.f32 0.0, %v3868
  %3870 = vmatmul.f32.gmra.mxu0 %v3806
  %v3871 = vpop.f32.mrf.mxu0
  %v3872 = vadd.f32 0.0, %v3871
  %3873 = vmatmul.f32.gmra.mxu0 %v3809
  %v3874 = vpop.f32.mrf.mxu0
  %v3875 = vadd.f32 0.0, %v3874
  %3876 = vmatmul.f32.gmra.mxu0 %v3812
  %v3877 = vpop.f32.mrf.mxu0
  %v3878 = vadd.f32 0.0, %v3877
  %3879 = vmatmul.f32.gmra.mxu0 %v3815
  %v3880 = vpop.f32.mrf.mxu0
  %v3881 = vadd.f32 0.0, %v3880
  %3882 = vdwg.mxu0
  %3883 = vmatpush.msra.mxu0 %v3572
  %3884 = vmatpush.msra.mxu0 %v3570
  %3885 = vmatpush.msra.mxu0 %v3568
  %3886 = vmatpush.msra.mxu0 %v3566
  %3887 = vmatpush.msra.mxu0 %v3564
  %3888 = vmatpush.msra.mxu0 %v3562
  %3889 = vmatpush.msra.mxu0 %v3560
  %3890 = vmatpush.msra.mxu0 %v3558
  %3891 = vmatpush.msra.mxu0 %v3556
  %3892 = vmatpush.msra.mxu0 %v3554
  %3893 = vmatpush.msra.mxu0 %v3552
  %3894 = vmatpush.msra.mxu0 %v3550
  %3895 = vmatpush.msra.mxu0 %v3548
  %3896 = vmatpush.msra.mxu0 %v3546
  %3897 = vmatpush.msra.mxu0 %v3544
  %3898 = vmatpush.msra.mxu0 %v3542
  %3899 = vmatmul.f32.gmra.mxu0 %v3771
  %v3900 = vpop.f32.mrf.mxu0
  %v3901 = vadd.f32 %v3836, %v3900
  %3902 = vmatmul.f32.gmra.mxu0 %v3774
  %v3903 = vpop.f32.mrf.mxu0
  %v3904 = vadd.f32 %v3839, %v3903
  %3905 = vmatmul.f32.gmra.mxu0 %v3777
  %v3906 = vpop.f32.mrf.mxu0
  %v3907 = vadd.f32 %v3842, %v3906
  %3908 = vmatmul.f32.gmra.mxu0 %v3780
  %v3909 = vpop.f32.mrf.mxu0
  %v3910 = vadd.f32 %v3845, %v3909
  %3911 = vmatmul.f32.gmra.mxu0 %v3783
  %v3912 = vpop.f32.mrf.mxu0
  %v3913 = vadd.f32 %v3848, %v3912
  %3914 = vmatmul.f32.gmra.mxu0 %v3786
  %v3915 = vpop.f32.mrf.mxu0
  %v3916 = vadd.f32 %v3851, %v3915
  %3917 = vmatmul.f32.gmra.mxu0 %v3789
  %v3918 = vpop.f32.mrf.mxu0
  %v3919 = vadd.f32 %v3854, %v3918
  %3920 = vmatmul.f32.gmra.mxu0 %v3792
  %v3921 = vpop.f32.mrf.mxu0
  %v3922 = vadd.f32 %v3857, %v3921
  %3923 = vmatmul.f32.gmra.mxu0 %v3795
  %v3924 = vpop.f32.mrf.mxu0
  %v3925 = vadd.f32 %v3860, %v3924
  %3926 = vmatmul.f32.gmra.mxu0 %v3798
  %v3927 = vpop.f32.mrf.mxu0
  %v3928 = vadd.f32 %v3863, %v3927
  %3929 = vmatmul.f32.gmra.mxu0 %v3801
  %v3930 = vpop.f32.mrf.mxu0
  %v3931 = vadd.f32 %v3866, %v3930
  %3932 = vmatmul.f32.gmra.mxu0 %v3804
  %v3933 = vpop.f32.mrf.mxu0
  %v3934 = vadd.f32 %v3869, %v3933
  %3935 = vmatmul.f32.gmra.mxu0 %v3807
  %v3936 = vpop.f32.mrf.mxu0
  %v3937 = vadd.f32 %v3872, %v3936
  %3938 = vmatmul.f32.gmra.mxu0 %v3810
  %v3939 = vpop.f32.mrf.mxu0
  %v3940 = vadd.f32 %v3875, %v3939
  %3941 = vmatmul.f32.gmra.mxu0 %v3813
  %v3942 = vpop.f32.mrf.mxu0
  %v3943 = vadd.f32 %v3878, %v3942
  %3944 = vmatmul.f32.gmra.mxu0 %v3816
  %v3945 = vpop.f32.mrf.mxu0
  %v3946 = vadd.f32 %v3881, %v3945
  %3947 = vdwg.mxu0
  %3948 = vmatpush.msra.mxu0 %v3620
  %3949 = vmatpush.msra.mxu0 %v3618
  %3950 = vmatpush.msra.mxu0 %v3616
  %3951 = vmatpush.msra.mxu0 %v3614
  %3952 = vmatpush.msra.mxu0 %v3612
  %3953 = vmatpush.msra.mxu0 %v3610
  %3954 = vmatpush.msra.mxu0 %v3608
  %3955 = vmatpush.msra.mxu0 %v3606
  %3956 = vmatpush.msra.mxu0 %v3604
  %3957 = vmatpush.msra.mxu0 %v3602
  %3958 = vmatpush.msra.mxu0 %v3600
  %3959 = vmatpush.msra.mxu0 %v3598
  %3960 = vmatpush.msra.mxu0 %v3596
  %3961 = vmatpush.msra.mxu0 %v3594
  %3962 = vmatpush.msra.mxu0 %v3592
  %3963 = vmatpush.msra.mxu0 %v3590
  %3964 = vmatmul.f32.gmra.mxu0 %v3772
  %v3965 = vpop.f32.mrf.mxu0
  %v3966 = vadd.f32 %v3901, %v3965
  %3967 = vmatmul.f32.gmra.mxu0 %v3775
  %v3968 = vpop.f32.mrf.mxu0
  %v3969 = vadd.f32 %v3904, %v3968
  %3970 = vmatmul.f32.gmra.mxu0 %v3778
  %v3971 = vpop.f32.mrf.mxu0
  %v3972 = vadd.f32 %v3907, %v3971
  %3973 = vmatmul.f32.gmra.mxu0 %v3781
  %v3974 = vpop.f32.mrf.mxu0
  %v3975 = vadd.f32 %v3910, %v3974
  %3976 = vmatmul.f32.gmra.mxu0 %v3784
  %v3977 = vpop.f32.mrf.mxu0
  %v3978 = vadd.f32 %v3913, %v3977
  %3979 = vmatmul.f32.gmra.mxu0 %v3787
  %v3980 = vpop.f32.mrf.mxu0
  %v3981 = vadd.f32 %v3916, %v3980
  %3982 = vmatmul.f32.gmra.mxu0 %v3790
  %v3983 = vpop.f32.mrf.mxu0
  %v3984 = vadd.f32 %v3919, %v3983
  %3985 = vmatmul.f32.gmra.mxu0 %v3793
  %v3986 = vpop.f32.mrf.mxu0
  %v3987 = vadd.f32 %v3922, %v3986
  %3988 = vmatmul.f32.gmra.mxu0 %v3796
  %v3989 = vpop.f32.mrf.mxu0
  %v3990 = vadd.f32 %v3925, %v3989
  %3991 = vmatmul.f32.gmra.mxu0 %v3799
  %v3992 = vpop.f32.mrf.mxu0
  %v3993 = vadd.f32 %v3928, %v3992
  %3994 = vmatmul.f32.gmra.mxu0 %v3802
  %v3995 = vpop.f32.mrf.mxu0
  %v3996 = vadd.f32 %v3931, %v3995
  %3997 = vmatmul.f32.gmra.mxu0 %v3805
  %v3998 = vpop.f32.mrf.mxu0
  %v3999 = vadd.f32 %v3934, %v3998
  %4000 = vmatmul.f32.gmra.mxu0 %v3808
  %v4001 = vpop.f32.mrf.mxu0
  %v4002 = vadd.f32 %v3937, %v4001
  %4003 = vmatmul.f32.gmra.mxu0 %v3811
  %v4004 = vpop.f32.mrf.mxu0
  %v4005 = vadd.f32 %v3940, %v4004
  %4006 = vmatmul.f32.gmra.mxu0 %v3814
  %v4007 = vpop.f32.mrf.mxu0
  %v4008 = vadd.f32 %v3943, %v4007
  %4009 = vmatmul.f32.gmra.mxu0 %v3817
  %v4010 = vpop.f32.mrf.mxu0
  %v4011 = vadd.f32 %v3946, %v4010
  %4012 = vdwg.mxu0
  %v4013 = vadd.s32 %v3658, 1
  %v4014 = vadd.s32 %v3659, 1
  %v4015 = vadd.s32 %v3660, 1
  %v4016 = vadd.s32 %v3661, 1
  %v4017 = vadd.s32 %v3662, 1
  %v4018 = vadd.s32 %v3663, 1
  %v4019 = vadd.s32 %v3664, 1
  %v4020 = vadd.s32 %v3665, 1
  %v4021 = vadd.s32 %v3666, 1
  %v4022 = vadd.s32 %v3667, 1
  %v4023 = vadd.s32 %v3668, 1
  %v4024 = vadd.s32 %v3669, 1
  %v4025 = vadd.s32 %v3670, 1
  %v4026 = vadd.s32 %v3671, 1
  %v4027 = vadd.s32 %v3672, 1
  %v4028 = vadd.s32 %v3673, 1
  %vm4029 = vcmp.eq.s32.totalorder %v3655, %v4013
  %vm4030 = vcmp.eq.s32.totalorder %v3656, %v4013
  %vm4031 = vcmp.eq.s32.totalorder %v3657, %v4013
  %vm4032 = vcmp.eq.s32.totalorder %v3655, %v4014
  %vm4033 = vcmp.eq.s32.totalorder %v3656, %v4014
  %vm4034 = vcmp.eq.s32.totalorder %v3657, %v4014
  %vm4035 = vcmp.eq.s32.totalorder %v3655, %v4015
  %vm4036 = vcmp.eq.s32.totalorder %v3656, %v4015
  %vm4037 = vcmp.eq.s32.totalorder %v3657, %v4015
  %vm4038 = vcmp.eq.s32.totalorder %v3655, %v4016
  %vm4039 = vcmp.eq.s32.totalorder %v3656, %v4016
  %vm4040 = vcmp.eq.s32.totalorder %v3657, %v4016
  %vm4041 = vcmp.eq.s32.totalorder %v3655, %v4017
  %vm4042 = vcmp.eq.s32.totalorder %v3656, %v4017
  %vm4043 = vcmp.eq.s32.totalorder %v3657, %v4017
  %vm4044 = vcmp.eq.s32.totalorder %v3655, %v4018
  %vm4045 = vcmp.eq.s32.totalorder %v3656, %v4018
  %vm4046 = vcmp.eq.s32.totalorder %v3657, %v4018
  %vm4047 = vcmp.eq.s32.totalorder %v3655, %v4019
  %vm4048 = vcmp.eq.s32.totalorder %v3656, %v4019
  %vm4049 = vcmp.eq.s32.totalorder %v3657, %v4019
  %vm4050 = vcmp.eq.s32.totalorder %v3655, %v4020
  %vm4051 = vcmp.eq.s32.totalorder %v3656, %v4020
  %vm4052 = vcmp.eq.s32.totalorder %v3657, %v4020
  %vm4053 = vcmp.eq.s32.totalorder %v3655, %v4021
  %vm4054 = vcmp.eq.s32.totalorder %v3656, %v4021
  %vm4055 = vcmp.eq.s32.totalorder %v3657, %v4021
  %vm4056 = vcmp.eq.s32.totalorder %v3655, %v4022
  %vm4057 = vcmp.eq.s32.totalorder %v3656, %v4022
  %vm4058 = vcmp.eq.s32.totalorder %v3657, %v4022
  %vm4059 = vcmp.eq.s32.totalorder %v3655, %v4023
  %vm4060 = vcmp.eq.s32.totalorder %v3656, %v4023
  %vm4061 = vcmp.eq.s32.totalorder %v3657, %v4023
  %vm4062 = vcmp.eq.s32.totalorder %v3655, %v4024
  %vm4063 = vcmp.eq.s32.totalorder %v3656, %v4024
  %vm4064 = vcmp.eq.s32.totalorder %v3657, %v4024
  %vm4065 = vcmp.eq.s32.totalorder %v3655, %v4025
  %vm4066 = vcmp.eq.s32.totalorder %v3656, %v4025
  %vm4067 = vcmp.eq.s32.totalorder %v3657, %v4025
  %vm4068 = vcmp.eq.s32.totalorder %v3655, %v4026
  %vm4069 = vcmp.eq.s32.totalorder %v3656, %v4026
  %vm4070 = vcmp.eq.s32.totalorder %v3657, %v4026
  %vm4071 = vcmp.eq.s32.totalorder %v3655, %v4027
  %vm4072 = vcmp.eq.s32.totalorder %v3656, %v4027
  %vm4073 = vcmp.eq.s32.totalorder %v3657, %v4027
  %vm4074 = vcmp.eq.s32.totalorder %v3655, %v4028
  %vm4075 = vcmp.eq.s32.totalorder %v3656, %v4028
  %vm4076 = vcmp.eq.s32.totalorder %v3657, %v4028
  %v4077 = vsel %vm4029, 1, 0
  %v4078 = vsel %vm4030, 1, 0
  %v4079 = vsel %vm4031, 1, 0
  %v4080 = vsel %vm4032, 1, 0
  %v4081 = vsel %vm4033, 1, 0
  %v4082 = vsel %vm4034, 1, 0
  %v4083 = vsel %vm4035, 1, 0
  %v4084 = vsel %vm4036, 1, 0
  %v4085 = vsel %vm4037, 1, 0
  %v4086 = vsel %vm4038, 1, 0
  %v4087 = vsel %vm4039, 1, 0
  %v4088 = vsel %vm4040, 1, 0
  %v4089 = vsel %vm4041, 1, 0
  %v4090 = vsel %vm4042, 1, 0
  %v4091 = vsel %vm4043, 1, 0
  %v4092 = vsel %vm4044, 1, 0
  %v4093 = vsel %vm4045, 1, 0
  %v4094 = vsel %vm4046, 1, 0
  %v4095 = vsel %vm4047, 1, 0
  %v4096 = vsel %vm4048, 1, 0
  %v4097 = vsel %vm4049, 1, 0
  %v4098 = vsel %vm4050, 1, 0
  %v4099 = vsel %vm4051, 1, 0
  %v4100 = vsel %vm4052, 1, 0
  %v4101 = vsel %vm4053, 1, 0
  %v4102 = vsel %vm4054, 1, 0
  %v4103 = vsel %vm4055, 1, 0
  %v4104 = vsel %vm4056, 1, 0
  %v4105 = vsel %vm4057, 1, 0
  %v4106 = vsel %vm4058, 1, 0
  %v4107 = vsel %vm4059, 1, 0
  %v4108 = vsel %vm4060, 1, 0
  %v4109 = vsel %vm4061, 1, 0
  %v4110 = vsel %vm4062, 1, 0
  %v4111 = vsel %vm4063, 1, 0
  %v4112 = vsel %vm4064, 1, 0
  %v4113 = vsel %vm4065, 1, 0
  %v4114 = vsel %vm4066, 1, 0
  %v4115 = vsel %vm4067, 1, 0
  %v4116 = vsel %vm4068, 1, 0
  %v4117 = vsel %vm4069, 1, 0
  %v4118 = vsel %vm4070, 1, 0
  %v4119 = vsel %vm4071, 1, 0
  %v4120 = vsel %vm4072, 1, 0
  %v4121 = vsel %vm4073, 1, 0
  %v4122 = vsel %vm4074, 1, 0
  %v4123 = vsel %vm4075, 1, 0
  %v4124 = vsel %vm4076, 1, 0
  %v4125 = vcvt.s32.f32 %v4077
  %v4126 = vcvt.s32.f32 %v4078
  %v4127 = vcvt.s32.f32 %v4079
  %v4128 = vcvt.s32.f32 %v4080
  %v4129 = vcvt.s32.f32 %v4081
  %v4130 = vcvt.s32.f32 %v4082
  %v4131 = vcvt.s32.f32 %v4083
  %v4132 = vcvt.s32.f32 %v4084
  %v4133 = vcvt.s32.f32 %v4085
  %v4134 = vcvt.s32.f32 %v4086
  %v4135 = vcvt.s32.f32 %v4087
  %v4136 = vcvt.s32.f32 %v4088
  %v4137 = vcvt.s32.f32 %v4089
  %v4138 = vcvt.s32.f32 %v4090
  %v4139 = vcvt.s32.f32 %v4091
  %v4140 = vcvt.s32.f32 %v4092
  %v4141 = vcvt.s32.f32 %v4093
  %v4142 = vcvt.s32.f32 %v4094
  %v4143 = vcvt.s32.f32 %v4095
  %v4144 = vcvt.s32.f32 %v4096
  %v4145 = vcvt.s32.f32 %v4097
  %v4146 = vcvt.s32.f32 %v4098
  %v4147 = vcvt.s32.f32 %v4099
  %v4148 = vcvt.s32.f32 %v4100
  %v4149 = vcvt.s32.f32 %v4101
  %v4150 = vcvt.s32.f32 %v4102
  %v4151 = vcvt.s32.f32 %v4103
  %v4152 = vcvt.s32.f32 %v4104
  %v4153 = vcvt.s32.f32 %v4105
  %v4154 = vcvt.s32.f32 %v4106
  %v4155 = vcvt.s32.f32 %v4107
  %v4156 = vcvt.s32.f32 %v4108
  %v4157 = vcvt.s32.f32 %v4109
  %v4158 = vcvt.s32.f32 %v4110
  %v4159 = vcvt.s32.f32 %v4111
  %v4160 = vcvt.s32.f32 %v4112
  %v4161 = vcvt.s32.f32 %v4113
  %v4162 = vcvt.s32.f32 %v4114
  %v4163 = vcvt.s32.f32 %v4115
  %v4164 = vcvt.s32.f32 %v4116
  %v4165 = vcvt.s32.f32 %v4117
  %v4166 = vcvt.s32.f32 %v4118
  %v4167 = vcvt.s32.f32 %v4119
  %v4168 = vcvt.s32.f32 %v4120
  %v4169 = vcvt.s32.f32 %v4121
  %v4170 = vcvt.s32.f32 %v4122
  %v4171 = vcvt.s32.f32 %v4123
  %v4172 = vcvt.s32.f32 %v4124
  %4173 = vmatpush.msra.mxu0 %v3524
  %4174 = vmatpush.msra.mxu0 %v3523
  %4175 = vmatpush.msra.mxu0 %v3522
  %4176 = vmatpush.msra.mxu0 %v3521
  %4177 = vmatpush.msra.mxu0 %v3520
  %4178 = vmatpush.msra.mxu0 %v3519
  %4179 = vmatpush.msra.mxu0 %v3518
  %4180 = vmatpush.msra.mxu0 %v3517
  %4181 = vmatpush.msra.mxu0 %v3516
  %4182 = vmatpush.msra.mxu0 %v3515
  %4183 = vmatpush.msra.mxu0 %v3514
  %4184 = vmatpush.msra.mxu0 %v3513
  %4185 = vmatpush.msra.mxu0 %v3512
  %4186 = vmatpush.msra.mxu0 %v3511
  %4187 = vmatpush.msra.mxu0 %v3510
  %4188 = vmatpush.msra.mxu0 %v3509
  %4189 = vmatmul.f32.gmra.mxu0 %v4125
  %v4190 = vpop.f32.mrf.mxu0
  %v4191 = vadd.f32 0.0, %v4190
  %4192 = vmatmul.f32.gmra.mxu0 %v4128
  %v4193 = vpop.f32.mrf.mxu0
  %v4194 = vadd.f32 0.0, %v4193
  %4195 = vmatmul.f32.gmra.mxu0 %v4131
  %v4196 = vpop.f32.mrf.mxu0
  %v4197 = vadd.f32 0.0, %v4196
  %4198 = vmatmul.f32.gmra.mxu0 %v4134
  %v4199 = vpop.f32.mrf.mxu0
  %v4200 = vadd.f32 0.0, %v4199
  %4201 = vmatmul.f32.gmra.mxu0 %v4137
  %v4202 = vpop.f32.mrf.mxu0
  %v4203 = vadd.f32 0.0, %v4202
  %4204 = vmatmul.f32.gmra.mxu0 %v4140
  %v4205 = vpop.f32.mrf.mxu0
  %v4206 = vadd.f32 0.0, %v4205
  %4207 = vmatmul.f32.gmra.mxu0 %v4143
  %v4208 = vpop.f32.mrf.mxu0
  %v4209 = vadd.f32 0.0, %v4208
  %4210 = vmatmul.f32.gmra.mxu0 %v4146
  %v4211 = vpop.f32.mrf.mxu0
  %v4212 = vadd.f32 0.0, %v4211
  %4213 = vmatmul.f32.gmra.mxu0 %v4149
  %v4214 = vpop.f32.mrf.mxu0
  %v4215 = vadd.f32 0.0, %v4214
  %4216 = vmatmul.f32.gmra.mxu0 %v4152
  %v4217 = vpop.f32.mrf.mxu0
  %v4218 = vadd.f32 0.0, %v4217
  %4219 = vmatmul.f32.gmra.mxu0 %v4155
  %v4220 = vpop.f32.mrf.mxu0
  %v4221 = vadd.f32 0.0, %v4220
  %4222 = vmatmul.f32.gmra.mxu0 %v4158
  %v4223 = vpop.f32.mrf.mxu0
  %v4224 = vadd.f32 0.0, %v4223
  %4225 = vmatmul.f32.gmra.mxu0 %v4161
  %v4226 = vpop.f32.mrf.mxu0
  %v4227 = vadd.f32 0.0, %v4226
  %4228 = vmatmul.f32.gmra.mxu0 %v4164
  %v4229 = vpop.f32.mrf.mxu0
  %v4230 = vadd.f32 0.0, %v4229
  %4231 = vmatmul.f32.gmra.mxu0 %v4167
  %v4232 = vpop.f32.mrf.mxu0
  %v4233 = vadd.f32 0.0, %v4232
  %4234 = vmatmul.f32.gmra.mxu0 %v4170
  %v4235 = vpop.f32.mrf.mxu0
  %v4236 = vadd.f32 0.0, %v4235
  %4237 = vdwg.mxu0
  %4238 = vmatpush.msra.mxu0 %v3572
  %4239 = vmatpush.msra.mxu0 %v3570
  %4240 = vmatpush.msra.mxu0 %v3568
  %4241 = vmatpush.msra.mxu0 %v3566
  %4242 = vmatpush.msra.mxu0 %v3564
  %4243 = vmatpush.msra.mxu0 %v3562
  %4244 = vmatpush.msra.mxu0 %v3560
  %4245 = vmatpush.msra.mxu0 %v3558
  %4246 = vmatpush.msra.mxu0 %v3556
  %4247 = vmatpush.msra.mxu0 %v3554
  %4248 = vmatpush.msra.mxu0 %v3552
  %4249 = vmatpush.msra.mxu0 %v3550
  %4250 = vmatpush.msra.mxu0 %v3548
  %4251 = vmatpush.msra.mxu0 %v3546
  %4252 = vmatpush.msra.mxu0 %v3544
  %4253 = vmatpush.msra.mxu0 %v3542
  %4254 = vmatmul.f32.gmra.mxu0 %v4126
  %v4255 = vpop.f32.mrf.mxu0
  %v4256 = vadd.f32 %v4191, %v4255
  %4257 = vmatmul.f32.gmra.mxu0 %v4129
  %v4258 = vpop.f32.mrf.mxu0
  %v4259 = vadd.f32 %v4194, %v4258
  %4260 = vmatmul.f32.gmra.mxu0 %v4132
  %v4261 = vpop.f32.mrf.mxu0
  %v4262 = vadd.f32 %v4197, %v4261
  %4263 = vmatmul.f32.gmra.mxu0 %v4135
  %v4264 = vpop.f32.mrf.mxu0
  %v4265 = vadd.f32 %v4200, %v4264
  %4266 = vmatmul.f32.gmra.mxu0 %v4138
  %v4267 = vpop.f32.mrf.mxu0
  %v4268 = vadd.f32 %v4203, %v4267
  %4269 = vmatmul.f32.gmra.mxu0 %v4141
  %v4270 = vpop.f32.mrf.mxu0
  %v4271 = vadd.f32 %v4206, %v4270
  %4272 = vmatmul.f32.gmra.mxu0 %v4144
  %v4273 = vpop.f32.mrf.mxu0
  %v4274 = vadd.f32 %v4209, %v4273
  %4275 = vmatmul.f32.gmra.mxu0 %v4147
  %v4276 = vpop.f32.mrf.mxu0
  %v4277 = vadd.f32 %v4212, %v4276
  %4278 = vmatmul.f32.gmra.mxu0 %v4150
  %v4279 = vpop.f32.mrf.mxu0
  %v4280 = vadd.f32 %v4215, %v4279
  %4281 = vmatmul.f32.gmra.mxu0 %v4153
  %v4282 = vpop.f32.mrf.mxu0
  %v4283 = vadd.f32 %v4218, %v4282
  %4284 = vmatmul.f32.gmra.mxu0 %v4156
  %v4285 = vpop.f32.mrf.mxu0
  %v4286 = vadd.f32 %v4221, %v4285
  %4287 = vmatmul.f32.gmra.mxu0 %v4159
  %v4288 = vpop.f32.mrf.mxu0
  %v4289 = vadd.f32 %v4224, %v4288
  %4290 = vmatmul.f32.gmra.mxu0 %v4162
  %v4291 = vpop.f32.mrf.mxu0
  %v4292 = vadd.f32 %v4227, %v4291
  %4293 = vmatmul.f32.gmra.mxu0 %v4165
  %v4294 = vpop.f32.mrf.mxu0
  %v4295 = vadd.f32 %v4230, %v4294
  %4296 = vmatmul.f32.gmra.mxu0 %v4168
  %v4297 = vpop.f32.mrf.mxu0
  %v4298 = vadd.f32 %v4233, %v4297
  %4299 = vmatmul.f32.gmra.mxu0 %v4171
  %v4300 = vpop.f32.mrf.mxu0
  %v4301 = vadd.f32 %v4236, %v4300
  %4302 = vdwg.mxu0
  %4303 = vmatpush.msra.mxu0 %v3620
  %4304 = vmatpush.msra.mxu0 %v3618
  %4305 = vmatpush.msra.mxu0 %v3616
  %4306 = vmatpush.msra.mxu0 %v3614
  %4307 = vmatpush.msra.mxu0 %v3612
  %4308 = vmatpush.msra.mxu0 %v3610
  %4309 = vmatpush.msra.mxu0 %v3608
  %4310 = vmatpush.msra.mxu0 %v3606
  %4311 = vmatpush.msra.mxu0 %v3604
  %4312 = vmatpush.msra.mxu0 %v3602
  %4313 = vmatpush.msra.mxu0 %v3600
  %4314 = vmatpush.msra.mxu0 %v3598
  %4315 = vmatpush.msra.mxu0 %v3596
  %4316 = vmatpush.msra.mxu0 %v3594
  %4317 = vmatpush.msra.mxu0 %v3592
  %4318 = vmatpush.msra.mxu0 %v3590
  %4319 = vmatmul.f32.gmra.mxu0 %v4127
  %v4320 = vpop.f32.mrf.mxu0
  %v4321 = vadd.f32 %v4256, %v4320
  %4322 = vmatmul.f32.gmra.mxu0 %v4130
  %v4323 = vpop.f32.mrf.mxu0
  %v4324 = vadd.f32 %v4259, %v4323
  %4325 = vmatmul.f32.gmra.mxu0 %v4133
  %v4326 = vpop.f32.mrf.mxu0
  %v4327 = vadd.f32 %v4262, %v4326
  %4328 = vmatmul.f32.gmra.mxu0 %v4136
  %v4329 = vpop.f32.mrf.mxu0
  %v4330 = vadd.f32 %v4265, %v4329
  %4331 = vmatmul.f32.gmra.mxu0 %v4139
  %v4332 = vpop.f32.mrf.mxu0
  %v4333 = vadd.f32 %v4268, %v4332
  %4334 = vmatmul.f32.gmra.mxu0 %v4142
  %v4335 = vpop.f32.mrf.mxu0
  %v4336 = vadd.f32 %v4271, %v4335
  %4337 = vmatmul.f32.gmra.mxu0 %v4145
  %v4338 = vpop.f32.mrf.mxu0
  %v4339 = vadd.f32 %v4274, %v4338
  %4340 = vmatmul.f32.gmra.mxu0 %v4148
  %v4341 = vpop.f32.mrf.mxu0
  %v4342 = vadd.f32 %v4277, %v4341
  %4343 = vmatmul.f32.gmra.mxu0 %v4151
  %v4344 = vpop.f32.mrf.mxu0
  %v4345 = vadd.f32 %v4280, %v4344
  %4346 = vmatmul.f32.gmra.mxu0 %v4154
  %v4347 = vpop.f32.mrf.mxu0
  %v4348 = vadd.f32 %v4283, %v4347
  %4349 = vmatmul.f32.gmra.mxu0 %v4157
  %v4350 = vpop.f32.mrf.mxu0
  %v4351 = vadd.f32 %v4286, %v4350
  %4352 = vmatmul.f32.gmra.mxu0 %v4160
  %v4353 = vpop.f32.mrf.mxu0
  %v4354 = vadd.f32 %v4289, %v4353
  %4355 = vmatmul.f32.gmra.mxu0 %v4163
  %v4356 = vpop.f32.mrf.mxu0
  %v4357 = vadd.f32 %v4292, %v4356
  %4358 = vmatmul.f32.gmra.mxu0 %v4166
  %v4359 = vpop.f32.mrf.mxu0
  %v4360 = vadd.f32 %v4295, %v4359
  %4361 = vmatmul.f32.gmra.mxu0 %v4169
  %v4362 = vpop.f32.mrf.mxu0
  %v4363 = vadd.f32 %v4298, %v4362
  %4364 = vmatmul.f32.gmra.mxu0 %v4172
  %v4365 = vpop.f32.mrf.mxu0
  %v4366 = vadd.f32 %v4301, %v4365
  %4367 = vdwg.mxu0
  %v4368 = vadd.s32 %v3658, 2
  %v4369 = vadd.s32 %v3659, 2
  %v4370 = vadd.s32 %v3660, 2
  %v4371 = vadd.s32 %v3661, 2
  %v4372 = vadd.s32 %v3662, 2
  %v4373 = vadd.s32 %v3663, 2
  %v4374 = vadd.s32 %v3664, 2
  %v4375 = vadd.s32 %v3665, 2
  %v4376 = vadd.s32 %v3666, 2
  %v4377 = vadd.s32 %v3667, 2
  %v4378 = vadd.s32 %v3668, 2
  %v4379 = vadd.s32 %v3669, 2
  %v4380 = vadd.s32 %v3670, 2
  %v4381 = vadd.s32 %v3671, 2
  %v4382 = vadd.s32 %v3672, 2
  %v4383 = vadd.s32 %v3673, 2
  %vm4384 = vcmp.eq.s32.totalorder %v3655, %v4368
  %vm4385 = vcmp.eq.s32.totalorder %v3656, %v4368
  %vm4386 = vcmp.eq.s32.totalorder %v3657, %v4368
  %vm4387 = vcmp.eq.s32.totalorder %v3655, %v4369
  %vm4388 = vcmp.eq.s32.totalorder %v3656, %v4369
  %vm4389 = vcmp.eq.s32.totalorder %v3657, %v4369
  %vm4390 = vcmp.eq.s32.totalorder %v3655, %v4370
  %vm4391 = vcmp.eq.s32.totalorder %v3656, %v4370
  %vm4392 = vcmp.eq.s32.totalorder %v3657, %v4370
  %vm4393 = vcmp.eq.s32.totalorder %v3655, %v4371
  %vm4394 = vcmp.eq.s32.totalorder %v3656, %v4371
  %vm4395 = vcmp.eq.s32.totalorder %v3657, %v4371
  %vm4396 = vcmp.eq.s32.totalorder %v3655, %v4372
  %vm4397 = vcmp.eq.s32.totalorder %v3656, %v4372
  %vm4398 = vcmp.eq.s32.totalorder %v3657, %v4372
  %vm4399 = vcmp.eq.s32.totalorder %v3655, %v4373
  %vm4400 = vcmp.eq.s32.totalorder %v3656, %v4373
  %vm4401 = vcmp.eq.s32.totalorder %v3657, %v4373
  %vm4402 = vcmp.eq.s32.totalorder %v3655, %v4374
  %vm4403 = vcmp.eq.s32.totalorder %v3656, %v4374
  %vm4404 = vcmp.eq.s32.totalorder %v3657, %v4374
  %vm4405 = vcmp.eq.s32.totalorder %v3655, %v4375
  %vm4406 = vcmp.eq.s32.totalorder %v3656, %v4375
  %vm4407 = vcmp.eq.s32.totalorder %v3657, %v4375
  %vm4408 = vcmp.eq.s32.totalorder %v3655, %v4376
  %vm4409 = vcmp.eq.s32.totalorder %v3656, %v4376
  %vm4410 = vcmp.eq.s32.totalorder %v3657, %v4376
  %vm4411 = vcmp.eq.s32.totalorder %v3655, %v4377
  %vm4412 = vcmp.eq.s32.totalorder %v3656, %v4377
  %vm4413 = vcmp.eq.s32.totalorder %v3657, %v4377
  %vm4414 = vcmp.eq.s32.totalorder %v3655, %v4378
  %vm4415 = vcmp.eq.s32.totalorder %v3656, %v4378
  %vm4416 = vcmp.eq.s32.totalorder %v3657, %v4378
  %vm4417 = vcmp.eq.s32.totalorder %v3655, %v4379
  %vm4418 = vcmp.eq.s32.totalorder %v3656, %v4379
  %vm4419 = vcmp.eq.s32.totalorder %v3657, %v4379
  %vm4420 = vcmp.eq.s32.totalorder %v3655, %v4380
  %vm4421 = vcmp.eq.s32.totalorder %v3656, %v4380
  %vm4422 = vcmp.eq.s32.totalorder %v3657, %v4380
  %vm4423 = vcmp.eq.s32.totalorder %v3655, %v4381
  %vm4424 = vcmp.eq.s32.totalorder %v3656, %v4381
  %vm4425 = vcmp.eq.s32.totalorder %v3657, %v4381
  %vm4426 = vcmp.eq.s32.totalorder %v3655, %v4382
  %vm4427 = vcmp.eq.s32.totalorder %v3656, %v4382
  %vm4428 = vcmp.eq.s32.totalorder %v3657, %v4382
  %vm4429 = vcmp.eq.s32.totalorder %v3655, %v4383
  %vm4430 = vcmp.eq.s32.totalorder %v3656, %v4383
  %vm4431 = vcmp.eq.s32.totalorder %v3657, %v4383
  %v4432 = vsel %vm4384, 1, 0
  %v4433 = vsel %vm4385, 1, 0
  %v4434 = vsel %vm4386, 1, 0
  %v4435 = vsel %vm4387, 1, 0
  %v4436 = vsel %vm4388, 1, 0
  %v4437 = vsel %vm4389, 1, 0
  %v4438 = vsel %vm4390, 1, 0
  %v4439 = vsel %vm4391, 1, 0
  %v4440 = vsel %vm4392, 1, 0
  %v4441 = vsel %vm4393, 1, 0
  %v4442 = vsel %vm4394, 1, 0
  %v4443 = vsel %vm4395, 1, 0
  %v4444 = vsel %vm4396, 1, 0
  %v4445 = vsel %vm4397, 1, 0
  %v4446 = vsel %vm4398, 1, 0
  %v4447 = vsel %vm4399, 1, 0
  %v4448 = vsel %vm4400, 1, 0
  %v4449 = vsel %vm4401, 1, 0
  %v4450 = vsel %vm4402, 1, 0
  %v4451 = vsel %vm4403, 1, 0
  %v4452 = vsel %vm4404, 1, 0
  %v4453 = vsel %vm4405, 1, 0
  %v4454 = vsel %vm4406, 1, 0
  %v4455 = vsel %vm4407, 1, 0
  %v4456 = vsel %vm4408, 1, 0
  %v4457 = vsel %vm4409, 1, 0
  %v4458 = vsel %vm4410, 1, 0
  %v4459 = vsel %vm4411, 1, 0
  %v4460 = vsel %vm4412, 1, 0
  %v4461 = vsel %vm4413, 1, 0
  %v4462 = vsel %vm4414, 1, 0
  %v4463 = vsel %vm4415, 1, 0
  %v4464 = vsel %vm4416, 1, 0
  %v4465 = vsel %vm4417, 1, 0
  %v4466 = vsel %vm4418, 1, 0
  %v4467 = vsel %vm4419, 1, 0
  %v4468 = vsel %vm4420, 1, 0
  %v4469 = vsel %vm4421, 1, 0
  %v4470 = vsel %vm4422, 1, 0
  %v4471 = vsel %vm4423, 1, 0
  %v4472 = vsel %vm4424, 1, 0
  %v4473 = vsel %vm4425, 1, 0
  %v4474 = vsel %vm4426, 1, 0
  %v4475 = vsel %vm4427, 1, 0
  %v4476 = vsel %vm4428, 1, 0
  %v4477 = vsel %vm4429, 1, 0
  %v4478 = vsel %vm4430, 1, 0
  %v4479 = vsel %vm4431, 1, 0
  %v4480 = vcvt.s32.f32 %v4432
  %v4481 = vcvt.s32.f32 %v4433
  %v4482 = vcvt.s32.f32 %v4434
  %v4483 = vcvt.s32.f32 %v4435
  %v4484 = vcvt.s32.f32 %v4436
  %v4485 = vcvt.s32.f32 %v4437
  %v4486 = vcvt.s32.f32 %v4438
  %v4487 = vcvt.s32.f32 %v4439
  %v4488 = vcvt.s32.f32 %v4440
  %v4489 = vcvt.s32.f32 %v4441
  %v4490 = vcvt.s32.f32 %v4442
  %v4491 = vcvt.s32.f32 %v4443
  %v4492 = vcvt.s32.f32 %v4444
  %v4493 = vcvt.s32.f32 %v4445
  %v4494 = vcvt.s32.f32 %v4446
  %v4495 = vcvt.s32.f32 %v4447
  %v4496 = vcvt.s32.f32 %v4448
  %v4497 = vcvt.s32.f32 %v4449
  %v4498 = vcvt.s32.f32 %v4450
  %v4499 = vcvt.s32.f32 %v4451
  %v4500 = vcvt.s32.f32 %v4452
  %v4501 = vcvt.s32.f32 %v4453
  %v4502 = vcvt.s32.f32 %v4454
  %v4503 = vcvt.s32.f32 %v4455
  %v4504 = vcvt.s32.f32 %v4456
  %v4505 = vcvt.s32.f32 %v4457
  %v4506 = vcvt.s32.f32 %v4458
  %v4507 = vcvt.s32.f32 %v4459
  %v4508 = vcvt.s32.f32 %v4460
  %v4509 = vcvt.s32.f32 %v4461
  %v4510 = vcvt.s32.f32 %v4462
  %v4511 = vcvt.s32.f32 %v4463
  %v4512 = vcvt.s32.f32 %v4464
  %v4513 = vcvt.s32.f32 %v4465
  %v4514 = vcvt.s32.f32 %v4466
  %v4515 = vcvt.s32.f32 %v4467
  %v4516 = vcvt.s32.f32 %v4468
  %v4517 = vcvt.s32.f32 %v4469
  %v4518 = vcvt.s32.f32 %v4470
  %v4519 = vcvt.s32.f32 %v4471
  %v4520 = vcvt.s32.f32 %v4472
  %v4521 = vcvt.s32.f32 %v4473
  %v4522 = vcvt.s32.f32 %v4474
  %v4523 = vcvt.s32.f32 %v4475
  %v4524 = vcvt.s32.f32 %v4476
  %v4525 = vcvt.s32.f32 %v4477
  %v4526 = vcvt.s32.f32 %v4478
  %v4527 = vcvt.s32.f32 %v4479
  %4528 = vmatpush.msra.mxu0 %v3524
  %4529 = vmatpush.msra.mxu0 %v3523
  %4530 = vmatpush.msra.mxu0 %v3522
  %4531 = vmatpush.msra.mxu0 %v3521
  %4532 = vmatpush.msra.mxu0 %v3520
  %4533 = vmatpush.msra.mxu0 %v3519
  %4534 = vmatpush.msra.mxu0 %v3518
  %4535 = vmatpush.msra.mxu0 %v3517
  %4536 = vmatpush.msra.mxu0 %v3516
  %4537 = vmatpush.msra.mxu0 %v3515
  %4538 = vmatpush.msra.mxu0 %v3514
  %4539 = vmatpush.msra.mxu0 %v3513
  %4540 = vmatpush.msra.mxu0 %v3512
  %4541 = vmatpush.msra.mxu0 %v3511
  %4542 = vmatpush.msra.mxu0 %v3510
  %4543 = vmatpush.msra.mxu0 %v3509
  %4544 = vmatmul.f32.gmra.mxu0 %v4480
  %v4545 = vpop.f32.mrf.mxu0
  %v4546 = vadd.f32 0.0, %v4545
  %4547 = vmatmul.f32.gmra.mxu0 %v4483
  %v4548 = vpop.f32.mrf.mxu0
  %v4549 = vadd.f32 0.0, %v4548
  %4550 = vmatmul.f32.gmra.mxu0 %v4486
  %v4551 = vpop.f32.mrf.mxu0
  %v4552 = vadd.f32 0.0, %v4551
  %4553 = vmatmul.f32.gmra.mxu0 %v4489
  %v4554 = vpop.f32.mrf.mxu0
  %v4555 = vadd.f32 0.0, %v4554
  %4556 = vmatmul.f32.gmra.mxu0 %v4492
  %v4557 = vpop.f32.mrf.mxu0
  %v4558 = vadd.f32 0.0, %v4557
  %4559 = vmatmul.f32.gmra.mxu0 %v4495
  %v4560 = vpop.f32.mrf.mxu0
  %v4561 = vadd.f32 0.0, %v4560
  %4562 = vmatmul.f32.gmra.mxu0 %v4498
  %v4563 = vpop.f32.mrf.mxu0
  %v4564 = vadd.f32 0.0, %v4563
  %4565 = vmatmul.f32.gmra.mxu0 %v4501
  %v4566 = vpop.f32.mrf.mxu0
  %v4567 = vadd.f32 0.0, %v4566
  %4568 = vmatmul.f32.gmra.mxu0 %v4504
  %v4569 = vpop.f32.mrf.mxu0
  %v4570 = vadd.f32 0.0, %v4569
  %4571 = vmatmul.f32.gmra.mxu0 %v4507
  %v4572 = vpop.f32.mrf.mxu0
  %v4573 = vadd.f32 0.0, %v4572
  %4574 = vmatmul.f32.gmra.mxu0 %v4510
  %v4575 = vpop.f32.mrf.mxu0
  %v4576 = vadd.f32 0.0, %v4575
  %4577 = vmatmul.f32.gmra.mxu0 %v4513
  %v4578 = vpop.f32.mrf.mxu0
  %v4579 = vadd.f32 0.0, %v4578
  %4580 = vmatmul.f32.gmra.mxu0 %v4516
  %v4581 = vpop.f32.mrf.mxu0
  %v4582 = vadd.f32 0.0, %v4581
  %4583 = vmatmul.f32.gmra.mxu0 %v4519
  %v4584 = vpop.f32.mrf.mxu0
  %v4585 = vadd.f32 0.0, %v4584
  %4586 = vmatmul.f32.gmra.mxu0 %v4522
  %v4587 = vpop.f32.mrf.mxu0
  %v4588 = vadd.f32 0.0, %v4587
  %4589 = vmatmul.f32.gmra.mxu0 %v4525
  %v4590 = vpop.f32.mrf.mxu0
  %v4591 = vadd.f32 0.0, %v4590
  %4592 = vdwg.mxu0
  %4593 = vmatpush.msra.mxu0 %v3572
  %4594 = vmatpush.msra.mxu0 %v3570
  %4595 = vmatpush.msra.mxu0 %v3568
  %4596 = vmatpush.msra.mxu0 %v3566
  %4597 = vmatpush.msra.mxu0 %v3564
  %4598 = vmatpush.msra.mxu0 %v3562
  %4599 = vmatpush.msra.mxu0 %v3560
  %4600 = vmatpush.msra.mxu0 %v3558
  %4601 = vmatpush.msra.mxu0 %v3556
  %4602 = vmatpush.msra.mxu0 %v3554
  %4603 = vmatpush.msra.mxu0 %v3552
  %4604 = vmatpush.msra.mxu0 %v3550
  %4605 = vmatpush.msra.mxu0 %v3548
  %4606 = vmatpush.msra.mxu0 %v3546
  %4607 = vmatpush.msra.mxu0 %v3544
  %4608 = vmatpush.msra.mxu0 %v3542
  %4609 = vmatmul.f32.gmra.mxu0 %v4481
  %v4610 = vpop.f32.mrf.mxu0
  %v4611 = vadd.f32 %v4546, %v4610
  %4612 = vmatmul.f32.gmra.mxu0 %v4484
  %v4613 = vpop.f32.mrf.mxu0
  %v4614 = vadd.f32 %v4549, %v4613
  %4615 = vmatmul.f32.gmra.mxu0 %v4487
  %v4616 = vpop.f32.mrf.mxu0
  %v4617 = vadd.f32 %v4552, %v4616
  %4618 = vmatmul.f32.gmra.mxu0 %v4490
  %v4619 = vpop.f32.mrf.mxu0
  %v4620 = vadd.f32 %v4555, %v4619
  %4621 = vmatmul.f32.gmra.mxu0 %v4493
  %v4622 = vpop.f32.mrf.mxu0
  %v4623 = vadd.f32 %v4558, %v4622
  %4624 = vmatmul.f32.gmra.mxu0 %v4496
  %v4625 = vpop.f32.mrf.mxu0
  %v4626 = vadd.f32 %v4561, %v4625
  %4627 = vmatmul.f32.gmra.mxu0 %v4499
  %v4628 = vpop.f32.mrf.mxu0
  %v4629 = vadd.f32 %v4564, %v4628
  %4630 = vmatmul.f32.gmra.mxu0 %v4502
  %v4631 = vpop.f32.mrf.mxu0
  %v4632 = vadd.f32 %v4567, %v4631
  %4633 = vmatmul.f32.gmra.mxu0 %v4505
  %v4634 = vpop.f32.mrf.mxu0
  %v4635 = vadd.f32 %v4570, %v4634
  %4636 = vmatmul.f32.gmra.mxu0 %v4508
  %v4637 = vpop.f32.mrf.mxu0
  %v4638 = vadd.f32 %v4573, %v4637
  %4639 = vmatmul.f32.gmra.mxu0 %v4511
  %v4640 = vpop.f32.mrf.mxu0
  %v4641 = vadd.f32 %v4576, %v4640
  %4642 = vmatmul.f32.gmra.mxu0 %v4514
  %v4643 = vpop.f32.mrf.mxu0
  %v4644 = vadd.f32 %v4579, %v4643
  %4645 = vmatmul.f32.gmra.mxu0 %v4517
  %v4646 = vpop.f32.mrf.mxu0
  %v4647 = vadd.f32 %v4582, %v4646
  %4648 = vmatmul.f32.gmra.mxu0 %v4520
  %v4649 = vpop.f32.mrf.mxu0
  %v4650 = vadd.f32 %v4585, %v4649
  %4651 = vmatmul.f32.gmra.mxu0 %v4523
  %v4652 = vpop.f32.mrf.mxu0
  %v4653 = vadd.f32 %v4588, %v4652
  %4654 = vmatmul.f32.gmra.mxu0 %v4526
  %v4655 = vpop.f32.mrf.mxu0
  %v4656 = vadd.f32 %v4591, %v4655
  %4657 = vdwg.mxu0
  %4658 = vmatpush.msra.mxu0 %v3620
  %4659 = vmatpush.msra.mxu0 %v3618
  %4660 = vmatpush.msra.mxu0 %v3616
  %4661 = vmatpush.msra.mxu0 %v3614
  %4662 = vmatpush.msra.mxu0 %v3612
  %4663 = vmatpush.msra.mxu0 %v3610
  %4664 = vmatpush.msra.mxu0 %v3608
  %4665 = vmatpush.msra.mxu0 %v3606
  %4666 = vmatpush.msra.mxu0 %v3604
  %4667 = vmatpush.msra.mxu0 %v3602
  %4668 = vmatpush.msra.mxu0 %v3600
  %4669 = vmatpush.msra.mxu0 %v3598
  %4670 = vmatpush.msra.mxu0 %v3596
  %4671 = vmatpush.msra.mxu0 %v3594
  %4672 = vmatpush.msra.mxu0 %v3592
  %4673 = vmatpush.msra.mxu0 %v3590
  %4674 = vmatmul.f32.gmra.mxu0 %v4482
  %v4675 = vpop.f32.mrf.mxu0
  %v4676 = vadd.f32 %v4611, %v4675
  %4677 = vmatmul.f32.gmra.mxu0 %v4485
  %v4678 = vpop.f32.mrf.mxu0
  %v4679 = vadd.f32 %v4614, %v4678
  %4680 = vmatmul.f32.gmra.mxu0 %v4488
  %v4681 = vpop.f32.mrf.mxu0
  %v4682 = vadd.f32 %v4617, %v4681
  %4683 = vmatmul.f32.gmra.mxu0 %v4491
  %v4684 = vpop.f32.mrf.mxu0
  %v4685 = vadd.f32 %v4620, %v4684
  %4686 = vmatmul.f32.gmra.mxu0 %v4494
  %v4687 = vpop.f32.mrf.mxu0
  %v4688 = vadd.f32 %v4623, %v4687
  %4689 = vmatmul.f32.gmra.mxu0 %v4497
  %v4690 = vpop.f32.mrf.mxu0
  %v4691 = vadd.f32 %v4626, %v4690
  %4692 = vmatmul.f32.gmra.mxu0 %v4500
  %v4693 = vpop.f32.mrf.mxu0
  %v4694 = vadd.f32 %v4629, %v4693
  %4695 = vmatmul.f32.gmra.mxu0 %v4503
  %v4696 = vpop.f32.mrf.mxu0
  %v4697 = vadd.f32 %v4632, %v4696
  %4698 = vmatmul.f32.gmra.mxu0 %v4506
  %v4699 = vpop.f32.mrf.mxu0
  %v4700 = vadd.f32 %v4635, %v4699
  %4701 = vmatmul.f32.gmra.mxu0 %v4509
  %v4702 = vpop.f32.mrf.mxu0
  %v4703 = vadd.f32 %v4638, %v4702
  %4704 = vmatmul.f32.gmra.mxu0 %v4512
  %v4705 = vpop.f32.mrf.mxu0
  %v4706 = vadd.f32 %v4641, %v4705
  %4707 = vmatmul.f32.gmra.mxu0 %v4515
  %v4708 = vpop.f32.mrf.mxu0
  %v4709 = vadd.f32 %v4644, %v4708
  %4710 = vmatmul.f32.gmra.mxu0 %v4518
  %v4711 = vpop.f32.mrf.mxu0
  %v4712 = vadd.f32 %v4647, %v4711
  %4713 = vmatmul.f32.gmra.mxu0 %v4521
  %v4714 = vpop.f32.mrf.mxu0
  %v4715 = vadd.f32 %v4650, %v4714
  %4716 = vmatmul.f32.gmra.mxu0 %v4524
  %v4717 = vpop.f32.mrf.mxu0
  %v4718 = vadd.f32 %v4653, %v4717
  %4719 = vmatmul.f32.gmra.mxu0 %v4527
  %v4720 = vpop.f32.mrf.mxu0
  %v4721 = vadd.f32 %v4656, %v4720
  %4722 = vdwg.mxu0
  %4739 = vrot.lane.b32.xlu0 %v4321, 9
  %v4740 = vpop.permute.xlu0 %4739
  %4741 = vrot.lane.b32.xlu0 %v4324, 9
  %v4742 = vpop.permute.xlu0 %4741
  %4743 = vrot.lane.b32.xlu0 %v4327, 9
  %v4744 = vpop.permute.xlu0 %4743
  %4745 = vrot.lane.b32.xlu0 %v4330, 9
  %v4746 = vpop.permute.xlu0 %4745
  %4747 = vrot.lane.b32.xlu0 %v4333, 9
  %v4748 = vpop.permute.xlu0 %4747
  %4749 = vrot.lane.b32.xlu0 %v4336, 9
  %v4750 = vpop.permute.xlu0 %4749
  %4751 = vrot.lane.b32.xlu0 %v4339, 9
  %v4752 = vpop.permute.xlu0 %4751
  %4753 = vrot.lane.b32.xlu0 %v4342, 9
  %v4754 = vpop.permute.xlu0 %4753
  %4755 = vrot.lane.b32.xlu0 %v4345, 9
  %v4756 = vpop.permute.xlu0 %4755
  %4757 = vrot.lane.b32.xlu0 %v4348, 9
  %v4758 = vpop.permute.xlu0 %4757
  %4759 = vrot.lane.b32.xlu0 %v4351, 9
  %v4760 = vpop.permute.xlu0 %4759
  %4761 = vrot.lane.b32.xlu0 %v4354, 9
  %v4762 = vpop.permute.xlu0 %4761
  %4763 = vrot.lane.b32.xlu0 %v4357, 9
  %v4764 = vpop.permute.xlu0 %4763
  %4765 = vrot.lane.b32.xlu0 %v4360, 9
  %v4766 = vpop.permute.xlu0 %4765
  %4767 = vrot.lane.b32.xlu0 %v4363, 9
  %v4768 = vpop.permute.xlu0 %4767
  %4769 = vrot.lane.b32.xlu0 %v4366, 9
  %v4770 = vpop.permute.xlu0 %4769
  %4803 = vrot.lane.b32.xlu0 %v4676, 18
  %v4804 = vpop.permute.xlu0 %4803
  %4805 = vrot.lane.b32.xlu0 %v4679, 18
  %v4806 = vpop.permute.xlu0 %4805
  %4807 = vrot.lane.b32.xlu0 %v4682, 18
  %v4808 = vpop.permute.xlu0 %4807
  %4809 = vrot.lane.b32.xlu0 %v4685, 18
  %v4810 = vpop.permute.xlu0 %4809
  %4811 = vrot.lane.b32.xlu0 %v4688, 18
  %v4812 = vpop.permute.xlu0 %4811
  %4813 = vrot.lane.b32.xlu0 %v4691, 18
  %v4814 = vpop.permute.xlu0 %4813
  %4815 = vrot.lane.b32.xlu0 %v4694, 18
  %v4816 = vpop.permute.xlu0 %4815
  %4817 = vrot.lane.b32.xlu0 %v4697, 18
  %v4818 = vpop.permute.xlu0 %4817
  %4819 = vrot.lane.b32.xlu0 %v4700, 18
  %v4820 = vpop.permute.xlu0 %4819
  %4821 = vrot.lane.b32.xlu0 %v4703, 18
  %v4822 = vpop.permute.xlu0 %4821
  %4823 = vrot.lane.b32.xlu0 %v4706, 18
  %v4824 = vpop.permute.xlu0 %4823
  %4825 = vrot.lane.b32.xlu0 %v4709, 18
  %v4826 = vpop.permute.xlu0 %4825
  %4827 = vrot.lane.b32.xlu0 %v4712, 18
  %v4828 = vpop.permute.xlu0 %4827
  %4829 = vrot.lane.b32.xlu0 %v4715, 18
  %v4830 = vpop.permute.xlu0 %4829
  %4831 = vrot.lane.b32.xlu0 %v4718, 18
  %v4832 = vpop.permute.xlu0 %4831
  %4833 = vrot.lane.b32.xlu0 %v4721, 18
  %v4834 = vpop.permute.xlu0 %4833
  %vm4851 = vcmask 72704
  %v4852 = vsel %vm4851, %v3966, %v4740
  %v4853 = vsel %vm4851, %v3969, %v4742
  %v4854 = vsel %vm4851, %v3972, %v4744
  %v4855 = vsel %vm4851, %v3975, %v4746
  %v4856 = vsel %vm4851, %v3978, %v4748
  %v4857 = vsel %vm4851, %v3981, %v4750
  %v4858 = vsel %vm4851, %v3984, %v4752
  %v4859 = vsel %vm4851, %v3987, %v4754
  %v4860 = vsel %vm4851, %v3990, %v4756
  %v4861 = vsel %vm4851, %v3993, %v4758
  %v4862 = vsel %vm4851, %v3996, %v4760
  %v4863 = vsel %vm4851, %v3999, %v4762
  %v4864 = vsel %vm4851, %v4002, %v4764
  %v4865 = vsel %vm4851, %v4005, %v4766
  %v4866 = vsel %vm4851, %v4008, %v4768
  %v4867 = vsel %vm4851, %v4011, %v4770
  %vm4868 = vcmask 146432
  %v4869 = vsel %vm4868, %v4852, %v4804
  %v4870 = vsel %vm4868, %v4853, %v4806
  %v4871 = vsel %vm4868, %v4854, %v4808
  %v4872 = vsel %vm4868, %v4855, %v4810
  %v4873 = vsel %vm4868, %v4856, %v4812
  %v4874 = vsel %vm4868, %v4857, %v4814
  %v4875 = vsel %vm4868, %v4858, %v4816
  %v4876 = vsel %vm4868, %v4859, %v4818
  %v4877 = vsel %vm4868, %v4860, %v4820
  %v4878 = vsel %vm4868, %v4861, %v4822
  %v4879 = vsel %vm4868, %v4862, %v4824
  %v4880 = vsel %vm4868, %v4863, %v4826
  %v4881 = vsel %vm4868, %v4864, %v4828
  %v4882 = vsel %vm4868, %v4865, %v4830
  %v4883 = vsel %vm4868, %v4866, %v4832
  %v4884 = vsel %vm4868, %v4867, %v4834
  %v4885 = vld [vmem:[%s4] sm:$0xff]
  %v4886 = vld [vmem:[%s4 + $0x8] sm:$0xff]
  %v4887 = vld [vmem:[%s4 + $0x10] sm:$0xff]
  %v4888 = vld [vmem:[%s4 + $0x18] sm:$0x7]
  %v4889 = vld [vmem:[%s5] sm:$0x1]
  %v4891 = vperm.slane %v4889, 0
  %vm4893 = vcmask 220160
  %v4895 = vsel %vm4893, %v4869, 0
  %v4898 = vsel %vm4893, %v4870, 0
  %v4901 = vsel %vm4893, %v4871, 0
  %v4904 = vsel %vm4893, %v4872, 0
  %v4907 = vsel %vm4893, %v4873, 0
  %v4910 = vsel %vm4893, %v4874, 0
  %v4913 = vsel %vm4893, %v4875, 0
  %v4916 = vsel %vm4893, %v4876, 0
  %v4919 = vsel %vm4893, %v4877, 0
  %v4922 = vsel %vm4893, %v4878, 0
  %v4925 = vsel %vm4893, %v4879, 0
  %v4928 = vsel %vm4893, %v4880, 0
  %v4931 = vsel %vm4893, %v4881, 0
  %v4934 = vsel %vm4893, %v4882, 0
  %v4937 = vsel %vm4893, %v4883, 0
  %v4940 = vsel %vm4893, %v4884, 0
  %vm4942 = vcmask 1042432
  %v4944 = vsel %vm4942, %v4888, 0
  %4946 = vmatpush.msra.mxu0 0.0
  %4947 = vmatpush.msra.mxu0 0.0
  %4948 = vmatpush.msra.mxu0 0.0
  %4949 = vmatpush.msra.mxu0 0.0
  %4950 = vmatpush.msra.mxu0 0.0
  %4951 = vmatpush.msra.mxu0 0.0
  %4952 = vmatpush.msra.mxu0 0.0
  %4953 = vmatpush.msra.mxu0 0.0
  %4954 = vmatpush.msra.mxu0 0.0
  %4955 = vmatpush.msra.mxu0 0.0
  %4956 = vmatpush.msra.mxu0 0.0
  %4957 = vmatpush.msra.mxu0 0.0
  %4958 = vmatpush.msra.mxu0 %v4944
  %4959 = vmatpush.msra.mxu0 %v4887
  %4960 = vmatpush.msra.mxu0 %v4886
  %4961 = vmatpush.msra.mxu0 %v4885
  %4962 = vmatmul.f32.gmra.mxu0 %v4895
  %v4963 = vpop.f32.mrf.mxu0
  %v4964 = vadd.f32 %v4891, %v4963
  %4965 = vmatmul.f32.gmra.mxu0 %v4898
  %v4966 = vpop.f32.mrf.mxu0
  %v4967 = vadd.f32 %v4891, %v4966
  %4968 = vmatmul.f32.gmra.mxu0 %v4901
  %v4969 = vpop.f32.mrf.mxu0
  %v4970 = vadd.f32 %v4891, %v4969
  %4971 = vmatmul.f32.gmra.mxu0 %v4904
  %v4972 = vpop.f32.mrf.mxu0
  %v4973 = vadd.f32 %v4891, %v4972
  %4974 = vmatmul.f32.gmra.mxu0 %v4907
  %v4975 = vpop.f32.mrf.mxu0
  %v4976 = vadd.f32 %v4891, %v4975
  %4977 = vmatmul.f32.gmra.mxu0 %v4910
  %v4978 = vpop.f32.mrf.mxu0
  %v4979 = vadd.f32 %v4891, %v4978
  %4980 = vmatmul.f32.gmra.mxu0 %v4913
  %v4981 = vpop.f32.mrf.mxu0
  %v4982 = vadd.f32 %v4891, %v4981
  %4983 = vmatmul.f32.gmra.mxu0 %v4916
  %v4984 = vpop.f32.mrf.mxu0
  %v4985 = vadd.f32 %v4891, %v4984
  %4986 = vmatmul.f32.gmra.mxu0 %v4919
  %v4987 = vpop.f32.mrf.mxu0
  %v4988 = vadd.f32 %v4891, %v4987
  %4989 = vmatmul.f32.gmra.mxu0 %v4922
  %v4990 = vpop.f32.mrf.mxu0
  %v4991 = vadd.f32 %v4891, %v4990
  %4992 = vmatmul.f32.gmra.mxu0 %v4925
  %v4993 = vpop.f32.mrf.mxu0
  %v4994 = vadd.f32 %v4891, %v4993
  %4995 = vmatmul.f32.gmra.mxu0 %v4928
  %v4996 = vpop.f32.mrf.mxu0
  %v4997 = vadd.f32 %v4891, %v4996
  %4998 = vmatmul.f32.gmra.mxu0 %v4931
  %v4999 = vpop.f32.mrf.mxu0
  %v5000 = vadd.f32 %v4891, %v4999
  %5001 = vmatmul.f32.gmra.mxu0 %v4934
  %v5002 = vpop.f32.mrf.mxu0
  %v5003 = vadd.f32 %v4891, %v5002
  %5004 = vmatmul.f32.gmra.mxu0 %v4937
  %v5005 = vpop.f32.mrf.mxu0
  %v5006 = vadd.f32 %v4891, %v5005
  %5007 = vmatmul.f32.gmra.mxu0 %v4940
  %v5008 = vpop.f32.mrf.mxu0
  %v5009 = vadd.f32 %v4891, %v5008
  %5010 = vdwg.mxu0
  %vm5011 = vcmask 818176
  %5012 = vst.msk [vmem:[%s6] sm:$0xff] %vm5011, %v4964
  %5013 = vst.msk [vmem:[%s6 + $0x8] sm:$0xff] %vm5011, %v4967
  %5014 = vst.msk [vmem:[%s6 + $0x10] sm:$0xff] %vm5011, %v4970
  %5015 = vst.msk [vmem:[%s6 + $0x18] sm:$0xff] %vm5011, %v4973
  %5016 = vst.msk [vmem:[%s6 + $0x20] sm:$0xff] %vm5011, %v4976
  %5017 = vst.msk [vmem:[%s6 + $0x28] sm:$0xff] %vm5011, %v4979
  %5018 = vst.msk [vmem:[%s6 + $0x30] sm:$0xff] %vm5011, %v4982
  %5019 = vst.msk [vmem:[%s6 + $0x38] sm:$0xff] %vm5011, %v4985
  %5020 = vst.msk [vmem:[%s6 + $0x40] sm:$0xff] %vm5011, %v4988
  %5021 = vst.msk [vmem:[%s6 + $0x48] sm:$0xff] %vm5011, %v4991
  %5022 = vst.msk [vmem:[%s6 + $0x50] sm:$0xff] %vm5011, %v4994
  %5023 = vst.msk [vmem:[%s6 + $0x58] sm:$0xff] %vm5011, %v4997
  %5024 = vst.msk [vmem:[%s6 + $0x60] sm:$0xff] %vm5011, %v5000
  %5025 = vst.msk [vmem:[%s6 + $0x68] sm:$0xff] %vm5011, %v5003
  %5026 = vst.msk [vmem:[%s6 + $0x70] sm:$0xff] %vm5011, %v5006
  %5027 = vst.msk [vmem:[%s6 + $0x78] sm:$0xff] %vm5011, %v5009
  // Predicated region
  $region26: #{model_forward.1} parent=0 // pred_check
    _
  $region27: #{model_forward.1} parent=0 // pred_check_branch
    %5029 = sbr.rel (0) target = $region29
  $region28: #{model_forward.1} parent=0 // pred_region
    _
  $region29: #{model_forward.1} parent=0 // pred_fallthru
    _
  // Predicated region
  $region30: #{model_forward.1} parent=0 // pred_check
    _
  $region31: #{model_forward.1} parent=0 // pred_check_branch
    %5031 = sbr.rel (0) target = $region33
  $region32: #{model_forward.1} parent=0 // pred_region
    _
  $region33: #{model_forward.1} parent=0 // pred_fallthru
    _

</llo_original>
